<compile_context>
chip_gen: v7x
topology: tpu7x:2x2x1
jax: 0.10.0
libtpu: 0.0.40
codegen_flags: <defaults>
</compile_context>

<pallas_src>
import jax
import jax.numpy as jnp
from jax.experimental import pallas as pl
from jax.experimental.pallas import tpu as pltpu

WIDTHS = (8, 16, 32, 64)   # conv1..conv4 time widths
FREQ = 40                  # frequency height (hardcoded in the module)
POOL = 7                   # MaxPool2d kernel (1, 7), stride 7


def _branch_layout(T):
    """Static per-branch (width, out_rows, pooled?) exactly matching the torch forward."""
    layout = []
    for W in WIDTHS:
        t_out = T - W + 1
        do_pool = (W != WIDTHS[-1]) or (t_out > POOL)   # c4 pooled only if len > 7
        L = (t_out // POOL) if do_pool else t_out
        layout.append((W, L, do_pool))
    return layout


# ------------------------------ Pallas kernel ------------------------------ #

def _net_kernel(p_ref, wp_ref, bp_ref, sel_ref,
                w1_ref, b1_ref, w2_ref, b2_ref,
                w3_ref, b3_ref, w4_ref, b4_ref,
                o_ref, cat_ref):
    f32, bf16 = jnp.float32, jnp.bfloat16
    T = p_ref.shape[0]                    # time steps (static)
    F = w1_ref.shape[0]                   # num_filters

    # ---- conv1..conv4 fused: ONE im2col MXU matmul (bias + ReLU fused), (T, 4F) f32.
    acc = jnp.dot(p_ref[...], wp_ref[...], preferred_element_type=f32)
    conv = jnp.maximum(acc + bp_ref[...], 0.0)

    # ---- MaxPool2d((1,7), stride 7), shared by all branches:
    #      7-way sliding max (f32 VPU) then one one-hot selection matmul (bf16 operands).
    S = T - (POOL - 1)
    m = conv[0:S, :]
    for i in range(1, POOL):
        m = jnp.maximum(m, conv[i:i + S, :])
    pooled = jnp.dot(sel_ref[...], m.astype(bf16),
                     preferred_element_type=f32)                      # (L_max, 4F)

    # ---- torch.cat((c1,c2,c3,c4), dim=2).transpose(2,1): stack the four branches'
    #      feature blocks along rows into one (Ltot, F) tile via a tiny VMEM scratch,
    #      so the attention head runs once (not per branch).
    off = 0
    for bi, (W, L, do_pool) in enumerate(_branch_layout(T)):
        src = pooled if do_pool else conv
        cat_ref[off:off + L, :] = src[0:L, bi * F:(bi + 1) * F]
        off += L

    feat = cat_ref[...].astype(bf16)                                  # (Ltot, F)

    # ---- attention head.
    # TODO(synk): nn.Dropout(0.2) is inference-mode identity here; training-mode RNG
    # masking is not implemented.
    xw1 = jnp.tanh(jnp.dot(feat, w1_ref[...], preferred_element_type=f32) + b1_ref[...])
    logits = jnp.dot(xw1.astype(bf16), w2_ref[...],
                     preferred_element_type=f32) + b2_ref[...]
    p = jnp.exp(logits - jnp.max(logits, axis=-1, keepdims=True))
    attn = (p / jnp.sum(p, axis=-1, keepdims=True)).astype(bf16)      # softmax over hop
    # E = feat^T @ A: contract the time axis without materializing feat.T
    e = jax.lax.dot_general(feat, attn, (((0,), (0,)), ((), ())),
                            preferred_element_type=f32)               # (F, hop)
    h = jnp.dot(e.astype(bf16), w3_ref[...], preferred_element_type=f32) + b3_ref[...]
    out = jnp.dot(h.astype(bf16), w4_ref[...], preferred_element_type=f32) + b4_ref[...]
    o_ref[...] = out.astype(o_ref.dtype)                              # lane-dense (F, 128)


# ------------------------------ wrapper (JAX) ------------------------------ #

def net_forward(x_nchw, params):
    """x_nchw: (B, 1, 40, T), same layout as the PyTorch module."""
    bf16 = jnp.bfloat16
    x = x_nchw[:, 0]                                     # (B, 40, T)
    B, _, T = x.shape
    F = params["convs"][0][0].shape[-1]
    H = params["w1"].shape[-1]
    C = params["w4"].shape[-1]
    nb = len(WIDTHS)
    wmax = max(WIDTHS)
    K = wmax * FREQ

    # full im2col slab: patches[b, t, w*40 + h] = x[b, h, t+w] (zero-padded past T).
    xT = jnp.swapaxes(x, 1, 2)                                       # (B, T, 40)
    xpad = jnp.pad(xT, ((0, 0), (0, wmax - 1), (0, 0)))
    patches = jnp.stack([xpad[:, w:w + T, :] for w in range(wmax)], axis=2)
    patches = patches.reshape(B, T, K).astype(bf16)                  # (B, T, 2560)

    # pack the 4 conv weights side-by-side on the lane axis (4F = 128 lanes), zero-padded
    # along the unused taps of the shorter branches; pack biases the same way.
    wpack = jnp.zeros((wmax, FREQ, nb * F), jnp.float32)
    bpack = []
    for bi, W in enumerate(WIDTHS):
        wt, bias = params["convs"][bi]                               # (W, 40, F), (1, F)
        wpack = wpack.at[:W, :, bi * F:(bi + 1) * F].set(wt)
        bpack.append(bias)
    wpack = wpack.reshape(K, nb * F).astype(bf16)                    # (2560, 4F)
    bpack = jnp.concatenate(bpack, axis=-1)                          # (1, 4F) f32

    # one-hot "take every 7th row of the sliding max" selector (bf16 MXU operand).
    L_max = (T - WIDTHS[0] + 1) // POOL
    S = T - (POOL - 1)
    row = jax.lax.broadcasted_iota(jnp.int32, (L_max, S), 0)
    col = jax.lax.broadcasted_iota(jnp.int32, (L_max, S), 1)
    sel = (col == POOL * row).astype(bf16)

    # zero-pad fc4 to 128 output lanes so the kernel's final store is lane-dense.
    CPAD = ((C + 127) // 128) * 128
    w4p = jnp.zeros((H, CPAD), jnp.float32).at[:, :C].set(params["w4"]).astype(bf16)
    b4p = jnp.zeros((1, CPAD), jnp.float32).at[:, :C].set(params["b4"])

    Ltot = sum(L for _, L, _ in _branch_layout(T))

    inputs = (patches, wpack, bpack, sel,
              params["w1"].astype(bf16), params["b1"],
              params["w2"].astype(bf16), params["b2"],
              params["w3"].astype(bf16), params["b3"],
              w4p, b4p)

    # first input is per-batch-element; all others are constant across grid steps.
    in_specs = [pl.BlockSpec((None, T, K), lambda b: (b, 0, 0))]
    for a in inputs[1:]:
        in_specs.append(pl.BlockSpec(a.shape, lambda b, _n=a.ndim: (0,) * _n))

    out = pl.pallas_call(
        _net_kernel,
        out_shape=jax.ShapeDtypeStruct((B, F, CPAD), jnp.float32),
        grid_spec=pltpu.PrefetchScalarGridSpec(
            num_scalar_prefetch=0,
            grid=(B,),                                   # batch = parallel grid axis
            in_specs=in_specs,
            out_specs=pl.BlockSpec((None, F, CPAD), lambda b: (b, 0, 0)),
            scratch_shapes=[pltpu.VMEM((Ltot, F), jnp.float32)],
        ),
        compiler_params=pltpu.CompilerParams(dimension_semantics=("parallel",)),
    )(*inputs)
    return out[:, :, :C]


# --------------------------- pure-XLA reference ----------------------------- #

def reference_forward(x_nchw, params):
    """Independent per-branch im2col formulation (bf16 operands / f32 accumulation)."""
    bf16 = jnp.bfloat16
    f32 = jnp.float32
    x = x_nchw[:, 0]                                     # (B, 40, T)
    B, _, T = x.shape
    xT = jnp.swapaxes(x, 1, 2).astype(bf16)              # (B, T, 40)
    feats = []
    for bi, W in enumerate(WIDTHS):
        wt, bias = params["convs"][bi]                   # (W, 40, F), (1, F)
        t_out = T - W + 1
        patches = jnp.stack([xT[:, w:w + t_out, :] for w in range(W)], axis=2)
        patches = patches.reshape(B, t_out, W * FREQ)    # element [w*40+h] = x[h, t+w]
        conv = jnp.einsum("btk,kf->btf", patches,
                          wt.reshape(W * FREQ, -1).astype(bf16),
                          preferred_element_type=f32) + bias
        conv = jnp.maximum(conv, 0.0)
        do_pool = (W != WIDTHS[-1]) or (t_out > POOL)
        if do_pool:
            L = t_out // POOL
            conv = conv[:, :L * POOL].reshape(B, L, POOL, -1).max(axis=2)
        feats.append(conv)
    xcat = jnp.concatenate(feats, axis=1)                # (B, Ltot, F)
    fb = xcat.astype(bf16)
    xw1 = jnp.tanh(jnp.einsum("blf,fh->blh", fb, params["w1"].astype(bf16),
                              preferred_element_type=f32) + params["b1"])
    logits = jnp.einsum("blh,hp->blp", xw1.astype(bf16), params["w2"].astype(bf16),
                        preferred_element_type=f32) + params["b2"]
    A = jax.nn.softmax(logits, axis=-1)
    E = jnp.einsum("blf,blp->bfp", fb, A.astype(bf16), preferred_element_type=f32)
    h = jnp.einsum("bfp,ph->bfh", E.astype(bf16), params["w3"].astype(bf16),
                   preferred_element_type=f32) + params["b3"]
    return jnp.einsum("bfh,hc->bfc", h.astype(bf16), params["w4"].astype(bf16),
                      preferred_element_type=f32) + params["b4"]


def init_params(key, num_filters, hidden_dim, attention_hop, num_classes):
    keys = jax.random.split(key, 12)
    convs = []
    for i, W in enumerate(WIDTHS):
        K = FREQ * W
        w = jax.random.normal(keys[i], (W, FREQ, num_filters), jnp.float32) / jnp.sqrt(float(K))
        b = jax.random.normal(keys[i + 4], (1, num_filters), jnp.float32) * 0.01
        convs.append((w, b))
    w1 = jax.random.normal(keys[8], (num_filters, hidden_dim), jnp.float32) * 0.05
    b1 = jnp.zeros((1, hidden_dim), jnp.float32)
    w2 = jax.random.normal(keys[9], (hidden_dim, attention_hop), jnp.float32) * 0.05
    b2 = jnp.zeros((1, attention_hop), jnp.float32)
    w3 = jax.random.normal(keys[10], (attention_hop, hidden_dim), jnp.float32) * 0.05
    b3 = jnp.zeros((1, hidden_dim), jnp.float32)
    w4 = jax.random.normal(keys[11], (hidden_dim, num_classes), jnp.float32) * 0.05
    b4 = jnp.zeros((1, num_classes), jnp.float32)
    return dict(convs=convs, w1=w1, b1=b1, w2=w2, b2=b2, w3=w3, b3=b3, w4=w4, b4=b4)


if __name__ == "__main__":
    # (B, 1, 40, T) spectrogram; T >= 71 so every branch (incl. width-64) is pooled.
    # Reduced hyperparameters: num_filters=32 so the 4 branches pack to exactly 128 lanes.
    B, T = 2, 78
    num_filters, hidden_dim, attention_hop, num_classes = 32, 64, 8, 8

    key = jax.random.PRNGKey(0)
    pkey, xkey = jax.random.split(key)
    params = init_params(pkey, num_filters, hidden_dim, attention_hop, num_classes)
    x = jax.random.normal(xkey, (B, 1, FREQ, T), jnp.float32)    # PyTorch NCHW input

    out = jax.block_until_ready(jax.jit(net_forward)(x, params))
    assert out.shape == (B, num_filters, num_classes), out.shape

    ref = jax.block_until_ready(jax.jit(reference_forward)(x, params))
    err = float(jnp.max(jnp.abs(out - ref)))
    assert jnp.allclose(out, ref, atol=3e-3, rtol=3e-3), err

    print("KERNEL_OK")
</pallas_src>

<mosaic_0001>
module attributes {stable_mosaic.version = 11 : i64} {
  func.func @_net_kernel(%arg0: i32, %arg1: memref<1x78x2560xbf16, #tpu.memory_space<vmem>>, %arg2: memref<2560x128xbf16, #tpu.memory_space<vmem>>, %arg3: memref<1x128xf32, #tpu.memory_space<vmem>>, %arg4: memref<10x72xbf16, #tpu.memory_space<vmem>>, %arg5: memref<32x64xbf16, #tpu.memory_space<vmem>>, %arg6: memref<1x64xf32, #tpu.memory_space<vmem>>, %arg7: memref<64x8xbf16, #tpu.memory_space<vmem>>, %arg8: memref<1x8xf32, #tpu.memory_space<vmem>>, %arg9: memref<8x64xbf16, #tpu.memory_space<vmem>>, %arg10: memref<1x64xf32, #tpu.memory_space<vmem>>, %arg11: memref<64x128xbf16, #tpu.memory_space<vmem>>, %arg12: memref<1x128xf32, #tpu.memory_space<vmem>>, %arg13: memref<1x32x128xf32, #tpu.memory_space<vmem>>, %arg14: memref<27x32xf32, #tpu.memory_space<vmem>>) attributes {dimension_semantics = [#tpu.dimension_semantics<parallel>], iteration_bounds = array<i64: 2>, scalar_prefetch = 0 : i64, scratch_operands = 1 : i64, tpu.core_type = #tpu.core_type<tc>, window_params = [{transform_indices = @transform_0, window_bounds = array<i64: 1, 78, 2560>}, {pipeline_mode = #tpu.pipeline_mode<synchronous>, transform_indices = @transform_1, window_bounds = array<i64: 2560, 128>}, {pipeline_mode = #tpu.pipeline_mode<synchronous>, transform_indices = @transform_2, window_bounds = array<i64: 1, 128>}, {pipeline_mode = #tpu.pipeline_mode<synchronous>, transform_indices = @transform_3, window_bounds = array<i64: 10, 72>}, {pipeline_mode = #tpu.pipeline_mode<synchronous>, transform_indices = @transform_4, window_bounds = array<i64: 32, 64>}, {pipeline_mode = #tpu.pipeline_mode<synchronous>, transform_indices = @transform_5, window_bounds = array<i64: 1, 64>}, {pipeline_mode = #tpu.pipeline_mode<synchronous>, transform_indices = @transform_6, window_bounds = array<i64: 64, 8>}, {pipeline_mode = #tpu.pipeline_mode<synchronous>, transform_indices = @transform_7, window_bounds = array<i64: 1, 8>}, {pipeline_mode = #tpu.pipeline_mode<synchronous>, transform_indices = @transform_8, window_bounds = array<i64: 8, 64>}, {pipeline_mode = #tpu.pipeline_mode<synchronous>, transform_indices = @transform_9, window_bounds = array<i64: 1, 64>}, {pipeline_mode = #tpu.pipeline_mode<synchronous>, transform_indices = @transform_10, window_bounds = array<i64: 64, 128>}, {pipeline_mode = #tpu.pipeline_mode<synchronous>, transform_indices = @transform_11, window_bounds = array<i64: 1, 128>}, {transform_indices = @transform_12, window_bounds = array<i64: 1, 32, 128>}]} {
    %c0 = arith.constant 0 : index
    %c0_0 = arith.constant 0 : index
    %c0_1 = arith.constant 0 : index
    %0 = vector.load %arg1[%c0, %c0_0, %c0_1] : memref<1x78x2560xbf16, #tpu.memory_space<vmem>>, vector<1x78x2560xbf16>
    %1 = vector.shape_cast %0 : vector<1x78x2560xbf16> to vector<78x2560xbf16>
    %c0_2 = arith.constant 0 : index
    %c0_3 = arith.constant 0 : index
    %2 = vector.load %arg2[%c0_2, %c0_3] : memref<2560x128xbf16, #tpu.memory_space<vmem>>, vector<2560x128xbf16>
    %cst = arith.constant dense<0.000000e+00> : vector<78x128xf32>
    %3 = tpu.matmul %1, %2, %cst {dimension_numbers = #tpu.dot_dimension_numbers<[1], [0], [0], [1], [0, 0, 1, 1], [], []>} : vector<78x2560xbf16>, vector<2560x128xbf16>, vector<78x128xf32> -> vector<78x128xf32>
    %c0_4 = arith.constant 0 : index
    %c0_5 = arith.constant 0 : index
    %4 = vector.load %arg3[%c0_4, %c0_5] : memref<1x128xf32, #tpu.memory_space<vmem>>, vector<1x128xf32>
    %5 = vector.broadcast %4 : vector<1x128xf32> to vector<78x128xf32>
    %6 = arith.addf %3, %5 : vector<78x128xf32>
    %cst_6 = arith.constant 0.000000e+00 : f32
    %7 = vector.broadcast %cst_6 : f32 to vector<78x128xf32>
    %8 = arith.maximumf %6, %7 : vector<78x128xf32>
    %9 = vector.extract_strided_slice %8 {offsets = [0, 0], sizes = [72, 128], strides = [1, 1]} : vector<78x128xf32> to vector<72x128xf32>
    %10 = vector.extract_strided_slice %8 {offsets = [1, 0], sizes = [72, 128], strides = [1, 1]} : vector<78x128xf32> to vector<72x128xf32>
    %11 = arith.maximumf %9, %10 : vector<72x128xf32>
    %12 = vector.extract_strided_slice %8 {offsets = [2, 0], sizes = [72, 128], strides = [1, 1]} : vector<78x128xf32> to vector<72x128xf32>
    %13 = arith.maximumf %11, %12 : vector<72x128xf32>
    %14 = vector.extract_strided_slice %8 {offsets = [3, 0], sizes = [72, 128], strides = [1, 1]} : vector<78x128xf32> to vector<72x128xf32>
    %15 = arith.maximumf %13, %14 : vector<72x128xf32>
    %16 = vector.extract_strided_slice %8 {offsets = [4, 0], sizes = [72, 128], strides = [1, 1]} : vector<78x128xf32> to vector<72x128xf32>
    %17 = arith.maximumf %15, %16 : vector<72x128xf32>
    %18 = vector.extract_strided_slice %8 {offsets = [5, 0], sizes = [72, 128], strides = [1, 1]} : vector<78x128xf32> to vector<72x128xf32>
    %19 = arith.maximumf %17, %18 : vector<72x128xf32>
    %20 = vector.extract_strided_slice %8 {offsets = [6, 0], sizes = [72, 128], strides = [1, 1]} : vector<78x128xf32> to vector<72x128xf32>
    %21 = arith.maximumf %19, %20 : vector<72x128xf32>
    %c0_7 = arith.constant 0 : index
    %c0_8 = arith.constant 0 : index
    %22 = vector.load %arg4[%c0_7, %c0_8] : memref<10x72xbf16, #tpu.memory_space<vmem>>, vector<10x72xbf16>
    %23 = arith.truncf %21 : vector<72x128xf32> to vector<72x128xbf16>
    %cst_9 = arith.constant dense<0.000000e+00> : vector<10x128xf32>
    %24 = tpu.matmul %22, %23, %cst_9 {dimension_numbers = #tpu.dot_dimension_numbers<[1], [0], [0], [1], [0, 0, 1, 1], [], []>} : vector<10x72xbf16>, vector<72x128xbf16>, vector<10x128xf32> -> vector<10x128xf32>
    %25 = vector.extract_strided_slice %24 {offsets = [0, 0], sizes = [10, 32], strides = [1, 1]} : vector<10x128xf32> to vector<10x32xf32>
    %c0_10 = arith.constant 0 : index
    %c0_11 = arith.constant 0 : index
    %26 = vector.load %arg14[%c0_10, %c0_11] : memref<27x32xf32, #tpu.memory_space<vmem>>, vector<10x32xf32>
    tpu.vector_store %arg14[%c0_10, %c0_11], %25 {strides = array<i32>} : memref<27x32xf32, #tpu.memory_space<vmem>>, vector<10x32xf32>,
    %27 = vector.extract_strided_slice %24 {offsets = [0, 32], sizes = [9, 32], strides = [1, 1]} : vector<10x128xf32> to vector<9x32xf32>
    %c10 = arith.constant 10 : index
    %c0_12 = arith.constant 0 : index
    %28 = vector.load %arg14[%c10, %c0_12] : memref<27x32xf32, #tpu.memory_space<vmem>>, vector<9x32xf32>
    tpu.vector_store %arg14[%c10, %c0_12], %27 {strides = array<i32>} : memref<27x32xf32, #tpu.memory_space<vmem>>, vector<9x32xf32>,
    %29 = vector.extract_strided_slice %24 {offsets = [0, 64], sizes = [6, 32], strides = [1, 1]} : vector<10x128xf32> to vector<6x32xf32>
    %c19 = arith.constant 19 : index
    %c0_13 = arith.constant 0 : index
    %30 = vector.load %arg14[%c19, %c0_13] : memref<27x32xf32, #tpu.memory_space<vmem>>, vector<6x32xf32>
    tpu.vector_store %arg14[%c19, %c0_13], %29 {strides = array<i32>} : memref<27x32xf32, #tpu.memory_space<vmem>>, vector<6x32xf32>,
    %31 = vector.extract_strided_slice %24 {offsets = [0, 96], sizes = [2, 32], strides = [1, 1]} : vector<10x128xf32> to vector<2x32xf32>
    %c25 = arith.constant 25 : index
    %c0_14 = arith.constant 0 : index
    %32 = vector.load %arg14[%c25, %c0_14] : memref<27x32xf32, #tpu.memory_space<vmem>>, vector<2x32xf32>
    tpu.vector_store %arg14[%c25, %c0_14], %31 {strides = array<i32>} : memref<27x32xf32, #tpu.memory_space<vmem>>, vector<2x32xf32>,
    %c0_15 = arith.constant 0 : index
    %c0_16 = arith.constant 0 : index
    %33 = vector.load %arg14[%c0_15, %c0_16] : memref<27x32xf32, #tpu.memory_space<vmem>>, vector<27x32xf32>
    %34 = arith.truncf %33 : vector<27x32xf32> to vector<27x32xbf16>
    %c0_17 = arith.constant 0 : index
    %c0_18 = arith.constant 0 : index
    %35 = vector.load %arg5[%c0_17, %c0_18] : memref<32x64xbf16, #tpu.memory_space<vmem>>, vector<32x64xbf16>
    %cst_19 = arith.constant dense<0.000000e+00> : vector<27x64xf32>
    %36 = tpu.matmul %34, %35, %cst_19 {dimension_numbers = #tpu.dot_dimension_numbers<[1], [0], [0], [1], [0, 0, 1, 1], [], []>} : vector<27x32xbf16>, vector<32x64xbf16>, vector<27x64xf32> -> vector<27x64xf32>
    %c0_20 = arith.constant 0 : index
    %c0_21 = arith.constant 0 : index
    %37 = vector.load %arg6[%c0_20, %c0_21] : memref<1x64xf32, #tpu.memory_space<vmem>>, vector<1x64xf32>
    %38 = vector.broadcast %37 : vector<1x64xf32> to vector<27x64xf32>
    %39 = arith.addf %36, %38 : vector<27x64xf32>
    %40 = math.tanh %39 : vector<27x64xf32>
    %41 = arith.truncf %40 : vector<27x64xf32> to vector<27x64xbf16>
    %c0_22 = arith.constant 0 : index
    %c0_23 = arith.constant 0 : index
    %42 = vector.load %arg7[%c0_22, %c0_23] : memref<64x8xbf16, #tpu.memory_space<vmem>>, vector<64x8xbf16>
    %cst_24 = arith.constant dense<0.000000e+00> : vector<27x8xf32>
    %43 = tpu.matmul %41, %42, %cst_24 {dimension_numbers = #tpu.dot_dimension_numbers<[1], [0], [0], [1], [0, 0, 1, 1], [], []>} : vector<27x64xbf16>, vector<64x8xbf16>, vector<27x8xf32> -> vector<27x8xf32>
    %c0_25 = arith.constant 0 : index
    %c0_26 = arith.constant 0 : index
    %44 = vector.load %arg8[%c0_25, %c0_26] : memref<1x8xf32, #tpu.memory_space<vmem>>, vector<1x8xf32>
    %45 = vector.broadcast %44 : vector<1x8xf32> to vector<27x8xf32>
    %46 = arith.addf %43, %45 : vector<27x8xf32>
    %cst_27 = arith.constant dense<0xFF800000> : vector<27xf32>
    %47 = vector.multi_reduction <maximumf>, %46, %cst_27 [1] : vector<27x8xf32> to vector<27xf32>
    %48 = vector.shape_cast %47 : vector<27xf32> to vector<27x1xf32>
    %49 = vector.broadcast %48 : vector<27x1xf32> to vector<27x8xf32>
    %50 = arith.subf %46, %49 : vector<27x8xf32>
    %51 = math.exp %50 : vector<27x8xf32>
    %cst_28 = arith.constant dense<0.000000e+00> : vector<27xf32>
    %52 = vector.multi_reduction <add>, %51, %cst_28 [1] : vector<27x8xf32> to vector<27xf32>
    %53 = vector.shape_cast %52 : vector<27xf32> to vector<27x1xf32>
    %54 = vector.broadcast %53 : vector<27x1xf32> to vector<27x8xf32>
    %55 = arith.divf %51, %54 : vector<27x8xf32>
    %56 = arith.truncf %55 : vector<27x8xf32> to vector<27x8xbf16>
    %cst_29 = arith.constant dense<0.000000e+00> : vector<32x8xf32>
    %57 = tpu.matmul %34, %56, %cst_29 {dimension_numbers = #tpu.dot_dimension_numbers<[0], [0], [1], [1], [0, 1, 1, 1], [], []>} : vector<27x32xbf16>, vector<27x8xbf16>, vector<32x8xf32> -> vector<32x8xf32>
    %58 = arith.truncf %57 : vector<32x8xf32> to vector<32x8xbf16>
    %c0_30 = arith.constant 0 : index
    %c0_31 = arith.constant 0 : index
    %59 = vector.load %arg9[%c0_30, %c0_31] : memref<8x64xbf16, #tpu.memory_space<vmem>>, vector<8x64xbf16>
    %cst_32 = arith.constant dense<0.000000e+00> : vector<32x64xf32>
    %60 = tpu.matmul %58, %59, %cst_32 {dimension_numbers = #tpu.dot_dimension_numbers<[1], [0], [0], [1], [0, 0, 1, 1], [], []>} : vector<32x8xbf16>, vector<8x64xbf16>, vector<32x64xf32> -> vector<32x64xf32>
    %c0_33 = arith.constant 0 : index
    %c0_34 = arith.constant 0 : index
    %61 = vector.load %arg10[%c0_33, %c0_34] : memref<1x64xf32, #tpu.memory_space<vmem>>, vector<1x64xf32>
    %62 = vector.broadcast %61 : vector<1x64xf32> to vector<32x64xf32>
    %63 = arith.addf %60, %62 : vector<32x64xf32>
    %64 = arith.truncf %63 : vector<32x64xf32> to vector<32x64xbf16>
    %c0_35 = arith.constant 0 : index
    %c0_36 = arith.constant 0 : index
    %65 = vector.load %arg11[%c0_35, %c0_36] : memref<64x128xbf16, #tpu.memory_space<vmem>>, vector<64x128xbf16>
    %cst_37 = arith.constant dense<0.000000e+00> : vector<32x128xf32>
    %66 = tpu.matmul %64, %65, %cst_37 {dimension_numbers = #tpu.dot_dimension_numbers<[1], [0], [0], [1], [0, 0, 1, 1], [], []>} : vector<32x64xbf16>, vector<64x128xbf16>, vector<32x128xf32> -> vector<32x128xf32>
    %c0_38 = arith.constant 0 : index
    %c0_39 = arith.constant 0 : index
    %67 = vector.load %arg12[%c0_38, %c0_39] : memref<1x128xf32, #tpu.memory_space<vmem>>, vector<1x128xf32>
    %68 = vector.broadcast %67 : vector<1x128xf32> to vector<32x128xf32>
    %69 = arith.addf %66, %68 : vector<32x128xf32>
    %c0_40 = arith.constant 0 : index
    %c0_41 = arith.constant 0 : index
    %c0_42 = arith.constant 0 : index
    %70 = vector.load %arg13[%c0_40, %c0_41, %c0_42] : memref<1x32x128xf32, #tpu.memory_space<vmem>>, vector<1x32x128xf32>
    %71 = vector.shape_cast %70 : vector<1x32x128xf32> to vector<32x128xf32>
    %72 = vector.shape_cast %69 : vector<32x128xf32> to vector<1x32x128xf32>
    tpu.vector_store %arg13[%c0_40, %c0_41, %c0_42], %72 {strides = array<i32>} : memref<1x32x128xf32, #tpu.memory_space<vmem>>, vector<1x32x128xf32>,
    return
  }
  func.func @transform_0(%arg0: i32) -> (i32, i32, i32) {
    %c0_i32 = arith.constant 0 : i32
    %c0_i32_0 = arith.constant 0 : i32
    %c0_i32_1 = arith.constant 0 : i32
    return %arg0, %c0_i32, %c0_i32_0 : i32, i32, i32
  }
  func.func @transform_1(%arg0: i32) -> (i32, i32) {
    %c0_i32 = arith.constant 0 : i32
    %c0_i32_0 = arith.constant 0 : i32
    %c0_i32_1 = arith.constant 0 : i32
    return %c0_i32, %c0_i32_0 : i32, i32
  }
  func.func @transform_2(%arg0: i32) -> (i32, i32) {
    %c0_i32 = arith.constant 0 : i32
    %c0_i32_0 = arith.constant 0 : i32
    %c0_i32_1 = arith.constant 0 : i32
    return %c0_i32, %c0_i32_0 : i32, i32
  }
  func.func @transform_3(%arg0: i32) -> (i32, i32) {
    %c0_i32 = arith.constant 0 : i32
    %c0_i32_0 = arith.constant 0 : i32
    %c0_i32_1 = arith.constant 0 : i32
    return %c0_i32, %c0_i32_0 : i32, i32
  }
  func.func @transform_4(%arg0: i32) -> (i32, i32) {
    %c0_i32 = arith.constant 0 : i32
    %c0_i32_0 = arith.constant 0 : i32
    %c0_i32_1 = arith.constant 0 : i32
    return %c0_i32, %c0_i32_0 : i32, i32
  }
  func.func @transform_5(%arg0: i32) -> (i32, i32) {
    %c0_i32 = arith.constant 0 : i32
    %c0_i32_0 = arith.constant 0 : i32
    %c0_i32_1 = arith.constant 0 : i32
    return %c0_i32, %c0_i32_0 : i32, i32
  }
  func.func @transform_6(%arg0: i32) -> (i32, i32) {
    %c0_i32 = arith.constant 0 : i32
    %c0_i32_0 = arith.constant 0 : i32
    %c0_i32_1 = arith.constant 0 : i32
    return %c0_i32, %c0_i32_0 : i32, i32
  }
  func.func @transform_7(%arg0: i32) -> (i32, i32) {
    %c0_i32 = arith.constant 0 : i32
    %c0_i32_0 = arith.constant 0 : i32
    %c0_i32_1 = arith.constant 0 : i32
    return %c0_i32, %c0_i32_0 : i32, i32
  }
  func.func @transform_8(%arg0: i32) -> (i32, i32) {
    %c0_i32 = arith.constant 0 : i32
    %c0_i32_0 = arith.constant 0 : i32
    %c0_i32_1 = arith.constant 0 : i32
    return %c0_i32, %c0_i32_0 : i32, i32
  }
  func.func @transform_9(%arg0: i32) -> (i32, i32) {
    %c0_i32 = arith.constant 0 : i32
    %c0_i32_0 = arith.constant 0 : i32
    %c0_i32_1 = arith.constant 0 : i32
    return %c0_i32, %c0_i32_0 : i32, i32
  }
  func.func @transform_10(%arg0: i32) -> (i32, i32) {
    %c0_i32 = arith.constant 0 : i32
    %c0_i32_0 = arith.constant 0 : i32
    %c0_i32_1 = arith.constant 0 : i32
    return %c0_i32, %c0_i32_0 : i32, i32
  }
  func.func @transform_11(%arg0: i32) -> (i32, i32) {
    %c0_i32 = arith.constant 0 : i32
    %c0_i32_0 = arith.constant 0 : i32
    %c0_i32_1 = arith.constant 0 : i32
    return %c0_i32, %c0_i32_0 : i32, i32
  }
  func.func @transform_12(%arg0: i32) -> (i32, i32, i32) {
    %c0_i32 = arith.constant 0 : i32
    %c0_i32_0 = arith.constant 0 : i32
    %c0_i32_1 = arith.constant 0 : i32
    return %arg0, %c0_i32, %c0_i32_0 : i32, i32, i32
  }
}

</mosaic_0001>

<llo_original>
// kernel: net_forward.1
$region0: #{net_forward.1}
  #allocation0 [shape = 'u32[]', space=smem, size = 0x4, offset = 0x4, fixed_abs, tag = 'smem constant byte address 0x4 - core index']
  #allocation1 [shape = 'u32[144,128]{1,0:T(1,128)}', space=vmem, size = 0x12000, scoped, tag = 'internal scratch']
  #allocation2 [shape = 'f32[27,32]{1,0:T(8,128)}', space=vmem, size = 0x4000, scoped, tag = 'scratch operand']
  %s0 = inlined_call_operand.vmem [shape: bf16[2,78,2560], index: 0, kind: input, shape index: {}]
  %s1 = inlined_call_operand.vmem [shape: bf16[2560,128], index: 1, kind: input, shape index: {}]
  %s2 = inlined_call_operand.vmem [shape: f32[1,128], index: 2, kind: input, shape index: {}]
  %s3 = inlined_call_operand.vmem [shape: bf16[10,72], index: 3, kind: input, shape index: {}]
  %s4 = inlined_call_operand.vmem [shape: bf16[32,64], index: 4, kind: input, shape index: {}]
  %s5 = inlined_call_operand.vmem [shape: f32[1,64], index: 5, kind: input, shape index: {}]
  %s6 = inlined_call_operand.vmem [shape: bf16[64,8], index: 6, kind: input, shape index: {}]
  %s7 = inlined_call_operand.vmem [shape: f32[1,8], index: 7, kind: input, shape index: {}]
  %s8 = inlined_call_operand.vmem [shape: bf16[8,64], index: 8, kind: input, shape index: {}]
  %s9 = inlined_call_operand.vmem [shape: f32[1,64], index: 9, kind: input, shape index: {}]
  %s10 = inlined_call_operand.vmem [shape: bf16[64,128], index: 10, kind: input, shape index: {}]
  %s11 = inlined_call_operand.vmem [shape: f32[1,128], index: 11, kind: input, shape index: {}]
  %s12 = inlined_call_operand.vmem [shape: f32[2,32,128], index: 12, kind: output, shape index: {}]
  %s13 = sld [smem:[#allocation0]]
  $region81: #{net_forward.1} parent=0
    _
  %s15 = ssub.s32 1, %s13
  %s16 = scalar_select 0, %s15, %s13
  loop: start=0, step=1, limit=4
  $region2: #{net_forward.1} parent=0 // loop_pre_header
    _
  $region3: #{net_forward.1} parent=0 // loop_header
    %s18 = sphi 0, %s22
    %p19 = scmp.ge.s32.totalorder %s18, 4
    %s28 = sphi 0, %s30
    %s31 = sphi 0, %s28
    %s32 = sphi 0, %s31
    %s48 = sphi 0, %s32
    %s52 = sphi 0, %s52
    %s54 = sphi 0, %s52
    %s55 = sphi 0, %s54
    %s69 = sphi 0, %s55
    %s73 = sphi 0, %s73
    %s75 = sphi 0, %s73
    %s76 = sphi 0, %s75
    %s90 = sphi 0, %s76
    %s94 = sphi 0, %s94
    %s96 = sphi 0, %s94
    %s97 = sphi 0, %s96
    %s111 = sphi 0, %s97
    %s115 = sphi 0, %s115
    %s117 = sphi 0, %s115
    %s118 = sphi 0, %s117
    %s132 = sphi 0, %s118
    %s136 = sphi 0, %s136
    %s138 = sphi 0, %s136
    %s139 = sphi 0, %s138
    %s153 = sphi 0, %s139
    %s157 = sphi 0, %s157
    %s159 = sphi 0, %s157
    %s160 = sphi 0, %s159
    %s174 = sphi 0, %s160
    %s178 = sphi 0, %s178
    %s180 = sphi 0, %s178
    %s181 = sphi 0, %s180
    %s195 = sphi 0, %s181
    %s199 = sphi 0, %s199
    %s201 = sphi 0, %s199
    %s202 = sphi 0, %s201
    %s216 = sphi 0, %s202
    %s220 = sphi 0, %s220
    %s222 = sphi 0, %s220
    %s223 = sphi 0, %s222
    %s237 = sphi 0, %s223
    %s241 = sphi 0, %s241
    %s243 = sphi 0, %s241
    %s244 = sphi 0, %s243
    %s258 = sphi 0, %s244
    %s262 = sphi 0, %s262
    %s264 = sphi 0, %s262
    %s265 = sphi 0, %s264
    %s279 = sphi 0, %s265
    %s285 = sphi 0, %s287
    %s288 = sphi 0, %s285
    %s289 = sphi 0, %s288
    %s305 = sphi 0, %s289
  $region4: #{net_forward.1} parent=0 // loop_header_branch
    %21 = sbr.rel (%p19) target = $region8
  $region5: #{net_forward.1} parent=0 // loop_body
    %s23 = ssub.s32 %s18, 1
    %s24 = ssub.s32 %s18, 2
    %s25 = sadd.s32 %s18, 1
    %s26 = ssub.s32 %s18, %s25
    %p27 = scmp.eq.s32.totalorder %s26, 0
    %s29 = sadd.s32 %s28, 1
    %s30 = scalar_select %p27, %s28, %s29
    %p33 = pneg %p27
    %p34 = scmp.eq.s32.totalorder %s18, 1
    %p35 = por %p33, %p34
    %p36 = scmp.ne.s32.totalorder %s28, %s31
    %p37 = scmp.eq.s32.totalorder %s18, 0
    %p38 = por %p36, %p37
    %p39 = scmp.ne.s32.totalorder %s28, %s31
    %p40 = scmp.eq.s32.totalorder %s23, 1
    %p41 = por %p39, %p40
    %p42 = scmp.ne.s32.totalorder %s31, %s32
    %p43 = scmp.eq.s32.totalorder %s23, 0
    %p44 = por %p42, %p43
    %p45 = scmp.ne.s32.totalorder %s31, %s32
    %p46 = scmp.eq.s32.totalorder %s24, 1
    %p47 = por %p45, %p46
    %p49 = scmp.ne.s32.totalorder %s32, %s48
    %p50 = scmp.eq.s32.totalorder %s24, 0
    %p51 = por %p49, %p50
    %s53 = sadd.s32 %s52, 1
    %p56 = scmp.eq.s32.totalorder %s18, 1
    %p57 = scmp.ne.s32.totalorder %s52, %s54
    %p58 = scmp.eq.s32.totalorder %s18, 0
    %p59 = por %p57, %p58
    %p60 = scmp.ne.s32.totalorder %s52, %s54
    %p61 = scmp.eq.s32.totalorder %s23, 1
    %p62 = por %p60, %p61
    %p63 = scmp.ne.s32.totalorder %s54, %s55
    %p64 = scmp.eq.s32.totalorder %s23, 0
    %p65 = por %p63, %p64
    %p66 = scmp.ne.s32.totalorder %s54, %s55
    %p67 = scmp.eq.s32.totalorder %s24, 1
    %p68 = por %p66, %p67
    %p70 = scmp.ne.s32.totalorder %s55, %s69
    %p71 = scmp.eq.s32.totalorder %s24, 0
    %p72 = por %p70, %p71
    %s74 = sadd.s32 %s73, 1
    %p77 = scmp.eq.s32.totalorder %s18, 1
    %p78 = scmp.ne.s32.totalorder %s73, %s75
    %p79 = scmp.eq.s32.totalorder %s18, 0
    %p80 = por %p78, %p79
    %p81 = scmp.ne.s32.totalorder %s73, %s75
    %p82 = scmp.eq.s32.totalorder %s23, 1
    %p83 = por %p81, %p82
    %p84 = scmp.ne.s32.totalorder %s75, %s76
    %p85 = scmp.eq.s32.totalorder %s23, 0
    %p86 = por %p84, %p85
    %p87 = scmp.ne.s32.totalorder %s75, %s76
    %p88 = scmp.eq.s32.totalorder %s24, 1
    %p89 = por %p87, %p88
    %p91 = scmp.ne.s32.totalorder %s76, %s90
    %p92 = scmp.eq.s32.totalorder %s24, 0
    %p93 = por %p91, %p92
    %s95 = sadd.s32 %s94, 1
    %p98 = scmp.eq.s32.totalorder %s18, 1
    %p99 = scmp.ne.s32.totalorder %s94, %s96
    %p100 = scmp.eq.s32.totalorder %s18, 0
    %p101 = por %p99, %p100
    %p102 = scmp.ne.s32.totalorder %s94, %s96
    %p103 = scmp.eq.s32.totalorder %s23, 1
    %p104 = por %p102, %p103
    %p105 = scmp.ne.s32.totalorder %s96, %s97
    %p106 = scmp.eq.s32.totalorder %s23, 0
    %p107 = por %p105, %p106
    %p108 = scmp.ne.s32.totalorder %s96, %s97
    %p109 = scmp.eq.s32.totalorder %s24, 1
    %p110 = por %p108, %p109
    %p112 = scmp.ne.s32.totalorder %s97, %s111
    %p113 = scmp.eq.s32.totalorder %s24, 0
    %p114 = por %p112, %p113
    %s116 = sadd.s32 %s115, 1
    %p119 = scmp.eq.s32.totalorder %s18, 1
    %p120 = scmp.ne.s32.totalorder %s115, %s117
    %p121 = scmp.eq.s32.totalorder %s18, 0
    %p122 = por %p120, %p121
    %p123 = scmp.ne.s32.totalorder %s115, %s117
    %p124 = scmp.eq.s32.totalorder %s23, 1
    %p125 = por %p123, %p124
    %p126 = scmp.ne.s32.totalorder %s117, %s118
    %p127 = scmp.eq.s32.totalorder %s23, 0
    %p128 = por %p126, %p127
    %p129 = scmp.ne.s32.totalorder %s117, %s118
    %p130 = scmp.eq.s32.totalorder %s24, 1
    %p131 = por %p129, %p130
    %p133 = scmp.ne.s32.totalorder %s118, %s132
    %p134 = scmp.eq.s32.totalorder %s24, 0
    %p135 = por %p133, %p134
    %s137 = sadd.s32 %s136, 1
    %p140 = scmp.eq.s32.totalorder %s18, 1
    %p141 = scmp.ne.s32.totalorder %s136, %s138
    %p142 = scmp.eq.s32.totalorder %s18, 0
    %p143 = por %p141, %p142
    %p144 = scmp.ne.s32.totalorder %s136, %s138
    %p145 = scmp.eq.s32.totalorder %s23, 1
    %p146 = por %p144, %p145
    %p147 = scmp.ne.s32.totalorder %s138, %s139
    %p148 = scmp.eq.s32.totalorder %s23, 0
    %p149 = por %p147, %p148
    %p150 = scmp.ne.s32.totalorder %s138, %s139
    %p151 = scmp.eq.s32.totalorder %s24, 1
    %p152 = por %p150, %p151
    %p154 = scmp.ne.s32.totalorder %s139, %s153
    %p155 = scmp.eq.s32.totalorder %s24, 0
    %p156 = por %p154, %p155
    %s158 = sadd.s32 %s157, 1
    %p161 = scmp.eq.s32.totalorder %s18, 1
    %p162 = scmp.ne.s32.totalorder %s157, %s159
    %p163 = scmp.eq.s32.totalorder %s18, 0
    %p164 = por %p162, %p163
    %p165 = scmp.ne.s32.totalorder %s157, %s159
    %p166 = scmp.eq.s32.totalorder %s23, 1
    %p167 = por %p165, %p166
    %p168 = scmp.ne.s32.totalorder %s159, %s160
    %p169 = scmp.eq.s32.totalorder %s23, 0
    %p170 = por %p168, %p169
    %p171 = scmp.ne.s32.totalorder %s159, %s160
    %p172 = scmp.eq.s32.totalorder %s24, 1
    %p173 = por %p171, %p172
    %p175 = scmp.ne.s32.totalorder %s160, %s174
    %p176 = scmp.eq.s32.totalorder %s24, 0
    %p177 = por %p175, %p176
    %s179 = sadd.s32 %s178, 1
    %p182 = scmp.eq.s32.totalorder %s18, 1
    %p183 = scmp.ne.s32.totalorder %s178, %s180
    %p184 = scmp.eq.s32.totalorder %s18, 0
    %p185 = por %p183, %p184
    %p186 = scmp.ne.s32.totalorder %s178, %s180
    %p187 = scmp.eq.s32.totalorder %s23, 1
    %p188 = por %p186, %p187
    %p189 = scmp.ne.s32.totalorder %s180, %s181
    %p190 = scmp.eq.s32.totalorder %s23, 0
    %p191 = por %p189, %p190
    %p192 = scmp.ne.s32.totalorder %s180, %s181
    %p193 = scmp.eq.s32.totalorder %s24, 1
    %p194 = por %p192, %p193
    %p196 = scmp.ne.s32.totalorder %s181, %s195
    %p197 = scmp.eq.s32.totalorder %s24, 0
    %p198 = por %p196, %p197
    %s200 = sadd.s32 %s199, 1
    %p203 = scmp.eq.s32.totalorder %s18, 1
    %p204 = scmp.ne.s32.totalorder %s199, %s201
    %p205 = scmp.eq.s32.totalorder %s18, 0
    %p206 = por %p204, %p205
    %p207 = scmp.ne.s32.totalorder %s199, %s201
    %p208 = scmp.eq.s32.totalorder %s23, 1
    %p209 = por %p207, %p208
    %p210 = scmp.ne.s32.totalorder %s201, %s202
    %p211 = scmp.eq.s32.totalorder %s23, 0
    %p212 = por %p210, %p211
    %p213 = scmp.ne.s32.totalorder %s201, %s202
    %p214 = scmp.eq.s32.totalorder %s24, 1
    %p215 = por %p213, %p214
    %p217 = scmp.ne.s32.totalorder %s202, %s216
    %p218 = scmp.eq.s32.totalorder %s24, 0
    %p219 = por %p217, %p218
    %s221 = sadd.s32 %s220, 1
    %p224 = scmp.eq.s32.totalorder %s18, 1
    %p225 = scmp.ne.s32.totalorder %s220, %s222
    %p226 = scmp.eq.s32.totalorder %s18, 0
    %p227 = por %p225, %p226
    %p228 = scmp.ne.s32.totalorder %s220, %s222
    %p229 = scmp.eq.s32.totalorder %s23, 1
    %p230 = por %p228, %p229
    %p231 = scmp.ne.s32.totalorder %s222, %s223
    %p232 = scmp.eq.s32.totalorder %s23, 0
    %p233 = por %p231, %p232
    %p234 = scmp.ne.s32.totalorder %s222, %s223
    %p235 = scmp.eq.s32.totalorder %s24, 1
    %p236 = por %p234, %p235
    %p238 = scmp.ne.s32.totalorder %s223, %s237
    %p239 = scmp.eq.s32.totalorder %s24, 0
    %p240 = por %p238, %p239
    %s242 = sadd.s32 %s241, 1
    %p245 = scmp.eq.s32.totalorder %s18, 1
    %p246 = scmp.ne.s32.totalorder %s241, %s243
    %p247 = scmp.eq.s32.totalorder %s18, 0
    %p248 = por %p246, %p247
    %p249 = scmp.ne.s32.totalorder %s241, %s243
    %p250 = scmp.eq.s32.totalorder %s23, 1
    %p251 = por %p249, %p250
    %p252 = scmp.ne.s32.totalorder %s243, %s244
    %p253 = scmp.eq.s32.totalorder %s23, 0
    %p254 = por %p252, %p253
    %p255 = scmp.ne.s32.totalorder %s243, %s244
    %p256 = scmp.eq.s32.totalorder %s24, 1
    %p257 = por %p255, %p256
    %p259 = scmp.ne.s32.totalorder %s244, %s258
    %p260 = scmp.eq.s32.totalorder %s24, 0
    %p261 = por %p259, %p260
    %s263 = sadd.s32 %s262, 1
    %p266 = scmp.eq.s32.totalorder %s18, 1
    %p267 = scmp.ne.s32.totalorder %s262, %s264
    %p268 = scmp.eq.s32.totalorder %s18, 0
    %p269 = por %p267, %p268
    %p270 = scmp.ne.s32.totalorder %s262, %s264
    %p271 = scmp.eq.s32.totalorder %s23, 1
    %p272 = por %p270, %p271
    %p273 = scmp.ne.s32.totalorder %s264, %s265
    %p274 = scmp.eq.s32.totalorder %s23, 0
    %p275 = por %p273, %p274
    %p276 = scmp.ne.s32.totalorder %s264, %s265
    %p277 = scmp.eq.s32.totalorder %s24, 1
    %p278 = por %p276, %p277
    %p280 = scmp.ne.s32.totalorder %s265, %s279
    %p281 = scmp.eq.s32.totalorder %s24, 0
    %p282 = por %p280, %p281
    %s283 = ssub.s32 %s18, %s25
    %p284 = scmp.eq.s32.totalorder %s283, 0
    %s286 = sadd.s32 %s285, 1
    %s287 = scalar_select %p284, %s285, %s286
    %p290 = pneg %p284
    %p291 = scmp.eq.s32.totalorder %s18, 1
    %p292 = por %p290, %p291
    %p293 = scmp.ne.s32.totalorder %s285, %s288
    %p294 = scmp.eq.s32.totalorder %s18, 0
    %p295 = por %p293, %p294
    %p296 = scmp.ne.s32.totalorder %s285, %s288
    %p297 = scmp.eq.s32.totalorder %s23, 1
    %p298 = por %p296, %p297
    %p299 = scmp.ne.s32.totalorder %s288, %s289
    %p300 = scmp.eq.s32.totalorder %s23, 0
    %p301 = por %p299, %p300
    %p302 = scmp.ne.s32.totalorder %s288, %s289
    %p303 = scmp.eq.s32.totalorder %s24, 1
    %p304 = por %p302, %p303
    %p306 = scmp.ne.s32.totalorder %s289, %s305
    %p307 = scmp.eq.s32.totalorder %s24, 0
    %p308 = por %p306, %p307
    %p309 = scmp.le.s32.totalorder 1, %s18
    %p310 = scmp.lt.s32.totalorder %s18, 3
    %p311 = pnand %p309, %p310
    %p312 = pneg %p311
    // Predicated region
    $region9: #{net_forward.1} parent=5 // pred_check
      _
    $region10: #{net_forward.1} parent=5 // pred_check_branch
      %314 = sbr.rel (%p311) target = $region12
    $region11: #{net_forward.1} parent=5 // pred_region
      %s315 = ssub.s32 %s18, 1
      // Predicated region
      $region13: #{net_forward.1} parent=11 // pred_check
        %p316 = pneg %p65
      $region14: #{net_forward.1} parent=11 // pred_check_branch
        %318 = sbr.rel (%p316) target = $region16
      $region15: #{net_forward.1} parent=11 // pred_region
        _
      $region16: #{net_forward.1} parent=11 // pred_fallthru
        _
      // Predicated region
      $region17: #{net_forward.1} parent=11 // pred_check
        %p319 = pneg %p86
      $region18: #{net_forward.1} parent=11 // pred_check_branch
        %321 = sbr.rel (%p319) target = $region20
      $region19: #{net_forward.1} parent=11 // pred_region
        _
      $region20: #{net_forward.1} parent=11 // pred_fallthru
        _
      // Predicated region
      $region21: #{net_forward.1} parent=11 // pred_check
        %p322 = pneg %p107
      $region22: #{net_forward.1} parent=11 // pred_check_branch
        %324 = sbr.rel (%p322) target = $region24
      $region23: #{net_forward.1} parent=11 // pred_region
        _
      $region24: #{net_forward.1} parent=11 // pred_fallthru
        _
      // Predicated region
      $region25: #{net_forward.1} parent=11 // pred_check
        %p325 = pneg %p128
      $region26: #{net_forward.1} parent=11 // pred_check_branch
        %327 = sbr.rel (%p325) target = $region28
      $region27: #{net_forward.1} parent=11 // pred_region
        _
      $region28: #{net_forward.1} parent=11 // pred_fallthru
        _
      // Predicated region
      $region29: #{net_forward.1} parent=11 // pred_check
        %p328 = pneg %p149
      $region30: #{net_forward.1} parent=11 // pred_check_branch
        %330 = sbr.rel (%p328) target = $region32
      $region31: #{net_forward.1} parent=11 // pred_region
        _
      $region32: #{net_forward.1} parent=11 // pred_fallthru
        _
      // Predicated region
      $region33: #{net_forward.1} parent=11 // pred_check
        %p331 = pneg %p170
      $region34: #{net_forward.1} parent=11 // pred_check_branch
        %333 = sbr.rel (%p331) target = $region36
      $region35: #{net_forward.1} parent=11 // pred_region
        _
      $region36: #{net_forward.1} parent=11 // pred_fallthru
        _
      // Predicated region
      $region37: #{net_forward.1} parent=11 // pred_check
        %p334 = pneg %p191
      $region38: #{net_forward.1} parent=11 // pred_check_branch
        %336 = sbr.rel (%p334) target = $region40
      $region39: #{net_forward.1} parent=11 // pred_region
        _
      $region40: #{net_forward.1} parent=11 // pred_fallthru
        _
      // Predicated region
      $region41: #{net_forward.1} parent=11 // pred_check
        %p337 = pneg %p212
      $region42: #{net_forward.1} parent=11 // pred_check_branch
        %339 = sbr.rel (%p337) target = $region44
      $region43: #{net_forward.1} parent=11 // pred_region
        _
      $region44: #{net_forward.1} parent=11 // pred_fallthru
        _
      // Predicated region
      $region45: #{net_forward.1} parent=11 // pred_check
        %p340 = pneg %p233
      $region46: #{net_forward.1} parent=11 // pred_check_branch
        %342 = sbr.rel (%p340) target = $region48
      $region47: #{net_forward.1} parent=11 // pred_region
        _
      $region48: #{net_forward.1} parent=11 // pred_fallthru
        _
      // Predicated region
      $region49: #{net_forward.1} parent=11 // pred_check
        %p343 = pneg %p254
      $region50: #{net_forward.1} parent=11 // pred_check_branch
        %345 = sbr.rel (%p343) target = $region52
      $region51: #{net_forward.1} parent=11 // pred_region
        _
      $region52: #{net_forward.1} parent=11 // pred_fallthru
        _
      // Predicated region
      $region53: #{net_forward.1} parent=11 // pred_check
        %p346 = pneg %p275
      $region54: #{net_forward.1} parent=11 // pred_check_branch
        %348 = sbr.rel (%p346) target = $region56
      $region55: #{net_forward.1} parent=11 // pred_region
        _
      $region56: #{net_forward.1} parent=11 // pred_fallthru
        _
    $region12: #{net_forward.1} parent=5 // pred_fallthru
      _
    %p349 = scmp.lt.s32.totalorder %s18, 2
    // Predicated region
    $region57: #{net_forward.1} parent=5 // pred_check
      %p350 = pneg %p349
    $region58: #{net_forward.1} parent=5 // pred_check_branch
      %352 = sbr.rel (%p350) target = $region60
    $region59: #{net_forward.1} parent=5 // pred_region
      // Predicated region
      $region61: #{net_forward.1} parent=59 // pred_check
        %p353 = pneg %p38
      $region62: #{net_forward.1} parent=59 // pred_check_branch
        %355 = sbr.rel (%p353) target = $region64
      $region63: #{net_forward.1} parent=59 // pred_region
        %p356 = scmp.lt.s32.totalorder %s18, 1
        %s357 = scalar_select %p356, %s18, 1
        %s358 = smul.addr %s357, 200
        %s359 = smul.addr %s358, 4
        %s360 = scalar_lea.vmem %s0, %s359
      $region64: #{net_forward.1} parent=59 // pred_fallthru
        _
    $region60: #{net_forward.1} parent=5 // pred_fallthru
      _
    %p361 = scmp.le.s32.totalorder 1, %s18
    %p362 = scmp.lt.s32.totalorder %s18, 3
    %p363 = pnand %p361, %p362
    %p364 = pneg %p363
    // Predicated region
    $region65: #{net_forward.1} parent=5 // pred_check
      _
    $region66: #{net_forward.1} parent=5 // pred_check_branch
      %366 = sbr.rel (%p363) target = $region68
    $region67: #{net_forward.1} parent=5 // pred_region
      %s367 = ssub.s32 %s18, 1
      %p368 = scmp.lt.s32.totalorder %s23, 1
      %s369 = scalar_select %p368, %s23, 1
      %s370 = smul.addr %s369, 200
      %s371 = smul.addr %s370, 4
      %s372 = scalar_lea.vmem %s0, %s371
      %p373 = pneg %p44
      %p374 = pneg %p41
      %p375 = pneg %p65
      %p376 = pneg %p62
      %p377 = pneg %p86
      %p378 = pneg %p83
      %p379 = pneg %p107
      %p380 = pneg %p104
      %p381 = pneg %p128
      %p382 = pneg %p125
      %p383 = pneg %p149
      %p384 = pneg %p146
      %p385 = pneg %p170
      %p386 = pneg %p167
      %p387 = pneg %p191
      %p388 = pneg %p188
      %p389 = pneg %p212
      %p390 = pneg %p209
      %p391 = pneg %p233
      %p392 = pneg %p230
      %p393 = pneg %p254
      %p394 = pneg %p251
      %p395 = pneg %p275
      %p396 = pneg %p272
      %p397 = pneg %p301
      %p398 = pneg %p298
      %p399 = scmp.lt.s32.totalorder %s23, 1
      %s400 = scalar_select %p399, %s23, 1
      %s401 = smul.addr %s400, 4
      %s402 = smul.addr %s401, 8
      %s403 = scalar_lea.vmem %s12, %s402
      %p404 = scmp.lt.s32.totalorder %s23, 1
      %s405 = scalar_select %p404, %s23, 1
      %s406 = smul.addr %s405, 200
      %s407 = smul.addr %s406, 4
      %s408 = scalar_lea.vmem %s0, %s407
      %p409 = scmp.lt.s32.totalorder %s23, 1
      %s410 = scalar_select %p409, %s23, 1
      %s411 = smul.addr %s410, 4
      %s412 = smul.addr %s411, 8
      %s413 = scalar_lea.vmem %s12, %s412
      %v415 = vld [vmem:[%s408] sm:$0xff]
      %v416 = vld [vmem:[%s408 + $0x8] sm:$0xff]
      %v417 = vld [vmem:[%s408 + $0x10] sm:$0xff]
      %v418 = vld [vmem:[%s408 + $0x18] sm:$0xff]
      %v419 = vld [vmem:[%s408 + $0x20] sm:$0xff]
      %v420 = vld [vmem:[%s408 + $0x28] sm:$0xff]
      %v421 = vld [vmem:[%s408 + $0x30] sm:$0xff]
      %v422 = vld [vmem:[%s408 + $0x38] sm:$0xff]
      %v423 = vld [vmem:[%s408 + $0x40] sm:$0xff]
      %v424 = vld [vmem:[%s408 + $0x48] sm:$0xff]
      %v425 = vld [vmem:[%s408 + $0x50] sm:$0xff]
      %v426 = vld [vmem:[%s408 + $0x58] sm:$0xff]
      %v427 = vld [vmem:[%s408 + $0x60] sm:$0xff]
      %v428 = vld [vmem:[%s408 + $0x68] sm:$0xff]
      %v429 = vld [vmem:[%s408 + $0x70] sm:$0xff]
      %v430 = vld [vmem:[%s408 + $0x78] sm:$0xff]
      %v431 = vld [vmem:[%s408 + $0x80] sm:$0xff]
      %v432 = vld [vmem:[%s408 + $0x88] sm:$0xff]
      %v433 = vld [vmem:[%s408 + $0x90] sm:$0xff]
      %v434 = vld [vmem:[%s408 + $0x98] sm:$0xff]
      %v435 = vld [vmem:[%s408 + $0xa0] sm:$0xff]
      %v436 = vld [vmem:[%s408 + $0xa8] sm:$0xff]
      %v437 = vld [vmem:[%s408 + $0xb0] sm:$0xff]
      %v438 = vld [vmem:[%s408 + $0xb8] sm:$0xff]
      %v439 = vld [vmem:[%s408 + $0xc0] sm:$0xff]
      %v440 = vld [vmem:[%s408 + $0xc8] sm:$0xff]
      %v441 = vld [vmem:[%s408 + $0xd0] sm:$0xff]
      %v442 = vld [vmem:[%s408 + $0xd8] sm:$0xff]
      %v443 = vld [vmem:[%s408 + $0xe0] sm:$0xff]
      %v444 = vld [vmem:[%s408 + $0xe8] sm:$0xff]
      %v445 = vld [vmem:[%s408 + $0xf0] sm:$0xff]
      %v446 = vld [vmem:[%s408 + $0xf8] sm:$0xff]
      %v447 = vld [vmem:[%s408 + $0x100] sm:$0xff]
      %v448 = vld [vmem:[%s408 + $0x108] sm:$0xff]
      %v449 = vld [vmem:[%s408 + $0x110] sm:$0xff]
      %v450 = vld [vmem:[%s408 + $0x118] sm:$0xff]
      %v451 = vld [vmem:[%s408 + $0x120] sm:$0xff]
      %v452 = vld [vmem:[%s408 + $0x128] sm:$0xff]
      %v453 = vld [vmem:[%s408 + $0x130] sm:$0xff]
      %v454 = vld [vmem:[%s408 + $0x138] sm:$0xff]
      %v455 = vld [vmem:[%s408 + $0x140] sm:$0xff]
      %v456 = vld [vmem:[%s408 + $0x148] sm:$0xff]
      %v457 = vld [vmem:[%s408 + $0x150] sm:$0xff]
      %v458 = vld [vmem:[%s408 + $0x158] sm:$0xff]
      %v459 = vld [vmem:[%s408 + $0x160] sm:$0xff]
      %v460 = vld [vmem:[%s408 + $0x168] sm:$0xff]
      %v461 = vld [vmem:[%s408 + $0x170] sm:$0xff]
      %v462 = vld [vmem:[%s408 + $0x178] sm:$0xff]
      %v463 = vld [vmem:[%s408 + $0x180] sm:$0xff]
      %v464 = vld [vmem:[%s408 + $0x188] sm:$0xff]
      %v465 = vld [vmem:[%s408 + $0x190] sm:$0xff]
      %v466 = vld [vmem:[%s408 + $0x198] sm:$0xff]
      %v467 = vld [vmem:[%s408 + $0x1a0] sm:$0xff]
      %v468 = vld [vmem:[%s408 + $0x1a8] sm:$0xff]
      %v469 = vld [vmem:[%s408 + $0x1b0] sm:$0xff]
      %v470 = vld [vmem:[%s408 + $0x1b8] sm:$0xff]
      %v471 = vld [vmem:[%s408 + $0x1c0] sm:$0xff]
      %v472 = vld [vmem:[%s408 + $0x1c8] sm:$0xff]
      %v473 = vld [vmem:[%s408 + $0x1d0] sm:$0xff]
      %v474 = vld [vmem:[%s408 + $0x1d8] sm:$0xff]
      %v475 = vld [vmem:[%s408 + $0x1e0] sm:$0xff]
      %v476 = vld [vmem:[%s408 + $0x1e8] sm:$0xff]
      %v477 = vld [vmem:[%s408 + $0x1f0] sm:$0xff]
      %v478 = vld [vmem:[%s408 + $0x1f8] sm:$0xff]
      %v479 = vld [vmem:[%s408 + $0x200] sm:$0xff]
      %v480 = vld [vmem:[%s408 + $0x208] sm:$0xff]
      %v481 = vld [vmem:[%s408 + $0x210] sm:$0xff]
      %v482 = vld [vmem:[%s408 + $0x218] sm:$0xff]
      %v483 = vld [vmem:[%s408 + $0x220] sm:$0xff]
      %v484 = vld [vmem:[%s408 + $0x228] sm:$0xff]
      %v485 = vld [vmem:[%s408 + $0x230] sm:$0xff]
      %v486 = vld [vmem:[%s408 + $0x238] sm:$0xff]
      %v487 = vld [vmem:[%s408 + $0x240] sm:$0xff]
      %v488 = vld [vmem:[%s408 + $0x248] sm:$0xff]
      %v489 = vld [vmem:[%s408 + $0x250] sm:$0xff]
      %v490 = vld [vmem:[%s408 + $0x258] sm:$0xff]
      %v491 = vld [vmem:[%s408 + $0x260] sm:$0xff]
      %v492 = vld [vmem:[%s408 + $0x268] sm:$0xff]
      %v493 = vld [vmem:[%s408 + $0x270] sm:$0xff]
      %v494 = vld [vmem:[%s408 + $0x278] sm:$0xff]
      %v495 = vld [vmem:[%s408 + $0x280] sm:$0xff]
      %v496 = vld [vmem:[%s408 + $0x288] sm:$0xff]
      %v497 = vld [vmem:[%s408 + $0x290] sm:$0xff]
      %v498 = vld [vmem:[%s408 + $0x298] sm:$0xff]
      %v499 = vld [vmem:[%s408 + $0x2a0] sm:$0xff]
      %v500 = vld [vmem:[%s408 + $0x2a8] sm:$0xff]
      %v501 = vld [vmem:[%s408 + $0x2b0] sm:$0xff]
      %v502 = vld [vmem:[%s408 + $0x2b8] sm:$0xff]
      %v503 = vld [vmem:[%s408 + $0x2c0] sm:$0xff]
      %v504 = vld [vmem:[%s408 + $0x2c8] sm:$0xff]
      %v505 = vld [vmem:[%s408 + $0x2d0] sm:$0x77]
      %v506 = vld [vmem:[%s408 + $0x2d8] sm:$0x77]
      %v507 = vld [vmem:[%s408 + $0x2e0] sm:$0x77]
      %v508 = vld [vmem:[%s408 + $0x2e8] sm:$0x77]
      %v509 = vld [vmem:[%s408 + $0x2f0] sm:$0x77]
      %v510 = vld [vmem:[%s408 + $0x2f8] sm:$0x77]
      %v511 = vld [vmem:[%s408 + $0x300] sm:$0x77]
      %v512 = vld [vmem:[%s408 + $0x308] sm:$0x77]
      %v513 = vld [vmem:[%s408 + $0x310] sm:$0x77]
      %v514 = vld [vmem:[%s408 + $0x318] sm:$0x77]
      %v515 = vld [vmem:[%s1] sm:$0xf]
      %v516 = vld [vmem:[%s1 + $0x4] sm:$0xf]
      %v517 = vld [vmem:[%s1 + $0x8] sm:$0xf]
      %v518 = vld [vmem:[%s1 + $0xc] sm:$0xf]
      %v519 = vld [vmem:[%s1 + $0x10] sm:$0xf]
      %v520 = vld [vmem:[%s1 + $0x14] sm:$0xf]
      %v521 = vld [vmem:[%s1 + $0x18] sm:$0xf]
      %v522 = vld [vmem:[%s1 + $0x1c] sm:$0xf]
      %v523 = vld [vmem:[%s1 + $0x20] sm:$0xf]
      %v524 = vld [vmem:[%s1 + $0x24] sm:$0xf]
      %v525 = vld [vmem:[%s1 + $0x28] sm:$0xf]
      %v526 = vld [vmem:[%s1 + $0x2c] sm:$0xf]
      %v527 = vld [vmem:[%s1 + $0x30] sm:$0xf]
      %v528 = vld [vmem:[%s1 + $0x34] sm:$0xf]
      %v529 = vld [vmem:[%s1 + $0x38] sm:$0xf]
      %v530 = vld [vmem:[%s1 + $0x3c] sm:$0xf]
      %v531 = vld [vmem:[%s1 + $0x40] sm:$0xf]
      %v532 = vld [vmem:[%s1 + $0x44] sm:$0xf]
      %v533 = vld [vmem:[%s1 + $0x48] sm:$0xf]
      %v534 = vld [vmem:[%s1 + $0x4c] sm:$0xf]
      %v535 = vld [vmem:[%s1 + $0x50] sm:$0xf]
      %v536 = vld [vmem:[%s1 + $0x54] sm:$0xf]
      %v537 = vld [vmem:[%s1 + $0x58] sm:$0xf]
      %v538 = vld [vmem:[%s1 + $0x5c] sm:$0xf]
      %v539 = vld [vmem:[%s1 + $0x60] sm:$0xf]
      %v540 = vld [vmem:[%s1 + $0x64] sm:$0xf]
      %v541 = vld [vmem:[%s1 + $0x68] sm:$0xf]
      %v542 = vld [vmem:[%s1 + $0x6c] sm:$0xf]
      %v543 = vld [vmem:[%s1 + $0x70] sm:$0xf]
      %v544 = vld [vmem:[%s1 + $0x74] sm:$0xf]
      %v545 = vld [vmem:[%s1 + $0x78] sm:$0xf]
      %v546 = vld [vmem:[%s1 + $0x7c] sm:$0xf]
      %v547 = vld [vmem:[%s1 + $0x80] sm:$0xf]
      %v548 = vld [vmem:[%s1 + $0x84] sm:$0xf]
      %v549 = vld [vmem:[%s1 + $0x88] sm:$0xf]
      %v550 = vld [vmem:[%s1 + $0x8c] sm:$0xf]
      %v551 = vld [vmem:[%s1 + $0x90] sm:$0xf]
      %v552 = vld [vmem:[%s1 + $0x94] sm:$0xf]
      %v553 = vld [vmem:[%s1 + $0x98] sm:$0xf]
      %v554 = vld [vmem:[%s1 + $0x9c] sm:$0xf]
      %v555 = vld [vmem:[%s1 + $0xa0] sm:$0xf]
      %v556 = vld [vmem:[%s1 + $0xa4] sm:$0xf]
      %v557 = vld [vmem:[%s1 + $0xa8] sm:$0xf]
      %v558 = vld [vmem:[%s1 + $0xac] sm:$0xf]
      %v559 = vld [vmem:[%s1 + $0xb0] sm:$0xf]
      %v560 = vld [vmem:[%s1 + $0xb4] sm:$0xf]
      %v561 = vld [vmem:[%s1 + $0xb8] sm:$0xf]
      %v562 = vld [vmem:[%s1 + $0xbc] sm:$0xf]
      %v563 = vld [vmem:[%s1 + $0xc0] sm:$0xf]
      %v564 = vld [vmem:[%s1 + $0xc4] sm:$0xf]
      %v565 = vld [vmem:[%s1 + $0xc8] sm:$0xf]
      %v566 = vld [vmem:[%s1 + $0xcc] sm:$0xf]
      %v567 = vld [vmem:[%s1 + $0xd0] sm:$0xf]
      %v568 = vld [vmem:[%s1 + $0xd4] sm:$0xf]
      %v569 = vld [vmem:[%s1 + $0xd8] sm:$0xf]
      %v570 = vld [vmem:[%s1 + $0xdc] sm:$0xf]
      %v571 = vld [vmem:[%s1 + $0xe0] sm:$0xf]
      %v572 = vld [vmem:[%s1 + $0xe4] sm:$0xf]
      %v573 = vld [vmem:[%s1 + $0xe8] sm:$0xf]
      %v574 = vld [vmem:[%s1 + $0xec] sm:$0xf]
      %v575 = vld [vmem:[%s1 + $0xf0] sm:$0xf]
      %v576 = vld [vmem:[%s1 + $0xf4] sm:$0xf]
      %v577 = vld [vmem:[%s1 + $0xf8] sm:$0xf]
      %v578 = vld [vmem:[%s1 + $0xfc] sm:$0xf]
      %v579 = vld [vmem:[%s1 + $0x100] sm:$0xf]
      %v580 = vld [vmem:[%s1 + $0x104] sm:$0xf]
      %v581 = vld [vmem:[%s1 + $0x108] sm:$0xf]
      %v582 = vld [vmem:[%s1 + $0x10c] sm:$0xf]
      %v583 = vld [vmem:[%s1 + $0x110] sm:$0xf]
      %v584 = vld [vmem:[%s1 + $0x114] sm:$0xf]
      %v585 = vld [vmem:[%s1 + $0x118] sm:$0xf]
      %v586 = vld [vmem:[%s1 + $0x11c] sm:$0xf]
      %v587 = vld [vmem:[%s1 + $0x120] sm:$0xf]
      %v588 = vld [vmem:[%s1 + $0x124] sm:$0xf]
      %v589 = vld [vmem:[%s1 + $0x128] sm:$0xf]
      %v590 = vld [vmem:[%s1 + $0x12c] sm:$0xf]
      %v591 = vld [vmem:[%s1 + $0x130] sm:$0xf]
      %v592 = vld [vmem:[%s1 + $0x134] sm:$0xf]
      %v593 = vld [vmem:[%s1 + $0x138] sm:$0xf]
      %v594 = vld [vmem:[%s1 + $0x13c] sm:$0xf]
      %v595 = vld [vmem:[%s1 + $0x140] sm:$0xf]
      %v596 = vld [vmem:[%s1 + $0x144] sm:$0xf]
      %v597 = vld [vmem:[%s1 + $0x148] sm:$0xf]
      %v598 = vld [vmem:[%s1 + $0x14c] sm:$0xf]
      %v599 = vld [vmem:[%s1 + $0x150] sm:$0xf]
      %v600 = vld [vmem:[%s1 + $0x154] sm:$0xf]
      %v601 = vld [vmem:[%s1 + $0x158] sm:$0xf]
      %v602 = vld [vmem:[%s1 + $0x15c] sm:$0xf]
      %v603 = vld [vmem:[%s1 + $0x160] sm:$0xf]
      %v604 = vld [vmem:[%s1 + $0x164] sm:$0xf]
      %v605 = vld [vmem:[%s1 + $0x168] sm:$0xf]
      %v606 = vld [vmem:[%s1 + $0x16c] sm:$0xf]
      %v607 = vld [vmem:[%s1 + $0x170] sm:$0xf]
      %v608 = vld [vmem:[%s1 + $0x174] sm:$0xf]
      %v609 = vld [vmem:[%s1 + $0x178] sm:$0xf]
      %v610 = vld [vmem:[%s1 + $0x17c] sm:$0xf]
      %v611 = vld [vmem:[%s1 + $0x180] sm:$0xf]
      %v612 = vld [vmem:[%s1 + $0x184] sm:$0xf]
      %v613 = vld [vmem:[%s1 + $0x188] sm:$0xf]
      %v614 = vld [vmem:[%s1 + $0x18c] sm:$0xf]
      %v615 = vld [vmem:[%s1 + $0x190] sm:$0xf]
      %v616 = vld [vmem:[%s1 + $0x194] sm:$0xf]
      %v617 = vld [vmem:[%s1 + $0x198] sm:$0xf]
      %v618 = vld [vmem:[%s1 + $0x19c] sm:$0xf]
      %v619 = vld [vmem:[%s1 + $0x1a0] sm:$0xf]
      %v620 = vld [vmem:[%s1 + $0x1a4] sm:$0xf]
      %v621 = vld [vmem:[%s1 + $0x1a8] sm:$0xf]
      %v622 = vld [vmem:[%s1 + $0x1ac] sm:$0xf]
      %v623 = vld [vmem:[%s1 + $0x1b0] sm:$0xf]
      %v624 = vld [vmem:[%s1 + $0x1b4] sm:$0xf]
      %v625 = vld [vmem:[%s1 + $0x1b8] sm:$0xf]
      %v626 = vld [vmem:[%s1 + $0x1bc] sm:$0xf]
      %v627 = vld [vmem:[%s1 + $0x1c0] sm:$0xf]
      %v628 = vld [vmem:[%s1 + $0x1c4] sm:$0xf]
      %v629 = vld [vmem:[%s1 + $0x1c8] sm:$0xf]
      %v630 = vld [vmem:[%s1 + $0x1cc] sm:$0xf]
      %v631 = vld [vmem:[%s1 + $0x1d0] sm:$0xf]
      %v632 = vld [vmem:[%s1 + $0x1d4] sm:$0xf]
      %v633 = vld [vmem:[%s1 + $0x1d8] sm:$0xf]
      %v634 = vld [vmem:[%s1 + $0x1dc] sm:$0xf]
      %v635 = vld [vmem:[%s1 + $0x1e0] sm:$0xf]
      %v636 = vld [vmem:[%s1 + $0x1e4] sm:$0xf]
      %v637 = vld [vmem:[%s1 + $0x1e8] sm:$0xf]
      %v638 = vld [vmem:[%s1 + $0x1ec] sm:$0xf]
      %v639 = vld [vmem:[%s1 + $0x1f0] sm:$0xf]
      %v640 = vld [vmem:[%s1 + $0x1f4] sm:$0xf]
      %v641 = vld [vmem:[%s1 + $0x1f8] sm:$0xf]
      %v642 = vld [vmem:[%s1 + $0x1fc] sm:$0xf]
      %v643 = vld [vmem:[%s1 + $0x200] sm:$0xf]
      %v644 = vld [vmem:[%s1 + $0x204] sm:$0xf]
      %v645 = vld [vmem:[%s1 + $0x208] sm:$0xf]
      %v646 = vld [vmem:[%s1 + $0x20c] sm:$0xf]
      %v647 = vld [vmem:[%s1 + $0x210] sm:$0xf]
      %v648 = vld [vmem:[%s1 + $0x214] sm:$0xf]
      %v649 = vld [vmem:[%s1 + $0x218] sm:$0xf]
      %v650 = vld [vmem:[%s1 + $0x21c] sm:$0xf]
      %v651 = vld [vmem:[%s1 + $0x220] sm:$0xf]
      %v652 = vld [vmem:[%s1 + $0x224] sm:$0xf]
      %v653 = vld [vmem:[%s1 + $0x228] sm:$0xf]
      %v654 = vld [vmem:[%s1 + $0x22c] sm:$0xf]
      %v655 = vld [vmem:[%s1 + $0x230] sm:$0xf]
      %v656 = vld [vmem:[%s1 + $0x234] sm:$0xf]
      %v657 = vld [vmem:[%s1 + $0x238] sm:$0xf]
      %v658 = vld [vmem:[%s1 + $0x23c] sm:$0xf]
      %v659 = vld [vmem:[%s1 + $0x240] sm:$0xf]
      %v660 = vld [vmem:[%s1 + $0x244] sm:$0xf]
      %v661 = vld [vmem:[%s1 + $0x248] sm:$0xf]
      %v662 = vld [vmem:[%s1 + $0x24c] sm:$0xf]
      %v663 = vld [vmem:[%s1 + $0x250] sm:$0xf]
      %v664 = vld [vmem:[%s1 + $0x254] sm:$0xf]
      %v665 = vld [vmem:[%s1 + $0x258] sm:$0xf]
      %v666 = vld [vmem:[%s1 + $0x25c] sm:$0xf]
      %v667 = vld [vmem:[%s1 + $0x260] sm:$0xf]
      %v668 = vld [vmem:[%s1 + $0x264] sm:$0xf]
      %v669 = vld [vmem:[%s1 + $0x268] sm:$0xf]
      %v670 = vld [vmem:[%s1 + $0x26c] sm:$0xf]
      %v671 = vld [vmem:[%s1 + $0x270] sm:$0xf]
      %v672 = vld [vmem:[%s1 + $0x274] sm:$0xf]
      %v673 = vld [vmem:[%s1 + $0x278] sm:$0xf]
      %v674 = vld [vmem:[%s1 + $0x27c] sm:$0xf]
      %v675 = vld [vmem:[%s1 + $0x280] sm:$0xf]
      %v676 = vld [vmem:[%s1 + $0x284] sm:$0xf]
      %v677 = vld [vmem:[%s1 + $0x288] sm:$0xf]
      %v678 = vld [vmem:[%s1 + $0x28c] sm:$0xf]
      %v679 = vld [vmem:[%s1 + $0x290] sm:$0xf]
      %v680 = vld [vmem:[%s1 + $0x294] sm:$0xf]
      %v681 = vld [vmem:[%s1 + $0x298] sm:$0xf]
      %v682 = vld [vmem:[%s1 + $0x29c] sm:$0xf]
      %v683 = vld [vmem:[%s1 + $0x2a0] sm:$0xf]
      %v684 = vld [vmem:[%s1 + $0x2a4] sm:$0xf]
      %v685 = vld [vmem:[%s1 + $0x2a8] sm:$0xf]
      %v686 = vld [vmem:[%s1 + $0x2ac] sm:$0xf]
      %v687 = vld [vmem:[%s1 + $0x2b0] sm:$0xf]
      %v688 = vld [vmem:[%s1 + $0x2b4] sm:$0xf]
      %v689 = vld [vmem:[%s1 + $0x2b8] sm:$0xf]
      %v690 = vld [vmem:[%s1 + $0x2bc] sm:$0xf]
      %v691 = vld [vmem:[%s1 + $0x2c0] sm:$0xf]
      %v692 = vld [vmem:[%s1 + $0x2c4] sm:$0xf]
      %v693 = vld [vmem:[%s1 + $0x2c8] sm:$0xf]
      %v694 = vld [vmem:[%s1 + $0x2cc] sm:$0xf]
      %v695 = vld [vmem:[%s1 + $0x2d0] sm:$0xf]
      %v696 = vld [vmem:[%s1 + $0x2d4] sm:$0xf]
      %v697 = vld [vmem:[%s1 + $0x2d8] sm:$0xf]
      %v698 = vld [vmem:[%s1 + $0x2dc] sm:$0xf]
      %v699 = vld [vmem:[%s1 + $0x2e0] sm:$0xf]
      %v700 = vld [vmem:[%s1 + $0x2e4] sm:$0xf]
      %v701 = vld [vmem:[%s1 + $0x2e8] sm:$0xf]
      %v702 = vld [vmem:[%s1 + $0x2ec] sm:$0xf]
      %v703 = vld [vmem:[%s1 + $0x2f0] sm:$0xf]
      %v704 = vld [vmem:[%s1 + $0x2f4] sm:$0xf]
      %v705 = vld [vmem:[%s1 + $0x2f8] sm:$0xf]
      %v706 = vld [vmem:[%s1 + $0x2fc] sm:$0xf]
      %v707 = vld [vmem:[%s1 + $0x300] sm:$0xf]
      %v708 = vld [vmem:[%s1 + $0x304] sm:$0xf]
      %v709 = vld [vmem:[%s1 + $0x308] sm:$0xf]
      %v710 = vld [vmem:[%s1 + $0x30c] sm:$0xf]
      %v711 = vld [vmem:[%s1 + $0x310] sm:$0xf]
      %v712 = vld [vmem:[%s1 + $0x314] sm:$0xf]
      %v713 = vld [vmem:[%s1 + $0x318] sm:$0xf]
      %v714 = vld [vmem:[%s1 + $0x31c] sm:$0xf]
      %v715 = vld [vmem:[%s1 + $0x320] sm:$0xf]
      %v716 = vld [vmem:[%s1 + $0x324] sm:$0xf]
      %v717 = vld [vmem:[%s1 + $0x328] sm:$0xf]
      %v718 = vld [vmem:[%s1 + $0x32c] sm:$0xf]
      %v719 = vld [vmem:[%s1 + $0x330] sm:$0xf]
      %v720 = vld [vmem:[%s1 + $0x334] sm:$0xf]
      %v721 = vld [vmem:[%s1 + $0x338] sm:$0xf]
      %v722 = vld [vmem:[%s1 + $0x33c] sm:$0xf]
      %v723 = vld [vmem:[%s1 + $0x340] sm:$0xf]
      %v724 = vld [vmem:[%s1 + $0x344] sm:$0xf]
      %v725 = vld [vmem:[%s1 + $0x348] sm:$0xf]
      %v726 = vld [vmem:[%s1 + $0x34c] sm:$0xf]
      %v727 = vld [vmem:[%s1 + $0x350] sm:$0xf]
      %v728 = vld [vmem:[%s1 + $0x354] sm:$0xf]
      %v729 = vld [vmem:[%s1 + $0x358] sm:$0xf]
      %v730 = vld [vmem:[%s1 + $0x35c] sm:$0xf]
      %v731 = vld [vmem:[%s1 + $0x360] sm:$0xf]
      %v732 = vld [vmem:[%s1 + $0x364] sm:$0xf]
      %v733 = vld [vmem:[%s1 + $0x368] sm:$0xf]
      %v734 = vld [vmem:[%s1 + $0x36c] sm:$0xf]
      %v735 = vld [vmem:[%s1 + $0x370] sm:$0xf]
      %v736 = vld [vmem:[%s1 + $0x374] sm:$0xf]
      %v737 = vld [vmem:[%s1 + $0x378] sm:$0xf]
      %v738 = vld [vmem:[%s1 + $0x37c] sm:$0xf]
      %v739 = vld [vmem:[%s1 + $0x380] sm:$0xf]
      %v740 = vld [vmem:[%s1 + $0x384] sm:$0xf]
      %v741 = vld [vmem:[%s1 + $0x388] sm:$0xf]
      %v742 = vld [vmem:[%s1 + $0x38c] sm:$0xf]
      %v743 = vld [vmem:[%s1 + $0x390] sm:$0xf]
      %v744 = vld [vmem:[%s1 + $0x394] sm:$0xf]
      %v745 = vld [vmem:[%s1 + $0x398] sm:$0xf]
      %v746 = vld [vmem:[%s1 + $0x39c] sm:$0xf]
      %v747 = vld [vmem:[%s1 + $0x3a0] sm:$0xf]
      %v748 = vld [vmem:[%s1 + $0x3a4] sm:$0xf]
      %v749 = vld [vmem:[%s1 + $0x3a8] sm:$0xf]
      %v750 = vld [vmem:[%s1 + $0x3ac] sm:$0xf]
      %v751 = vld [vmem:[%s1 + $0x3b0] sm:$0xf]
      %v752 = vld [vmem:[%s1 + $0x3b4] sm:$0xf]
      %v753 = vld [vmem:[%s1 + $0x3b8] sm:$0xf]
      %v754 = vld [vmem:[%s1 + $0x3bc] sm:$0xf]
      %v755 = vld [vmem:[%s1 + $0x3c0] sm:$0xf]
      %v756 = vld [vmem:[%s1 + $0x3c4] sm:$0xf]
      %v757 = vld [vmem:[%s1 + $0x3c8] sm:$0xf]
      %v758 = vld [vmem:[%s1 + $0x3cc] sm:$0xf]
      %v759 = vld [vmem:[%s1 + $0x3d0] sm:$0xf]
      %v760 = vld [vmem:[%s1 + $0x3d4] sm:$0xf]
      %v761 = vld [vmem:[%s1 + $0x3d8] sm:$0xf]
      %v762 = vld [vmem:[%s1 + $0x3dc] sm:$0xf]
      %v763 = vld [vmem:[%s1 + $0x3e0] sm:$0xf]
      %v764 = vld [vmem:[%s1 + $0x3e4] sm:$0xf]
      %v765 = vld [vmem:[%s1 + $0x3e8] sm:$0xf]
      %v766 = vld [vmem:[%s1 + $0x3ec] sm:$0xf]
      %v767 = vld [vmem:[%s1 + $0x3f0] sm:$0xf]
      %v768 = vld [vmem:[%s1 + $0x3f4] sm:$0xf]
      %v769 = vld [vmem:[%s1 + $0x3f8] sm:$0xf]
      %v770 = vld [vmem:[%s1 + $0x3fc] sm:$0xf]
      %v771 = vld [vmem:[%s1 + $0x400] sm:$0xf]
      %v772 = vld [vmem:[%s1 + $0x404] sm:$0xf]
      %v773 = vld [vmem:[%s1 + $0x408] sm:$0xf]
      %v774 = vld [vmem:[%s1 + $0x40c] sm:$0xf]
      %v775 = vld [vmem:[%s1 + $0x410] sm:$0xf]
      %v776 = vld [vmem:[%s1 + $0x414] sm:$0xf]
      %v777 = vld [vmem:[%s1 + $0x418] sm:$0xf]
      %v778 = vld [vmem:[%s1 + $0x41c] sm:$0xf]
      %v779 = vld [vmem:[%s1 + $0x420] sm:$0xf]
      %v780 = vld [vmem:[%s1 + $0x424] sm:$0xf]
      %v781 = vld [vmem:[%s1 + $0x428] sm:$0xf]
      %v782 = vld [vmem:[%s1 + $0x42c] sm:$0xf]
      %v783 = vld [vmem:[%s1 + $0x430] sm:$0xf]
      %v784 = vld [vmem:[%s1 + $0x434] sm:$0xf]
      %v785 = vld [vmem:[%s1 + $0x438] sm:$0xf]
      %v786 = vld [vmem:[%s1 + $0x43c] sm:$0xf]
      %v787 = vld [vmem:[%s1 + $0x440] sm:$0xf]
      %v788 = vld [vmem:[%s1 + $0x444] sm:$0xf]
      %v789 = vld [vmem:[%s1 + $0x448] sm:$0xf]
      %v790 = vld [vmem:[%s1 + $0x44c] sm:$0xf]
      %v791 = vld [vmem:[%s1 + $0x450] sm:$0xf]
      %v792 = vld [vmem:[%s1 + $0x454] sm:$0xf]
      %v793 = vld [vmem:[%s1 + $0x458] sm:$0xf]
      %v794 = vld [vmem:[%s1 + $0x45c] sm:$0xf]
      %v795 = vld [vmem:[%s1 + $0x460] sm:$0xf]
      %v796 = vld [vmem:[%s1 + $0x464] sm:$0xf]
      %v797 = vld [vmem:[%s1 + $0x468] sm:$0xf]
      %v798 = vld [vmem:[%s1 + $0x46c] sm:$0xf]
      %v799 = vld [vmem:[%s1 + $0x470] sm:$0xf]
      %v800 = vld [vmem:[%s1 + $0x474] sm:$0xf]
      %v801 = vld [vmem:[%s1 + $0x478] sm:$0xf]
      %v802 = vld [vmem:[%s1 + $0x47c] sm:$0xf]
      %v803 = vld [vmem:[%s1 + $0x480] sm:$0xf]
      %v804 = vld [vmem:[%s1 + $0x484] sm:$0xf]
      %v805 = vld [vmem:[%s1 + $0x488] sm:$0xf]
      %v806 = vld [vmem:[%s1 + $0x48c] sm:$0xf]
      %v807 = vld [vmem:[%s1 + $0x490] sm:$0xf]
      %v808 = vld [vmem:[%s1 + $0x494] sm:$0xf]
      %v809 = vld [vmem:[%s1 + $0x498] sm:$0xf]
      %v810 = vld [vmem:[%s1 + $0x49c] sm:$0xf]
      %v811 = vld [vmem:[%s1 + $0x4a0] sm:$0xf]
      %v812 = vld [vmem:[%s1 + $0x4a4] sm:$0xf]
      %v813 = vld [vmem:[%s1 + $0x4a8] sm:$0xf]
      %v814 = vld [vmem:[%s1 + $0x4ac] sm:$0xf]
      %v815 = vld [vmem:[%s1 + $0x4b0] sm:$0xf]
      %v816 = vld [vmem:[%s1 + $0x4b4] sm:$0xf]
      %v817 = vld [vmem:[%s1 + $0x4b8] sm:$0xf]
      %v818 = vld [vmem:[%s1 + $0x4bc] sm:$0xf]
      %v819 = vld [vmem:[%s1 + $0x4c0] sm:$0xf]
      %v820 = vld [vmem:[%s1 + $0x4c4] sm:$0xf]
      %v821 = vld [vmem:[%s1 + $0x4c8] sm:$0xf]
      %v822 = vld [vmem:[%s1 + $0x4cc] sm:$0xf]
      %v823 = vld [vmem:[%s1 + $0x4d0] sm:$0xf]
      %v824 = vld [vmem:[%s1 + $0x4d4] sm:$0xf]
      %v825 = vld [vmem:[%s1 + $0x4d8] sm:$0xf]
      %v826 = vld [vmem:[%s1 + $0x4dc] sm:$0xf]
      %v827 = vld [vmem:[%s1 + $0x4e0] sm:$0xf]
      %v828 = vld [vmem:[%s1 + $0x4e4] sm:$0xf]
      %v829 = vld [vmem:[%s1 + $0x4e8] sm:$0xf]
      %v830 = vld [vmem:[%s1 + $0x4ec] sm:$0xf]
      %v831 = vld [vmem:[%s1 + $0x4f0] sm:$0xf]
      %v832 = vld [vmem:[%s1 + $0x4f4] sm:$0xf]
      %v833 = vld [vmem:[%s1 + $0x4f8] sm:$0xf]
      %v834 = vld [vmem:[%s1 + $0x4fc] sm:$0xf]
      %v835 = vld [vmem:[%s2] sm:$0x1]
      %v837 = vlaneseq
      %v838 = vshrl.u32 %v837, 7
      %v839 = vsub.s32 0, %v838
      %v840 = vrot.slane %v835, %v839
      %v942 = vunpack.c.l.b16 %v415
      %v943 = vunpack.c.h.b16 %v415
      %v944 = vunpack.c.l.b16 %v416
      %v945 = vunpack.c.h.b16 %v416
      %v946 = vunpack.c.l.b16 %v417
      %v947 = vunpack.c.h.b16 %v417
      %v948 = vunpack.c.l.b16 %v418
      %v949 = vunpack.c.h.b16 %v418
      %v950 = vunpack.c.l.b16 %v419
      %v951 = vunpack.c.h.b16 %v419
      %v952 = vunpack.c.l.b16 %v420
      %v953 = vunpack.c.h.b16 %v420
      %v954 = vunpack.c.l.b16 %v421
      %v955 = vunpack.c.h.b16 %v421
      %v956 = vunpack.c.l.b16 %v422
      %v957 = vunpack.c.h.b16 %v422
      %v958 = vunpack.c.l.b16 %v423
      %v959 = vunpack.c.h.b16 %v423
      %v960 = vunpack.c.l.b16 %v424
      %v961 = vunpack.c.h.b16 %v424
      %v962 = vunpack.c.l.b16 %v425
      %v963 = vunpack.c.h.b16 %v425
      %v964 = vunpack.c.l.b16 %v426
      %v965 = vunpack.c.h.b16 %v426
      %v966 = vunpack.c.l.b16 %v427
      %v967 = vunpack.c.h.b16 %v427
      %v968 = vunpack.c.l.b16 %v428
      %v969 = vunpack.c.h.b16 %v428
      %v970 = vunpack.c.l.b16 %v429
      %v971 = vunpack.c.h.b16 %v429
      %v972 = vunpack.c.l.b16 %v430
      %v973 = vunpack.c.h.b16 %v430
      %v974 = vunpack.c.l.b16 %v431
      %v975 = vunpack.c.h.b16 %v431
      %v976 = vunpack.c.l.b16 %v432
      %v977 = vunpack.c.h.b16 %v432
      %v978 = vunpack.c.l.b16 %v433
      %v979 = vunpack.c.h.b16 %v433
      %v980 = vunpack.c.l.b16 %v434
      %v981 = vunpack.c.h.b16 %v434
      %v982 = vunpack.c.l.b16 %v435
      %v983 = vunpack.c.h.b16 %v435
      %v984 = vunpack.c.l.b16 %v436
      %v985 = vunpack.c.h.b16 %v436
      %v986 = vunpack.c.l.b16 %v437
      %v987 = vunpack.c.h.b16 %v437
      %v988 = vunpack.c.l.b16 %v438
      %v989 = vunpack.c.h.b16 %v438
      %v990 = vunpack.c.l.b16 %v439
      %v991 = vunpack.c.h.b16 %v439
      %v992 = vunpack.c.l.b16 %v440
      %v993 = vunpack.c.h.b16 %v440
      %v994 = vunpack.c.l.b16 %v441
      %v995 = vunpack.c.h.b16 %v441
      %v996 = vunpack.c.l.b16 %v442
      %v997 = vunpack.c.h.b16 %v442
      %v998 = vunpack.c.l.b16 %v443
      %v999 = vunpack.c.h.b16 %v443
      %v1000 = vunpack.c.l.b16 %v444
      %v1001 = vunpack.c.h.b16 %v444
      %v1002 = vunpack.c.l.b16 %v445
      %v1003 = vunpack.c.h.b16 %v445
      %v1004 = vunpack.c.l.b16 %v446
      %v1005 = vunpack.c.h.b16 %v446
      %v1006 = vunpack.c.l.b16 %v447
      %v1007 = vunpack.c.h.b16 %v447
      %v1008 = vunpack.c.l.b16 %v448
      %v1009 = vunpack.c.h.b16 %v448
      %v1010 = vunpack.c.l.b16 %v449
      %v1011 = vunpack.c.h.b16 %v449
      %v1012 = vunpack.c.l.b16 %v450
      %v1013 = vunpack.c.h.b16 %v450
      %v1014 = vunpack.c.l.b16 %v451
      %v1015 = vunpack.c.h.b16 %v451
      %v1016 = vunpack.c.l.b16 %v452
      %v1017 = vunpack.c.h.b16 %v452
      %v1018 = vunpack.c.l.b16 %v453
      %v1019 = vunpack.c.h.b16 %v453
      %v1020 = vunpack.c.l.b16 %v454
      %v1021 = vunpack.c.h.b16 %v454
      %v1022 = vunpack.c.l.b16 %v455
      %v1023 = vunpack.c.h.b16 %v455
      %v1024 = vunpack.c.l.b16 %v456
      %v1025 = vunpack.c.h.b16 %v456
      %v1026 = vunpack.c.l.b16 %v457
      %v1027 = vunpack.c.h.b16 %v457
      %v1028 = vunpack.c.l.b16 %v458
      %v1029 = vunpack.c.h.b16 %v458
      %v1030 = vunpack.c.l.b16 %v459
      %v1031 = vunpack.c.h.b16 %v459
      %v1032 = vunpack.c.l.b16 %v460
      %v1033 = vunpack.c.h.b16 %v460
      %v1034 = vunpack.c.l.b16 %v461
      %v1035 = vunpack.c.h.b16 %v461
      %v1036 = vunpack.c.l.b16 %v462
      %v1037 = vunpack.c.h.b16 %v462
      %v1038 = vunpack.c.l.b16 %v463
      %v1039 = vunpack.c.h.b16 %v463
      %v1040 = vunpack.c.l.b16 %v464
      %v1041 = vunpack.c.h.b16 %v464
      %v1042 = vunpack.c.l.b16 %v465
      %v1043 = vunpack.c.h.b16 %v465
      %v1044 = vunpack.c.l.b16 %v466
      %v1045 = vunpack.c.h.b16 %v466
      %v1046 = vunpack.c.l.b16 %v467
      %v1047 = vunpack.c.h.b16 %v467
      %v1048 = vunpack.c.l.b16 %v468
      %v1049 = vunpack.c.h.b16 %v468
      %v1050 = vunpack.c.l.b16 %v469
      %v1051 = vunpack.c.h.b16 %v469
      %v1052 = vunpack.c.l.b16 %v470
      %v1053 = vunpack.c.h.b16 %v470
      %v1054 = vunpack.c.l.b16 %v471
      %v1055 = vunpack.c.h.b16 %v471
      %v1056 = vunpack.c.l.b16 %v472
      %v1057 = vunpack.c.h.b16 %v472
      %v1058 = vunpack.c.l.b16 %v473
      %v1059 = vunpack.c.h.b16 %v473
      %v1060 = vunpack.c.l.b16 %v474
      %v1061 = vunpack.c.h.b16 %v474
      %v1062 = vunpack.c.l.b16 %v475
      %v1063 = vunpack.c.h.b16 %v475
      %v1064 = vunpack.c.l.b16 %v476
      %v1065 = vunpack.c.h.b16 %v476
      %v1066 = vunpack.c.l.b16 %v477
      %v1067 = vunpack.c.h.b16 %v477
      %v1068 = vunpack.c.l.b16 %v478
      %v1069 = vunpack.c.h.b16 %v478
      %v1070 = vunpack.c.l.b16 %v479
      %v1071 = vunpack.c.h.b16 %v479
      %v1072 = vunpack.c.l.b16 %v480
      %v1073 = vunpack.c.h.b16 %v480
      %v1074 = vunpack.c.l.b16 %v481
      %v1075 = vunpack.c.h.b16 %v481
      %v1076 = vunpack.c.l.b16 %v482
      %v1077 = vunpack.c.h.b16 %v482
      %v1078 = vunpack.c.l.b16 %v483
      %v1079 = vunpack.c.h.b16 %v483
      %v1080 = vunpack.c.l.b16 %v484
      %v1081 = vunpack.c.h.b16 %v484
      %v1082 = vunpack.c.l.b16 %v485
      %v1083 = vunpack.c.h.b16 %v485
      %v1084 = vunpack.c.l.b16 %v486
      %v1085 = vunpack.c.h.b16 %v486
      %v1086 = vunpack.c.l.b16 %v487
      %v1087 = vunpack.c.h.b16 %v487
      %v1088 = vunpack.c.l.b16 %v488
      %v1089 = vunpack.c.h.b16 %v488
      %v1090 = vunpack.c.l.b16 %v489
      %v1091 = vunpack.c.h.b16 %v489
      %v1092 = vunpack.c.l.b16 %v490
      %v1093 = vunpack.c.h.b16 %v490
      %v1094 = vunpack.c.l.b16 %v491
      %v1095 = vunpack.c.h.b16 %v491
      %v1096 = vunpack.c.l.b16 %v492
      %v1097 = vunpack.c.h.b16 %v492
      %v1098 = vunpack.c.l.b16 %v493
      %v1099 = vunpack.c.h.b16 %v493
      %v1100 = vunpack.c.l.b16 %v494
      %v1101 = vunpack.c.h.b16 %v494
      %v1102 = vunpack.c.l.b16 %v495
      %v1103 = vunpack.c.h.b16 %v495
      %v1104 = vunpack.c.l.b16 %v496
      %v1105 = vunpack.c.h.b16 %v496
      %v1106 = vunpack.c.l.b16 %v497
      %v1107 = vunpack.c.h.b16 %v497
      %v1108 = vunpack.c.l.b16 %v498
      %v1109 = vunpack.c.h.b16 %v498
      %v1110 = vunpack.c.l.b16 %v499
      %v1111 = vunpack.c.h.b16 %v499
      %v1112 = vunpack.c.l.b16 %v500
      %v1113 = vunpack.c.h.b16 %v500
      %v1114 = vunpack.c.l.b16 %v501
      %v1115 = vunpack.c.h.b16 %v501
      %v1116 = vunpack.c.l.b16 %v502
      %v1117 = vunpack.c.h.b16 %v502
      %v1118 = vunpack.c.l.b16 %v503
      %v1119 = vunpack.c.h.b16 %v503
      %v1120 = vunpack.c.l.b16 %v504
      %v1121 = vunpack.c.h.b16 %v504
      %v1122 = vunpack.c.l.b16 %v505
      %v1123 = vunpack.c.h.b16 %v505
      %v1124 = vunpack.c.l.b16 %v506
      %v1125 = vunpack.c.h.b16 %v506
      %v1126 = vunpack.c.l.b16 %v507
      %v1127 = vunpack.c.h.b16 %v507
      %v1128 = vunpack.c.l.b16 %v508
      %v1129 = vunpack.c.h.b16 %v508
      %v1130 = vunpack.c.l.b16 %v509
      %v1131 = vunpack.c.h.b16 %v509
      %v1132 = vunpack.c.l.b16 %v510
      %v1133 = vunpack.c.h.b16 %v510
      %v1134 = vunpack.c.l.b16 %v511
      %v1135 = vunpack.c.h.b16 %v511
      %v1136 = vunpack.c.l.b16 %v512
      %v1137 = vunpack.c.h.b16 %v512
      %v1138 = vunpack.c.l.b16 %v513
      %v1139 = vunpack.c.h.b16 %v513
      %v1140 = vunpack.c.l.b16 %v514
      %v1141 = vunpack.c.h.b16 %v514
      %v1142 = vpack.c.b16 %v962, %v942
      %v1143 = vpack.c.b16 %v963, %v943
      %v1144 = vpack.c.b16 %v964, %v944
      %v1145 = vpack.c.b16 %v965, %v945
      %v1146 = vpack.c.b16 %v966, %v946
      %v1147 = vpack.c.b16 %v967, %v947
      %v1148 = vpack.c.b16 %v968, %v948
      %v1149 = vpack.c.b16 %v969, %v949
      %v1150 = vpack.c.b16 %v970, %v950
      %v1151 = vpack.c.b16 %v971, %v951
      %v1152 = vpack.c.b16 %v972, %v952
      %v1153 = vpack.c.b16 %v973, %v953
      %v1154 = vpack.c.b16 %v974, %v954
      %v1155 = vpack.c.b16 %v975, %v955
      %v1156 = vpack.c.b16 %v976, %v956
      %v1157 = vpack.c.b16 %v977, %v957
      %v1158 = vpack.c.b16 %v978, %v958
      %v1159 = vpack.c.b16 %v979, %v959
      %v1160 = vpack.c.b16 %v980, %v960
      %v1161 = vpack.c.b16 %v981, %v961
      %v1162 = vpack.c.b16 %v1002, %v982
      %v1163 = vpack.c.b16 %v1003, %v983
      %v1164 = vpack.c.b16 %v1004, %v984
      %v1165 = vpack.c.b16 %v1005, %v985
      %v1166 = vpack.c.b16 %v1006, %v986
      %v1167 = vpack.c.b16 %v1007, %v987
      %v1168 = vpack.c.b16 %v1008, %v988
      %v1169 = vpack.c.b16 %v1009, %v989
      %v1170 = vpack.c.b16 %v1010, %v990
      %v1171 = vpack.c.b16 %v1011, %v991
      %v1172 = vpack.c.b16 %v1012, %v992
      %v1173 = vpack.c.b16 %v1013, %v993
      %v1174 = vpack.c.b16 %v1014, %v994
      %v1175 = vpack.c.b16 %v1015, %v995
      %v1176 = vpack.c.b16 %v1016, %v996
      %v1177 = vpack.c.b16 %v1017, %v997
      %v1178 = vpack.c.b16 %v1018, %v998
      %v1179 = vpack.c.b16 %v1019, %v999
      %v1180 = vpack.c.b16 %v1020, %v1000
      %v1181 = vpack.c.b16 %v1021, %v1001
      %v1182 = vpack.c.b16 %v1042, %v1022
      %v1183 = vpack.c.b16 %v1043, %v1023
      %v1184 = vpack.c.b16 %v1044, %v1024
      %v1185 = vpack.c.b16 %v1045, %v1025
      %v1186 = vpack.c.b16 %v1046, %v1026
      %v1187 = vpack.c.b16 %v1047, %v1027
      %v1188 = vpack.c.b16 %v1048, %v1028
      %v1189 = vpack.c.b16 %v1049, %v1029
      %v1190 = vpack.c.b16 %v1050, %v1030
      %v1191 = vpack.c.b16 %v1051, %v1031
      %v1192 = vpack.c.b16 %v1052, %v1032
      %v1193 = vpack.c.b16 %v1053, %v1033
      %v1194 = vpack.c.b16 %v1054, %v1034
      %v1195 = vpack.c.b16 %v1055, %v1035
      %v1196 = vpack.c.b16 %v1056, %v1036
      %v1197 = vpack.c.b16 %v1057, %v1037
      %v1198 = vpack.c.b16 %v1058, %v1038
      %v1199 = vpack.c.b16 %v1059, %v1039
      %v1200 = vpack.c.b16 %v1060, %v1040
      %v1201 = vpack.c.b16 %v1061, %v1041
      %v1202 = vpack.c.b16 %v1082, %v1062
      %v1203 = vpack.c.b16 %v1083, %v1063
      %v1204 = vpack.c.b16 %v1084, %v1064
      %v1205 = vpack.c.b16 %v1085, %v1065
      %v1206 = vpack.c.b16 %v1086, %v1066
      %v1207 = vpack.c.b16 %v1087, %v1067
      %v1208 = vpack.c.b16 %v1088, %v1068
      %v1209 = vpack.c.b16 %v1089, %v1069
      %v1210 = vpack.c.b16 %v1090, %v1070
      %v1211 = vpack.c.b16 %v1091, %v1071
      %v1212 = vpack.c.b16 %v1092, %v1072
      %v1213 = vpack.c.b16 %v1093, %v1073
      %v1214 = vpack.c.b16 %v1094, %v1074
      %v1215 = vpack.c.b16 %v1095, %v1075
      %v1216 = vpack.c.b16 %v1096, %v1076
      %v1217 = vpack.c.b16 %v1097, %v1077
      %v1218 = vpack.c.b16 %v1098, %v1078
      %v1219 = vpack.c.b16 %v1099, %v1079
      %v1220 = vpack.c.b16 %v1100, %v1080
      %v1221 = vpack.c.b16 %v1101, %v1081
      %v1222 = vpack.c.b16 %v1122, %v1102
      %v1223 = vpack.c.b16 %v1123, %v1103
      %v1224 = vpack.c.b16 %v1124, %v1104
      %v1225 = vpack.c.b16 %v1125, %v1105
      %v1226 = vpack.c.b16 %v1126, %v1106
      %v1227 = vpack.c.b16 %v1127, %v1107
      %v1228 = vpack.c.b16 %v1128, %v1108
      %v1229 = vpack.c.b16 %v1129, %v1109
      %v1230 = vpack.c.b16 %v1130, %v1110
      %v1231 = vpack.c.b16 %v1131, %v1111
      %v1232 = vpack.c.b16 %v1132, %v1112
      %v1233 = vpack.c.b16 %v1133, %v1113
      %v1234 = vpack.c.b16 %v1134, %v1114
      %v1235 = vpack.c.b16 %v1135, %v1115
      %v1236 = vpack.c.b16 %v1136, %v1116
      %v1237 = vpack.c.b16 %v1137, %v1117
      %v1238 = vpack.c.b16 %v1138, %v1118
      %v1239 = vpack.c.b16 %v1139, %v1119
      %v1240 = vpack.c.b16 %v1140, %v1120
      %v1241 = vpack.c.b16 %v1141, %v1121
      %v1662 = vunpack.c.l.b16 %v515
      %v1663 = vunpack.c.l.b16 %v516
      %v1664 = vunpack.c.l.b16 %v517
      %v1665 = vunpack.c.l.b16 %v518
      %v1666 = vunpack.c.l.b16 %v519
      %v1667 = vunpack.c.l.b16 %v520
      %v1668 = vunpack.c.l.b16 %v521
      %v1669 = vunpack.c.l.b16 %v522
      %v1670 = vunpack.c.l.b16 %v523
      %v1671 = vunpack.c.l.b16 %v524
      %v1672 = vunpack.c.l.b16 %v525
      %v1673 = vunpack.c.l.b16 %v526
      %v1674 = vunpack.c.l.b16 %v527
      %v1675 = vunpack.c.l.b16 %v528
      %v1676 = vunpack.c.l.b16 %v529
      %v1677 = vunpack.c.l.b16 %v530
      %v1678 = vunpack.c.l.b16 %v531
      %v1679 = vunpack.c.l.b16 %v532
      %v1680 = vunpack.c.l.b16 %v533
      %v1681 = vunpack.c.l.b16 %v534
      %v1682 = vunpack.c.l.b16 %v535
      %v1683 = vunpack.c.l.b16 %v536
      %v1684 = vunpack.c.l.b16 %v537
      %v1685 = vunpack.c.l.b16 %v538
      %v1686 = vunpack.c.l.b16 %v539
      %v1687 = vunpack.c.l.b16 %v540
      %v1688 = vunpack.c.l.b16 %v541
      %v1689 = vunpack.c.l.b16 %v542
      %v1690 = vunpack.c.l.b16 %v543
      %v1691 = vunpack.c.l.b16 %v544
      %v1692 = vunpack.c.l.b16 %v545
      %v1693 = vunpack.c.l.b16 %v546
      %v1694 = vunpack.c.l.b16 %v547
      %v1695 = vunpack.c.l.b16 %v548
      %v1696 = vunpack.c.l.b16 %v549
      %v1697 = vunpack.c.l.b16 %v550
      %v1698 = vunpack.c.l.b16 %v551
      %v1699 = vunpack.c.l.b16 %v552
      %v1700 = vunpack.c.l.b16 %v553
      %v1701 = vunpack.c.l.b16 %v554
      %v1702 = vunpack.c.l.b16 %v555
      %v1703 = vunpack.c.l.b16 %v556
      %v1704 = vunpack.c.l.b16 %v557
      %v1705 = vunpack.c.l.b16 %v558
      %v1706 = vunpack.c.l.b16 %v559
      %v1707 = vunpack.c.l.b16 %v560
      %v1708 = vunpack.c.l.b16 %v561
      %v1709 = vunpack.c.l.b16 %v562
      %v1710 = vunpack.c.l.b16 %v563
      %v1711 = vunpack.c.l.b16 %v564
      %v1712 = vunpack.c.l.b16 %v565
      %v1713 = vunpack.c.l.b16 %v566
      %v1714 = vunpack.c.l.b16 %v567
      %v1715 = vunpack.c.l.b16 %v568
      %v1716 = vunpack.c.l.b16 %v569
      %v1717 = vunpack.c.l.b16 %v570
      %v1718 = vunpack.c.l.b16 %v571
      %v1719 = vunpack.c.l.b16 %v572
      %v1720 = vunpack.c.l.b16 %v573
      %v1721 = vunpack.c.l.b16 %v574
      %v1722 = vunpack.c.l.b16 %v575
      %v1723 = vunpack.c.l.b16 %v576
      %v1724 = vunpack.c.l.b16 %v577
      %v1725 = vunpack.c.l.b16 %v578
      %v1726 = vunpack.c.l.b16 %v579
      %v1727 = vunpack.c.l.b16 %v580
      %v1728 = vunpack.c.l.b16 %v581
      %v1729 = vunpack.c.l.b16 %v582
      %v1730 = vunpack.c.l.b16 %v583
      %v1731 = vunpack.c.l.b16 %v584
      %v1732 = vunpack.c.l.b16 %v585
      %v1733 = vunpack.c.l.b16 %v586
      %v1734 = vunpack.c.l.b16 %v587
      %v1735 = vunpack.c.l.b16 %v588
      %v1736 = vunpack.c.l.b16 %v589
      %v1737 = vunpack.c.l.b16 %v590
      %v1738 = vunpack.c.l.b16 %v591
      %v1739 = vunpack.c.l.b16 %v592
      %v1740 = vunpack.c.l.b16 %v593
      %v1741 = vunpack.c.l.b16 %v594
      %v1742 = vunpack.c.l.b16 %v595
      %v1743 = vunpack.c.l.b16 %v596
      %v1744 = vunpack.c.l.b16 %v597
      %v1745 = vunpack.c.l.b16 %v598
      %v1746 = vunpack.c.l.b16 %v599
      %v1747 = vunpack.c.l.b16 %v600
      %v1748 = vunpack.c.l.b16 %v601
      %v1749 = vunpack.c.l.b16 %v602
      %v1750 = vunpack.c.l.b16 %v603
      %v1751 = vunpack.c.l.b16 %v604
      %v1752 = vunpack.c.l.b16 %v605
      %v1753 = vunpack.c.l.b16 %v606
      %v1754 = vunpack.c.l.b16 %v607
      %v1755 = vunpack.c.l.b16 %v608
      %v1756 = vunpack.c.l.b16 %v609
      %v1757 = vunpack.c.l.b16 %v610
      %v1758 = vunpack.c.l.b16 %v611
      %v1759 = vunpack.c.l.b16 %v612
      %v1760 = vunpack.c.l.b16 %v613
      %v1761 = vunpack.c.l.b16 %v614
      %v1762 = vunpack.c.l.b16 %v615
      %v1763 = vunpack.c.l.b16 %v616
      %v1764 = vunpack.c.l.b16 %v617
      %v1765 = vunpack.c.l.b16 %v618
      %v1766 = vunpack.c.l.b16 %v619
      %v1767 = vunpack.c.l.b16 %v620
      %v1768 = vunpack.c.l.b16 %v621
      %v1769 = vunpack.c.l.b16 %v622
      %v1770 = vunpack.c.l.b16 %v623
      %v1771 = vunpack.c.l.b16 %v624
      %v1772 = vunpack.c.l.b16 %v625
      %v1773 = vunpack.c.l.b16 %v626
      %v1774 = vunpack.c.l.b16 %v627
      %v1775 = vunpack.c.l.b16 %v628
      %v1776 = vunpack.c.l.b16 %v629
      %v1777 = vunpack.c.l.b16 %v630
      %v1778 = vunpack.c.l.b16 %v631
      %v1779 = vunpack.c.l.b16 %v632
      %v1780 = vunpack.c.l.b16 %v633
      %v1781 = vunpack.c.l.b16 %v634
      %v1782 = vunpack.c.l.b16 %v635
      %v1783 = vunpack.c.l.b16 %v636
      %v1784 = vunpack.c.l.b16 %v637
      %v1785 = vunpack.c.l.b16 %v638
      %v1786 = vunpack.c.l.b16 %v639
      %v1787 = vunpack.c.l.b16 %v640
      %v1788 = vunpack.c.l.b16 %v641
      %v1789 = vunpack.c.l.b16 %v642
      %v1790 = vunpack.c.l.b16 %v643
      %v1791 = vunpack.c.l.b16 %v644
      %v1792 = vunpack.c.l.b16 %v645
      %v1793 = vunpack.c.l.b16 %v646
      %v1794 = vunpack.c.l.b16 %v647
      %v1795 = vunpack.c.l.b16 %v648
      %v1796 = vunpack.c.l.b16 %v649
      %v1797 = vunpack.c.l.b16 %v650
      %v1798 = vunpack.c.l.b16 %v651
      %v1799 = vunpack.c.l.b16 %v652
      %v1800 = vunpack.c.l.b16 %v653
      %v1801 = vunpack.c.l.b16 %v654
      %v1802 = vunpack.c.l.b16 %v655
      %v1803 = vunpack.c.l.b16 %v656
      %v1804 = vunpack.c.l.b16 %v657
      %v1805 = vunpack.c.l.b16 %v658
      %v1806 = vunpack.c.l.b16 %v659
      %v1807 = vunpack.c.l.b16 %v660
      %v1808 = vunpack.c.l.b16 %v661
      %v1809 = vunpack.c.l.b16 %v662
      %v1810 = vunpack.c.l.b16 %v663
      %v1811 = vunpack.c.l.b16 %v664
      %v1812 = vunpack.c.l.b16 %v665
      %v1813 = vunpack.c.l.b16 %v666
      %v1814 = vunpack.c.l.b16 %v667
      %v1815 = vunpack.c.l.b16 %v668
      %v1816 = vunpack.c.l.b16 %v669
      %v1817 = vunpack.c.l.b16 %v670
      %v1818 = vunpack.c.l.b16 %v671
      %v1819 = vunpack.c.l.b16 %v672
      %v1820 = vunpack.c.l.b16 %v673
      %v1821 = vunpack.c.l.b16 %v674
      %v1822 = vunpack.c.l.b16 %v675
      %v1823 = vunpack.c.l.b16 %v676
      %v1824 = vunpack.c.l.b16 %v677
      %v1825 = vunpack.c.l.b16 %v678
      %v1826 = vunpack.c.l.b16 %v679
      %v1827 = vunpack.c.l.b16 %v680
      %v1828 = vunpack.c.l.b16 %v681
      %v1829 = vunpack.c.l.b16 %v682
      %v1830 = vunpack.c.l.b16 %v683
      %v1831 = vunpack.c.l.b16 %v684
      %v1832 = vunpack.c.l.b16 %v685
      %v1833 = vunpack.c.l.b16 %v686
      %v1834 = vunpack.c.l.b16 %v687
      %v1835 = vunpack.c.l.b16 %v688
      %v1836 = vunpack.c.l.b16 %v689
      %v1837 = vunpack.c.l.b16 %v690
      %v1838 = vunpack.c.l.b16 %v691
      %v1839 = vunpack.c.l.b16 %v692
      %v1840 = vunpack.c.l.b16 %v693
      %v1841 = vunpack.c.l.b16 %v694
      %v1842 = vunpack.c.l.b16 %v695
      %v1843 = vunpack.c.l.b16 %v696
      %v1844 = vunpack.c.l.b16 %v697
      %v1845 = vunpack.c.l.b16 %v698
      %v1846 = vunpack.c.l.b16 %v699
      %v1847 = vunpack.c.l.b16 %v700
      %v1848 = vunpack.c.l.b16 %v701
      %v1849 = vunpack.c.l.b16 %v702
      %v1850 = vunpack.c.l.b16 %v703
      %v1851 = vunpack.c.l.b16 %v704
      %v1852 = vunpack.c.l.b16 %v705
      %v1853 = vunpack.c.l.b16 %v706
      %v1854 = vunpack.c.l.b16 %v707
      %v1855 = vunpack.c.l.b16 %v708
      %v1856 = vunpack.c.l.b16 %v709
      %v1857 = vunpack.c.l.b16 %v710
      %v1858 = vunpack.c.l.b16 %v711
      %v1859 = vunpack.c.l.b16 %v712
      %v1860 = vunpack.c.l.b16 %v713
      %v1861 = vunpack.c.l.b16 %v714
      %v1862 = vunpack.c.l.b16 %v715
      %v1863 = vunpack.c.l.b16 %v716
      %v1864 = vunpack.c.l.b16 %v717
      %v1865 = vunpack.c.l.b16 %v718
      %v1866 = vunpack.c.l.b16 %v719
      %v1867 = vunpack.c.l.b16 %v720
      %v1868 = vunpack.c.l.b16 %v721
      %v1869 = vunpack.c.l.b16 %v722
      %v1870 = vunpack.c.l.b16 %v723
      %v1871 = vunpack.c.l.b16 %v724
      %v1872 = vunpack.c.l.b16 %v725
      %v1873 = vunpack.c.l.b16 %v726
      %v1874 = vunpack.c.l.b16 %v727
      %v1875 = vunpack.c.l.b16 %v728
      %v1876 = vunpack.c.l.b16 %v729
      %v1877 = vunpack.c.l.b16 %v730
      %v1878 = vunpack.c.l.b16 %v731
      %v1879 = vunpack.c.l.b16 %v732
      %v1880 = vunpack.c.l.b16 %v733
      %v1881 = vunpack.c.l.b16 %v734
      %v1882 = vunpack.c.l.b16 %v735
      %v1883 = vunpack.c.l.b16 %v736
      %v1884 = vunpack.c.l.b16 %v737
      %v1885 = vunpack.c.l.b16 %v738
      %v1886 = vunpack.c.l.b16 %v739
      %v1887 = vunpack.c.l.b16 %v740
      %v1888 = vunpack.c.l.b16 %v741
      %v1889 = vunpack.c.l.b16 %v742
      %v1890 = vunpack.c.l.b16 %v743
      %v1891 = vunpack.c.l.b16 %v744
      %v1892 = vunpack.c.l.b16 %v745
      %v1893 = vunpack.c.l.b16 %v746
      %v1894 = vunpack.c.l.b16 %v747
      %v1895 = vunpack.c.l.b16 %v748
      %v1896 = vunpack.c.l.b16 %v749
      %v1897 = vunpack.c.l.b16 %v750
      %v1898 = vunpack.c.l.b16 %v751
      %v1899 = vunpack.c.l.b16 %v752
      %v1900 = vunpack.c.l.b16 %v753
      %v1901 = vunpack.c.l.b16 %v754
      %v1902 = vunpack.c.l.b16 %v755
      %v1903 = vunpack.c.l.b16 %v756
      %v1904 = vunpack.c.l.b16 %v757
      %v1905 = vunpack.c.l.b16 %v758
      %v1906 = vunpack.c.l.b16 %v759
      %v1907 = vunpack.c.l.b16 %v760
      %v1908 = vunpack.c.l.b16 %v761
      %v1909 = vunpack.c.l.b16 %v762
      %v1910 = vunpack.c.l.b16 %v763
      %v1911 = vunpack.c.l.b16 %v764
      %v1912 = vunpack.c.l.b16 %v765
      %v1913 = vunpack.c.l.b16 %v766
      %v1914 = vunpack.c.l.b16 %v767
      %v1915 = vunpack.c.l.b16 %v768
      %v1916 = vunpack.c.l.b16 %v769
      %v1917 = vunpack.c.l.b16 %v770
      %v1918 = vunpack.c.l.b16 %v771
      %v1919 = vunpack.c.l.b16 %v772
      %v1920 = vunpack.c.l.b16 %v773
      %v1921 = vunpack.c.l.b16 %v774
      %v1922 = vunpack.c.l.b16 %v775
      %v1923 = vunpack.c.l.b16 %v776
      %v1924 = vunpack.c.l.b16 %v777
      %v1925 = vunpack.c.l.b16 %v778
      %v1926 = vunpack.c.l.b16 %v779
      %v1927 = vunpack.c.l.b16 %v780
      %v1928 = vunpack.c.l.b16 %v781
      %v1929 = vunpack.c.l.b16 %v782
      %v1930 = vunpack.c.l.b16 %v783
      %v1931 = vunpack.c.l.b16 %v784
      %v1932 = vunpack.c.l.b16 %v785
      %v1933 = vunpack.c.l.b16 %v786
      %v1934 = vunpack.c.l.b16 %v787
      %v1935 = vunpack.c.l.b16 %v788
      %v1936 = vunpack.c.l.b16 %v789
      %v1937 = vunpack.c.l.b16 %v790
      %v1938 = vunpack.c.l.b16 %v791
      %v1939 = vunpack.c.l.b16 %v792
      %v1940 = vunpack.c.l.b16 %v793
      %v1941 = vunpack.c.l.b16 %v794
      %v1942 = vunpack.c.l.b16 %v795
      %v1943 = vunpack.c.l.b16 %v796
      %v1944 = vunpack.c.l.b16 %v797
      %v1945 = vunpack.c.l.b16 %v798
      %v1946 = vunpack.c.l.b16 %v799
      %v1947 = vunpack.c.l.b16 %v800
      %v1948 = vunpack.c.l.b16 %v801
      %v1949 = vunpack.c.l.b16 %v802
      %v1950 = vunpack.c.l.b16 %v803
      %v1951 = vunpack.c.l.b16 %v804
      %v1952 = vunpack.c.l.b16 %v805
      %v1953 = vunpack.c.l.b16 %v806
      %v1954 = vunpack.c.l.b16 %v807
      %v1955 = vunpack.c.l.b16 %v808
      %v1956 = vunpack.c.l.b16 %v809
      %v1957 = vunpack.c.l.b16 %v810
      %v1958 = vunpack.c.l.b16 %v811
      %v1959 = vunpack.c.l.b16 %v812
      %v1960 = vunpack.c.l.b16 %v813
      %v1961 = vunpack.c.l.b16 %v814
      %v1962 = vunpack.c.l.b16 %v815
      %v1963 = vunpack.c.l.b16 %v816
      %v1964 = vunpack.c.l.b16 %v817
      %v1965 = vunpack.c.l.b16 %v818
      %v1966 = vunpack.c.l.b16 %v819
      %v1967 = vunpack.c.l.b16 %v820
      %v1968 = vunpack.c.l.b16 %v821
      %v1969 = vunpack.c.l.b16 %v822
      %v1970 = vunpack.c.l.b16 %v823
      %v1971 = vunpack.c.l.b16 %v824
      %v1972 = vunpack.c.l.b16 %v825
      %v1973 = vunpack.c.l.b16 %v826
      %v1974 = vunpack.c.l.b16 %v827
      %v1975 = vunpack.c.l.b16 %v828
      %v1976 = vunpack.c.l.b16 %v829
      %v1977 = vunpack.c.l.b16 %v830
      %v1978 = vunpack.c.l.b16 %v831
      %v1979 = vunpack.c.l.b16 %v832
      %v1980 = vunpack.c.l.b16 %v833
      %v1981 = vunpack.c.l.b16 %v834
      %v1982 = vpack.c.b16 %v1663, %v1662
      %v1983 = vpack.c.b16 %v1665, %v1664
      %v1984 = vpack.c.b16 %v1667, %v1666
      %v1985 = vpack.c.b16 %v1669, %v1668
      %v1986 = vpack.c.b16 %v1671, %v1670
      %v1987 = vpack.c.b16 %v1673, %v1672
      %v1988 = vpack.c.b16 %v1675, %v1674
      %v1989 = vpack.c.b16 %v1677, %v1676
      %v1990 = vpack.c.b16 %v1679, %v1678
      %v1991 = vpack.c.b16 %v1681, %v1680
      %v1992 = vpack.c.b16 %v1683, %v1682
      %v1993 = vpack.c.b16 %v1685, %v1684
      %v1994 = vpack.c.b16 %v1687, %v1686
      %v1995 = vpack.c.b16 %v1689, %v1688
      %v1996 = vpack.c.b16 %v1691, %v1690
      %v1997 = vpack.c.b16 %v1693, %v1692
      %v1998 = vpack.c.b16 %v1695, %v1694
      %v1999 = vpack.c.b16 %v1697, %v1696
      %v2000 = vpack.c.b16 %v1699, %v1698
      %v2001 = vpack.c.b16 %v1701, %v1700
      %v2002 = vpack.c.b16 %v1703, %v1702
      %v2003 = vpack.c.b16 %v1705, %v1704
      %v2004 = vpack.c.b16 %v1707, %v1706
      %v2005 = vpack.c.b16 %v1709, %v1708
      %v2006 = vpack.c.b16 %v1711, %v1710
      %v2007 = vpack.c.b16 %v1713, %v1712
      %v2008 = vpack.c.b16 %v1715, %v1714
      %v2009 = vpack.c.b16 %v1717, %v1716
      %v2010 = vpack.c.b16 %v1719, %v1718
      %v2011 = vpack.c.b16 %v1721, %v1720
      %v2012 = vpack.c.b16 %v1723, %v1722
      %v2013 = vpack.c.b16 %v1725, %v1724
      %v2014 = vpack.c.b16 %v1727, %v1726
      %v2015 = vpack.c.b16 %v1729, %v1728
      %v2016 = vpack.c.b16 %v1731, %v1730
      %v2017 = vpack.c.b16 %v1733, %v1732
      %v2018 = vpack.c.b16 %v1735, %v1734
      %v2019 = vpack.c.b16 %v1737, %v1736
      %v2020 = vpack.c.b16 %v1739, %v1738
      %v2021 = vpack.c.b16 %v1741, %v1740
      %v2022 = vpack.c.b16 %v1743, %v1742
      %v2023 = vpack.c.b16 %v1745, %v1744
      %v2024 = vpack.c.b16 %v1747, %v1746
      %v2025 = vpack.c.b16 %v1749, %v1748
      %v2026 = vpack.c.b16 %v1751, %v1750
      %v2027 = vpack.c.b16 %v1753, %v1752
      %v2028 = vpack.c.b16 %v1755, %v1754
      %v2029 = vpack.c.b16 %v1757, %v1756
      %v2030 = vpack.c.b16 %v1759, %v1758
      %v2031 = vpack.c.b16 %v1761, %v1760
      %v2032 = vpack.c.b16 %v1763, %v1762
      %v2033 = vpack.c.b16 %v1765, %v1764
      %v2034 = vpack.c.b16 %v1767, %v1766
      %v2035 = vpack.c.b16 %v1769, %v1768
      %v2036 = vpack.c.b16 %v1771, %v1770
      %v2037 = vpack.c.b16 %v1773, %v1772
      %v2038 = vpack.c.b16 %v1775, %v1774
      %v2039 = vpack.c.b16 %v1777, %v1776
      %v2040 = vpack.c.b16 %v1779, %v1778
      %v2041 = vpack.c.b16 %v1781, %v1780
      %v2042 = vpack.c.b16 %v1783, %v1782
      %v2043 = vpack.c.b16 %v1785, %v1784
      %v2044 = vpack.c.b16 %v1787, %v1786
      %v2045 = vpack.c.b16 %v1789, %v1788
      %v2046 = vpack.c.b16 %v1791, %v1790
      %v2047 = vpack.c.b16 %v1793, %v1792
      %v2048 = vpack.c.b16 %v1795, %v1794
      %v2049 = vpack.c.b16 %v1797, %v1796
      %v2050 = vpack.c.b16 %v1799, %v1798
      %v2051 = vpack.c.b16 %v1801, %v1800
      %v2052 = vpack.c.b16 %v1803, %v1802
      %v2053 = vpack.c.b16 %v1805, %v1804
      %v2054 = vpack.c.b16 %v1807, %v1806
      %v2055 = vpack.c.b16 %v1809, %v1808
      %v2056 = vpack.c.b16 %v1811, %v1810
      %v2057 = vpack.c.b16 %v1813, %v1812
      %v2058 = vpack.c.b16 %v1815, %v1814
      %v2059 = vpack.c.b16 %v1817, %v1816
      %v2060 = vpack.c.b16 %v1819, %v1818
      %v2061 = vpack.c.b16 %v1821, %v1820
      %v2062 = vpack.c.b16 %v1823, %v1822
      %v2063 = vpack.c.b16 %v1825, %v1824
      %v2064 = vpack.c.b16 %v1827, %v1826
      %v2065 = vpack.c.b16 %v1829, %v1828
      %v2066 = vpack.c.b16 %v1831, %v1830
      %v2067 = vpack.c.b16 %v1833, %v1832
      %v2068 = vpack.c.b16 %v1835, %v1834
      %v2069 = vpack.c.b16 %v1837, %v1836
      %v2070 = vpack.c.b16 %v1839, %v1838
      %v2071 = vpack.c.b16 %v1841, %v1840
      %v2072 = vpack.c.b16 %v1843, %v1842
      %v2073 = vpack.c.b16 %v1845, %v1844
      %v2074 = vpack.c.b16 %v1847, %v1846
      %v2075 = vpack.c.b16 %v1849, %v1848
      %v2076 = vpack.c.b16 %v1851, %v1850
      %v2077 = vpack.c.b16 %v1853, %v1852
      %v2078 = vpack.c.b16 %v1855, %v1854
      %v2079 = vpack.c.b16 %v1857, %v1856
      %v2080 = vpack.c.b16 %v1859, %v1858
      %v2081 = vpack.c.b16 %v1861, %v1860
      %v2082 = vpack.c.b16 %v1863, %v1862
      %v2083 = vpack.c.b16 %v1865, %v1864
      %v2084 = vpack.c.b16 %v1867, %v1866
      %v2085 = vpack.c.b16 %v1869, %v1868
      %v2086 = vpack.c.b16 %v1871, %v1870
      %v2087 = vpack.c.b16 %v1873, %v1872
      %v2088 = vpack.c.b16 %v1875, %v1874
      %v2089 = vpack.c.b16 %v1877, %v1876
      %v2090 = vpack.c.b16 %v1879, %v1878
      %v2091 = vpack.c.b16 %v1881, %v1880
      %v2092 = vpack.c.b16 %v1883, %v1882
      %v2093 = vpack.c.b16 %v1885, %v1884
      %v2094 = vpack.c.b16 %v1887, %v1886
      %v2095 = vpack.c.b16 %v1889, %v1888
      %v2096 = vpack.c.b16 %v1891, %v1890
      %v2097 = vpack.c.b16 %v1893, %v1892
      %v2098 = vpack.c.b16 %v1895, %v1894
      %v2099 = vpack.c.b16 %v1897, %v1896
      %v2100 = vpack.c.b16 %v1899, %v1898
      %v2101 = vpack.c.b16 %v1901, %v1900
      %v2102 = vpack.c.b16 %v1903, %v1902
      %v2103 = vpack.c.b16 %v1905, %v1904
      %v2104 = vpack.c.b16 %v1907, %v1906
      %v2105 = vpack.c.b16 %v1909, %v1908
      %v2106 = vpack.c.b16 %v1911, %v1910
      %v2107 = vpack.c.b16 %v1913, %v1912
      %v2108 = vpack.c.b16 %v1915, %v1914
      %v2109 = vpack.c.b16 %v1917, %v1916
      %v2110 = vpack.c.b16 %v1919, %v1918
      %v2111 = vpack.c.b16 %v1921, %v1920
      %v2112 = vpack.c.b16 %v1923, %v1922
      %v2113 = vpack.c.b16 %v1925, %v1924
      %v2114 = vpack.c.b16 %v1927, %v1926
      %v2115 = vpack.c.b16 %v1929, %v1928
      %v2116 = vpack.c.b16 %v1931, %v1930
      %v2117 = vpack.c.b16 %v1933, %v1932
      %v2118 = vpack.c.b16 %v1935, %v1934
      %v2119 = vpack.c.b16 %v1937, %v1936
      %v2120 = vpack.c.b16 %v1939, %v1938
      %v2121 = vpack.c.b16 %v1941, %v1940
      %v2122 = vpack.c.b16 %v1943, %v1942
      %v2123 = vpack.c.b16 %v1945, %v1944
      %v2124 = vpack.c.b16 %v1947, %v1946
      %v2125 = vpack.c.b16 %v1949, %v1948
      %v2126 = vpack.c.b16 %v1951, %v1950
      %v2127 = vpack.c.b16 %v1953, %v1952
      %v2128 = vpack.c.b16 %v1955, %v1954
      %v2129 = vpack.c.b16 %v1957, %v1956
      %v2130 = vpack.c.b16 %v1959, %v1958
      %v2131 = vpack.c.b16 %v1961, %v1960
      %v2132 = vpack.c.b16 %v1963, %v1962
      %v2133 = vpack.c.b16 %v1965, %v1964
      %v2134 = vpack.c.b16 %v1967, %v1966
      %v2135 = vpack.c.b16 %v1969, %v1968
      %v2136 = vpack.c.b16 %v1971, %v1970
      %v2137 = vpack.c.b16 %v1973, %v1972
      %v2138 = vpack.c.b16 %v1975, %v1974
      %v2139 = vpack.c.b16 %v1977, %v1976
      %v2140 = vpack.c.b16 %v1979, %v1978
      %v2141 = vpack.c.b16 %v1981, %v1980
      %2302 = vmatprep.subr.bf16.mxu0 0
      %2303 = vmatpush1.bf16.msra.mxu0 %v1982
      %2304 = vmatprep.subr.bf16.mxu0 0
      %2305 = vmatpush1.bf16.msra.mxu0 %v1983
      %2306 = vmatprep.subr.bf16.mxu0 0
      %2307 = vmatpush1.bf16.msra.mxu0 %v1984
      %2308 = vmatprep.subr.bf16.mxu0 0
      %2309 = vmatpush1.bf16.msra.mxu0 %v1985
      %2310 = vmatprep.subr.bf16.mxu0 0
      %2311 = vmatpush1.bf16.msra.mxu0 %v1986
      %2312 = vmatprep.subr.bf16.mxu0 0
      %2313 = vmatpush1.bf16.msra.mxu0 %v1987
      %2314 = vmatprep.subr.bf16.mxu0 0
      %2315 = vmatpush1.bf16.msra.mxu0 %v1988
      %2316 = vmatprep.subr.bf16.mxu0 0
      %2317 = vmatpush1.bf16.msra.mxu0 %v1989
      %2318 = vmatprep.subr.bf16.mxu0 0
      %2319 = vmatpush1.bf16.msra.mxu0 %v1990
      %2320 = vmatprep.subr.bf16.mxu0 0
      %2321 = vmatpush1.bf16.msra.mxu0 %v1991
      %2322 = vmatprep.subr.bf16.mxu0 0
      %2323 = vmatpush1.bf16.msra.mxu0 %v1992
      %2324 = vmatprep.subr.bf16.mxu0 0
      %2325 = vmatpush1.bf16.msra.mxu0 %v1993
      %2326 = vmatprep.subr.bf16.mxu0 0
      %2327 = vmatpush1.bf16.msra.mxu0 %v1994
      %2328 = vmatprep.subr.bf16.mxu0 0
      %2329 = vmatpush1.bf16.msra.mxu0 %v1995
      %2330 = vmatprep.subr.bf16.mxu0 0
      %2331 = vmatpush1.bf16.msra.mxu0 %v1996
      %2332 = vmatprep.subr.bf16.mxu0 0
      %2333 = vmatpush1.bf16.msra.mxu0 %v1997
      %2334 = vmatprep.mubr.bf16.mxu0 %v1143
      %2335 = vmatmul.mubr.bf16.gmra.mrb[0].mxu0 %v1142
      %v2336 = vpop.f32.mrb[0].mxu0
      %v2337 = vadd.f32 %v840, %v2336
      %v2338 = vpop.f32.mrb[0].mxu0
      %v2339 = vpop.f32.mrb[0].mxu0
      %v2340 = vadd.f32 %v840, %v2339
      %v2341 = vpop.f32.mrb[0].mxu0
      %2342 = vmatprep.mubr.bf16.mxu0 %v1163
      %2343 = vmatmul.mubr.bf16.gmra.mrb[0].mxu0 %v1162
      %v2344 = vpop.f32.mrb[0].mxu0
      %v2345 = vadd.f32 %v840, %v2344
      %v2346 = vpop.f32.mrb[0].mxu0
      %v2347 = vpop.f32.mrb[0].mxu0
      %v2348 = vadd.f32 %v840, %v2347
      %v2349 = vpop.f32.mrb[0].mxu0
      %2350 = vmatprep.mubr.bf16.mxu0 %v1183
      %2351 = vmatmul.mubr.bf16.gmra.mrb[0].mxu0 %v1182
      %v2352 = vpop.f32.mrb[0].mxu0
      %v2353 = vadd.f32 %v840, %v2352
      %v2354 = vpop.f32.mrb[0].mxu0
      %v2355 = vpop.f32.mrb[0].mxu0
      %v2356 = vadd.f32 %v840, %v2355
      %v2357 = vpop.f32.mrb[0].mxu0
      %2358 = vmatprep.mubr.bf16.mxu0 %v1203
      %2359 = vmatmul.mubr.bf16.gmra.mrb[0].mxu0 %v1202
      %v2360 = vpop.f32.mrb[0].mxu0
      %v2361 = vadd.f32 %v840, %v2360
      %v2362 = vpop.f32.mrb[0].mxu0
      %v2363 = vpop.f32.mrb[0].mxu0
      %v2364 = vadd.f32 %v840, %v2363
      %v2365 = vpop.f32.mrb[0].mxu0
      %2366 = vmatprep.mubr.bf16.mxu0 %v1223
      %2367 = vmatmul.mubr.bf16.gmra.mrb[0].mxu0 %v1222
      %v2368 = vpop.f32.mrb[0].mxu0
      %v2369 = vadd.f32 %v840, %v2368
      %v2370 = vpop.f32.mrb[0].mxu0
      %v2371 = vpop.f32.mrb[0].mxu0
      %v2372 = vadd.f32 %v840, %v2371
      %v2373 = vpop.f32.mrb[0].mxu0
      %2374 = vdwg.mxu0
      %2375 = vmatprep.subr.bf16.mxu0 0
      %2376 = vmatpush1.bf16.msra.mxu0 %v1998
      %2377 = vmatprep.subr.bf16.mxu0 0
      %2378 = vmatpush1.bf16.msra.mxu0 %v1999
      %2379 = vmatprep.subr.bf16.mxu0 0
      %2380 = vmatpush1.bf16.msra.mxu0 %v2000
      %2381 = vmatprep.subr.bf16.mxu0 0
      %2382 = vmatpush1.bf16.msra.mxu0 %v2001
      %2383 = vmatprep.subr.bf16.mxu0 0
      %2384 = vmatpush1.bf16.msra.mxu0 %v2002
      %2385 = vmatprep.subr.bf16.mxu0 0
      %2386 = vmatpush1.bf16.msra.mxu0 %v2003
      %2387 = vmatprep.subr.bf16.mxu0 0
      %2388 = vmatpush1.bf16.msra.mxu0 %v2004
      %2389 = vmatprep.subr.bf16.mxu0 0
      %2390 = vmatpush1.bf16.msra.mxu0 %v2005
      %2391 = vmatprep.subr.bf16.mxu0 0
      %2392 = vmatpush1.bf16.msra.mxu0 %v2006
      %2393 = vmatprep.subr.bf16.mxu0 0
      %2394 = vmatpush1.bf16.msra.mxu0 %v2007
      %2395 = vmatprep.subr.bf16.mxu0 0
      %2396 = vmatpush1.bf16.msra.mxu0 %v2008
      %2397 = vmatprep.subr.bf16.mxu0 0
      %2398 = vmatpush1.bf16.msra.mxu0 %v2009
      %2399 = vmatprep.subr.bf16.mxu0 0
      %2400 = vmatpush1.bf16.msra.mxu0 %v2010
      %2401 = vmatprep.subr.bf16.mxu0 0
      %2402 = vmatpush1.bf16.msra.mxu0 %v2011
      %2403 = vmatprep.subr.bf16.mxu0 0
      %2404 = vmatpush1.bf16.msra.mxu0 %v2012
      %2405 = vmatprep.subr.bf16.mxu0 0
      %2406 = vmatpush1.bf16.msra.mxu0 %v2013
      %2407 = vmatprep.mubr.bf16.mxu0 %v1145
      %2408 = vmatmul.mubr.bf16.gmra.mrb[0].mxu0 %v1144
      %v2409 = vpop.f32.mrb[0].mxu0
      %v2410 = vadd.f32 %v2337, %v2409
      %v2411 = vpop.f32.mrb[0].mxu0
      %v2412 = vpop.f32.mrb[0].mxu0
      %v2413 = vadd.f32 %v2340, %v2412
      %v2414 = vpop.f32.mrb[0].mxu0
      %2415 = vmatprep.mubr.bf16.mxu0 %v1165
      %2416 = vmatmul.mubr.bf16.gmra.mrb[0].mxu0 %v1164
      %v2417 = vpop.f32.mrb[0].mxu0
      %v2418 = vadd.f32 %v2345, %v2417
      %v2419 = vpop.f32.mrb[0].mxu0
      %v2420 = vpop.f32.mrb[0].mxu0
      %v2421 = vadd.f32 %v2348, %v2420
      %v2422 = vpop.f32.mrb[0].mxu0
      %2423 = vmatprep.mubr.bf16.mxu0 %v1185
      %2424 = vmatmul.mubr.bf16.gmra.mrb[0].mxu0 %v1184
      %v2425 = vpop.f32.mrb[0].mxu0
      %v2426 = vadd.f32 %v2353, %v2425
      %v2427 = vpop.f32.mrb[0].mxu0
      %v2428 = vpop.f32.mrb[0].mxu0
      %v2429 = vadd.f32 %v2356, %v2428
      %v2430 = vpop.f32.mrb[0].mxu0
      %2431 = vmatprep.mubr.bf16.mxu0 %v1205
      %2432 = vmatmul.mubr.bf16.gmra.mrb[0].mxu0 %v1204
      %v2433 = vpop.f32.mrb[0].mxu0
      %v2434 = vadd.f32 %v2361, %v2433
      %v2435 = vpop.f32.mrb[0].mxu0
      %v2436 = vpop.f32.mrb[0].mxu0
      %v2437 = vadd.f32 %v2364, %v2436
      %v2438 = vpop.f32.mrb[0].mxu0
      %2439 = vmatprep.mubr.bf16.mxu0 %v1225
      %2440 = vmatmul.mubr.bf16.gmra.mrb[0].mxu0 %v1224
      %v2441 = vpop.f32.mrb[0].mxu0
      %v2442 = vadd.f32 %v2369, %v2441
      %v2443 = vpop.f32.mrb[0].mxu0
      %v2444 = vpop.f32.mrb[0].mxu0
      %v2445 = vadd.f32 %v2372, %v2444
      %v2446 = vpop.f32.mrb[0].mxu0
      %2447 = vdwg.mxu0
      %2448 = vmatprep.subr.bf16.mxu0 0
      %2449 = vmatpush1.bf16.msra.mxu0 %v2014
      %2450 = vmatprep.subr.bf16.mxu0 0
      %2451 = vmatpush1.bf16.msra.mxu0 %v2015
      %2452 = vmatprep.subr.bf16.mxu0 0
      %2453 = vmatpush1.bf16.msra.mxu0 %v2016
      %2454 = vmatprep.subr.bf16.mxu0 0
      %2455 = vmatpush1.bf16.msra.mxu0 %v2017
      %2456 = vmatprep.subr.bf16.mxu0 0
      %2457 = vmatpush1.bf16.msra.mxu0 %v2018
      %2458 = vmatprep.subr.bf16.mxu0 0
      %2459 = vmatpush1.bf16.msra.mxu0 %v2019
      %2460 = vmatprep.subr.bf16.mxu0 0
      %2461 = vmatpush1.bf16.msra.mxu0 %v2020
      %2462 = vmatprep.subr.bf16.mxu0 0
      %2463 = vmatpush1.bf16.msra.mxu0 %v2021
      %2464 = vmatprep.subr.bf16.mxu0 0
      %2465 = vmatpush1.bf16.msra.mxu0 %v2022
      %2466 = vmatprep.subr.bf16.mxu0 0
      %2467 = vmatpush1.bf16.msra.mxu0 %v2023
      %2468 = vmatprep.subr.bf16.mxu0 0
      %2469 = vmatpush1.bf16.msra.mxu0 %v2024
      %2470 = vmatprep.subr.bf16.mxu0 0
      %2471 = vmatpush1.bf16.msra.mxu0 %v2025
      %2472 = vmatprep.subr.bf16.mxu0 0
      %2473 = vmatpush1.bf16.msra.mxu0 %v2026
      %2474 = vmatprep.subr.bf16.mxu0 0
      %2475 = vmatpush1.bf16.msra.mxu0 %v2027
      %2476 = vmatprep.subr.bf16.mxu0 0
      %2477 = vmatpush1.bf16.msra.mxu0 %v2028
      %2478 = vmatprep.subr.bf16.mxu0 0
      %2479 = vmatpush1.bf16.msra.mxu0 %v2029
      %2480 = vmatprep.mubr.bf16.mxu0 %v1147
      %2481 = vmatmul.mubr.bf16.gmra.mrb[0].mxu0 %v1146
      %v2482 = vpop.f32.mrb[0].mxu0
      %v2483 = vadd.f32 %v2410, %v2482
      %v2484 = vpop.f32.mrb[0].mxu0
      %v2485 = vpop.f32.mrb[0].mxu0
      %v2486 = vadd.f32 %v2413, %v2485
      %v2487 = vpop.f32.mrb[0].mxu0
      %2488 = vmatprep.mubr.bf16.mxu0 %v1167
      %2489 = vmatmul.mubr.bf16.gmra.mrb[0].mxu0 %v1166
      %v2490 = vpop.f32.mrb[0].mxu0
      %v2491 = vadd.f32 %v2418, %v2490
      %v2492 = vpop.f32.mrb[0].mxu0
      %v2493 = vpop.f32.mrb[0].mxu0
      %v2494 = vadd.f32 %v2421, %v2493
      %v2495 = vpop.f32.mrb[0].mxu0
      %2496 = vmatprep.mubr.bf16.mxu0 %v1187
      %2497 = vmatmul.mubr.bf16.gmra.mrb[0].mxu0 %v1186
      %v2498 = vpop.f32.mrb[0].mxu0
      %v2499 = vadd.f32 %v2426, %v2498
      %v2500 = vpop.f32.mrb[0].mxu0
      %v2501 = vpop.f32.mrb[0].mxu0
      %v2502 = vadd.f32 %v2429, %v2501
      %v2503 = vpop.f32.mrb[0].mxu0
      %2504 = vmatprep.mubr.bf16.mxu0 %v1207
      %2505 = vmatmul.mubr.bf16.gmra.mrb[0].mxu0 %v1206
      %v2506 = vpop.f32.mrb[0].mxu0
      %v2507 = vadd.f32 %v2434, %v2506
      %v2508 = vpop.f32.mrb[0].mxu0
      %v2509 = vpop.f32.mrb[0].mxu0
      %v2510 = vadd.f32 %v2437, %v2509
      %v2511 = vpop.f32.mrb[0].mxu0
      %2512 = vmatprep.mubr.bf16.mxu0 %v1227
      %2513 = vmatmul.mubr.bf16.gmra.mrb[0].mxu0 %v1226
      %v2514 = vpop.f32.mrb[0].mxu0
      %v2515 = vadd.f32 %v2442, %v2514
      %v2516 = vpop.f32.mrb[0].mxu0
      %v2517 = vpop.f32.mrb[0].mxu0
      %v2518 = vadd.f32 %v2445, %v2517
      %v2519 = vpop.f32.mrb[0].mxu0
      %2520 = vdwg.mxu0
      %2521 = vmatprep.subr.bf16.mxu0 0
      %2522 = vmatpush1.bf16.msra.mxu0 %v2030
      %2523 = vmatprep.subr.bf16.mxu0 0
      %2524 = vmatpush1.bf16.msra.mxu0 %v2031
      %2525 = vmatprep.subr.bf16.mxu0 0
      %2526 = vmatpush1.bf16.msra.mxu0 %v2032
      %2527 = vmatprep.subr.bf16.mxu0 0
      %2528 = vmatpush1.bf16.msra.mxu0 %v2033
      %2529 = vmatprep.subr.bf16.mxu0 0
      %2530 = vmatpush1.bf16.msra.mxu0 %v2034
      %2531 = vmatprep.subr.bf16.mxu0 0
      %2532 = vmatpush1.bf16.msra.mxu0 %v2035
      %2533 = vmatprep.subr.bf16.mxu0 0
      %2534 = vmatpush1.bf16.msra.mxu0 %v2036
      %2535 = vmatprep.subr.bf16.mxu0 0
      %2536 = vmatpush1.bf16.msra.mxu0 %v2037
      %2537 = vmatprep.subr.bf16.mxu0 0
      %2538 = vmatpush1.bf16.msra.mxu0 %v2038
      %2539 = vmatprep.subr.bf16.mxu0 0
      %2540 = vmatpush1.bf16.msra.mxu0 %v2039
      %2541 = vmatprep.subr.bf16.mxu0 0
      %2542 = vmatpush1.bf16.msra.mxu0 %v2040
      %2543 = vmatprep.subr.bf16.mxu0 0
      %2544 = vmatpush1.bf16.msra.mxu0 %v2041
      %2545 = vmatprep.subr.bf16.mxu0 0
      %2546 = vmatpush1.bf16.msra.mxu0 %v2042
      %2547 = vmatprep.subr.bf16.mxu0 0
      %2548 = vmatpush1.bf16.msra.mxu0 %v2043
      %2549 = vmatprep.subr.bf16.mxu0 0
      %2550 = vmatpush1.bf16.msra.mxu0 %v2044
      %2551 = vmatprep.subr.bf16.mxu0 0
      %2552 = vmatpush1.bf16.msra.mxu0 %v2045
      %2553 = vmatprep.mubr.bf16.mxu0 %v1149
      %2554 = vmatmul.mubr.bf16.gmra.mrb[0].mxu0 %v1148
      %v2555 = vpop.f32.mrb[0].mxu0
      %v2556 = vadd.f32 %v2483, %v2555
      %v2557 = vpop.f32.mrb[0].mxu0
      %v2558 = vpop.f32.mrb[0].mxu0
      %v2559 = vadd.f32 %v2486, %v2558
      %v2560 = vpop.f32.mrb[0].mxu0
      %2561 = vmatprep.mubr.bf16.mxu0 %v1169
      %2562 = vmatmul.mubr.bf16.gmra.mrb[0].mxu0 %v1168
      %v2563 = vpop.f32.mrb[0].mxu0
      %v2564 = vadd.f32 %v2491, %v2563
      %v2565 = vpop.f32.mrb[0].mxu0
      %v2566 = vpop.f32.mrb[0].mxu0
      %v2567 = vadd.f32 %v2494, %v2566
      %v2568 = vpop.f32.mrb[0].mxu0
      %2569 = vmatprep.mubr.bf16.mxu0 %v1189
      %2570 = vmatmul.mubr.bf16.gmra.mrb[0].mxu0 %v1188
      %v2571 = vpop.f32.mrb[0].mxu0
      %v2572 = vadd.f32 %v2499, %v2571
      %v2573 = vpop.f32.mrb[0].mxu0
      %v2574 = vpop.f32.mrb[0].mxu0
      %v2575 = vadd.f32 %v2502, %v2574
      %v2576 = vpop.f32.mrb[0].mxu0
      %2577 = vmatprep.mubr.bf16.mxu0 %v1209
      %2578 = vmatmul.mubr.bf16.gmra.mrb[0].mxu0 %v1208
      %v2579 = vpop.f32.mrb[0].mxu0
      %v2580 = vadd.f32 %v2507, %v2579
      %v2581 = vpop.f32.mrb[0].mxu0
      %v2582 = vpop.f32.mrb[0].mxu0
      %v2583 = vadd.f32 %v2510, %v2582
      %v2584 = vpop.f32.mrb[0].mxu0
      %2585 = vmatprep.mubr.bf16.mxu0 %v1229
      %2586 = vmatmul.mubr.bf16.gmra.mrb[0].mxu0 %v1228
      %v2587 = vpop.f32.mrb[0].mxu0
      %v2588 = vadd.f32 %v2515, %v2587
      %v2589 = vpop.f32.mrb[0].mxu0
      %v2590 = vpop.f32.mrb[0].mxu0
      %v2591 = vadd.f32 %v2518, %v2590
      %v2592 = vpop.f32.mrb[0].mxu0
      %2593 = vdwg.mxu0
      %2594 = vmatprep.subr.bf16.mxu0 0
      %2595 = vmatpush1.bf16.msra.mxu0 %v2046
      %2596 = vmatprep.subr.bf16.mxu0 0
      %2597 = vmatpush1.bf16.msra.mxu0 %v2047
      %2598 = vmatprep.subr.bf16.mxu0 0
      %2599 = vmatpush1.bf16.msra.mxu0 %v2048
      %2600 = vmatprep.subr.bf16.mxu0 0
      %2601 = vmatpush1.bf16.msra.mxu0 %v2049
      %2602 = vmatprep.subr.bf16.mxu0 0
      %2603 = vmatpush1.bf16.msra.mxu0 %v2050
      %2604 = vmatprep.subr.bf16.mxu0 0
      %2605 = vmatpush1.bf16.msra.mxu0 %v2051
      %2606 = vmatprep.subr.bf16.mxu0 0
      %2607 = vmatpush1.bf16.msra.mxu0 %v2052
      %2608 = vmatprep.subr.bf16.mxu0 0
      %2609 = vmatpush1.bf16.msra.mxu0 %v2053
      %2610 = vmatprep.subr.bf16.mxu0 0
      %2611 = vmatpush1.bf16.msra.mxu0 %v2054
      %2612 = vmatprep.subr.bf16.mxu0 0
      %2613 = vmatpush1.bf16.msra.mxu0 %v2055
      %2614 = vmatprep.subr.bf16.mxu0 0
      %2615 = vmatpush1.bf16.msra.mxu0 %v2056
      %2616 = vmatprep.subr.bf16.mxu0 0
      %2617 = vmatpush1.bf16.msra.mxu0 %v2057
      %2618 = vmatprep.subr.bf16.mxu0 0
      %2619 = vmatpush1.bf16.msra.mxu0 %v2058
      %2620 = vmatprep.subr.bf16.mxu0 0
      %2621 = vmatpush1.bf16.msra.mxu0 %v2059
      %2622 = vmatprep.subr.bf16.mxu0 0
      %2623 = vmatpush1.bf16.msra.mxu0 %v2060
      %2624 = vmatprep.subr.bf16.mxu0 0
      %2625 = vmatpush1.bf16.msra.mxu0 %v2061
      %2626 = vmatprep.mubr.bf16.mxu0 %v1151
      %2627 = vmatmul.mubr.bf16.gmra.mrb[0].mxu0 %v1150
      %v2628 = vpop.f32.mrb[0].mxu0
      %v2629 = vadd.f32 %v2556, %v2628
      %v2630 = vpop.f32.mrb[0].mxu0
      %v2631 = vpop.f32.mrb[0].mxu0
      %v2632 = vadd.f32 %v2559, %v2631
      %v2633 = vpop.f32.mrb[0].mxu0
      %2634 = vmatprep.mubr.bf16.mxu0 %v1171
      %2635 = vmatmul.mubr.bf16.gmra.mrb[0].mxu0 %v1170
      %v2636 = vpop.f32.mrb[0].mxu0
      %v2637 = vadd.f32 %v2564, %v2636
      %v2638 = vpop.f32.mrb[0].mxu0
      %v2639 = vpop.f32.mrb[0].mxu0
      %v2640 = vadd.f32 %v2567, %v2639
      %v2641 = vpop.f32.mrb[0].mxu0
      %2642 = vmatprep.mubr.bf16.mxu0 %v1191
      %2643 = vmatmul.mubr.bf16.gmra.mrb[0].mxu0 %v1190
      %v2644 = vpop.f32.mrb[0].mxu0
      %v2645 = vadd.f32 %v2572, %v2644
      %v2646 = vpop.f32.mrb[0].mxu0
      %v2647 = vpop.f32.mrb[0].mxu0
      %v2648 = vadd.f32 %v2575, %v2647
      %v2649 = vpop.f32.mrb[0].mxu0
      %2650 = vmatprep.mubr.bf16.mxu0 %v1211
      %2651 = vmatmul.mubr.bf16.gmra.mrb[0].mxu0 %v1210
      %v2652 = vpop.f32.mrb[0].mxu0
      %v2653 = vadd.f32 %v2580, %v2652
      %v2654 = vpop.f32.mrb[0].mxu0
      %v2655 = vpop.f32.mrb[0].mxu0
      %v2656 = vadd.f32 %v2583, %v2655
      %v2657 = vpop.f32.mrb[0].mxu0
      %2658 = vmatprep.mubr.bf16.mxu0 %v1231
      %2659 = vmatmul.mubr.bf16.gmra.mrb[0].mxu0 %v1230
      %v2660 = vpop.f32.mrb[0].mxu0
      %v2661 = vadd.f32 %v2588, %v2660
      %v2662 = vpop.f32.mrb[0].mxu0
      %v2663 = vpop.f32.mrb[0].mxu0
      %v2664 = vadd.f32 %v2591, %v2663
      %v2665 = vpop.f32.mrb[0].mxu0
      %2666 = vdwg.mxu0
      %2667 = vmatprep.subr.bf16.mxu0 0
      %2668 = vmatpush1.bf16.msra.mxu0 %v2062
      %2669 = vmatprep.subr.bf16.mxu0 0
      %2670 = vmatpush1.bf16.msra.mxu0 %v2063
      %2671 = vmatprep.subr.bf16.mxu0 0
      %2672 = vmatpush1.bf16.msra.mxu0 %v2064
      %2673 = vmatprep.subr.bf16.mxu0 0
      %2674 = vmatpush1.bf16.msra.mxu0 %v2065
      %2675 = vmatprep.subr.bf16.mxu0 0
      %2676 = vmatpush1.bf16.msra.mxu0 %v2066
      %2677 = vmatprep.subr.bf16.mxu0 0
      %2678 = vmatpush1.bf16.msra.mxu0 %v2067
      %2679 = vmatprep.subr.bf16.mxu0 0
      %2680 = vmatpush1.bf16.msra.mxu0 %v2068
      %2681 = vmatprep.subr.bf16.mxu0 0
      %2682 = vmatpush1.bf16.msra.mxu0 %v2069
      %2683 = vmatprep.subr.bf16.mxu0 0
      %2684 = vmatpush1.bf16.msra.mxu0 %v2070
      %2685 = vmatprep.subr.bf16.mxu0 0
      %2686 = vmatpush1.bf16.msra.mxu0 %v2071
      %2687 = vmatprep.subr.bf16.mxu0 0
      %2688 = vmatpush1.bf16.msra.mxu0 %v2072
      %2689 = vmatprep.subr.bf16.mxu0 0
      %2690 = vmatpush1.bf16.msra.mxu0 %v2073
      %2691 = vmatprep.subr.bf16.mxu0 0
      %2692 = vmatpush1.bf16.msra.mxu0 %v2074
      %2693 = vmatprep.subr.bf16.mxu0 0
      %2694 = vmatpush1.bf16.msra.mxu0 %v2075
      %2695 = vmatprep.subr.bf16.mxu0 0
      %2696 = vmatpush1.bf16.msra.mxu0 %v2076
      %2697 = vmatprep.subr.bf16.mxu0 0
      %2698 = vmatpush1.bf16.msra.mxu0 %v2077
      %2699 = vmatprep.mubr.bf16.mxu0 %v1153
      %2700 = vmatmul.mubr.bf16.gmra.mrb[0].mxu0 %v1152
      %v2701 = vpop.f32.mrb[0].mxu0
      %v2702 = vadd.f32 %v2629, %v2701
      %v2703 = vpop.f32.mrb[0].mxu0
      %v2704 = vpop.f32.mrb[0].mxu0
      %v2705 = vadd.f32 %v2632, %v2704
      %v2706 = vpop.f32.mrb[0].mxu0
      %2707 = vmatprep.mubr.bf16.mxu0 %v1173
      %2708 = vmatmul.mubr.bf16.gmra.mrb[0].mxu0 %v1172
      %v2709 = vpop.f32.mrb[0].mxu0
      %v2710 = vadd.f32 %v2637, %v2709
      %v2711 = vpop.f32.mrb[0].mxu0
      %v2712 = vpop.f32.mrb[0].mxu0
      %v2713 = vadd.f32 %v2640, %v2712
      %v2714 = vpop.f32.mrb[0].mxu0
      %2715 = vmatprep.mubr.bf16.mxu0 %v1193
      %2716 = vmatmul.mubr.bf16.gmra.mrb[0].mxu0 %v1192
      %v2717 = vpop.f32.mrb[0].mxu0
      %v2718 = vadd.f32 %v2645, %v2717
      %v2719 = vpop.f32.mrb[0].mxu0
      %v2720 = vpop.f32.mrb[0].mxu0
      %v2721 = vadd.f32 %v2648, %v2720
      %v2722 = vpop.f32.mrb[0].mxu0
      %2723 = vmatprep.mubr.bf16.mxu0 %v1213
      %2724 = vmatmul.mubr.bf16.gmra.mrb[0].mxu0 %v1212
      %v2725 = vpop.f32.mrb[0].mxu0
      %v2726 = vadd.f32 %v2653, %v2725
      %v2727 = vpop.f32.mrb[0].mxu0
      %v2728 = vpop.f32.mrb[0].mxu0
      %v2729 = vadd.f32 %v2656, %v2728
      %v2730 = vpop.f32.mrb[0].mxu0
      %2731 = vmatprep.mubr.bf16.mxu0 %v1233
      %2732 = vmatmul.mubr.bf16.gmra.mrb[0].mxu0 %v1232
      %v2733 = vpop.f32.mrb[0].mxu0
      %v2734 = vadd.f32 %v2661, %v2733
      %v2735 = vpop.f32.mrb[0].mxu0
      %v2736 = vpop.f32.mrb[0].mxu0
      %v2737 = vadd.f32 %v2664, %v2736
      %v2738 = vpop.f32.mrb[0].mxu0
      %2739 = vdwg.mxu0
      %2740 = vmatprep.subr.bf16.mxu0 0
      %2741 = vmatpush1.bf16.msra.mxu0 %v2078
      %2742 = vmatprep.subr.bf16.mxu0 0
      %2743 = vmatpush1.bf16.msra.mxu0 %v2079
      %2744 = vmatprep.subr.bf16.mxu0 0
      %2745 = vmatpush1.bf16.msra.mxu0 %v2080
      %2746 = vmatprep.subr.bf16.mxu0 0
      %2747 = vmatpush1.bf16.msra.mxu0 %v2081
      %2748 = vmatprep.subr.bf16.mxu0 0
      %2749 = vmatpush1.bf16.msra.mxu0 %v2082
      %2750 = vmatprep.subr.bf16.mxu0 0
      %2751 = vmatpush1.bf16.msra.mxu0 %v2083
      %2752 = vmatprep.subr.bf16.mxu0 0
      %2753 = vmatpush1.bf16.msra.mxu0 %v2084
      %2754 = vmatprep.subr.bf16.mxu0 0
      %2755 = vmatpush1.bf16.msra.mxu0 %v2085
      %2756 = vmatprep.subr.bf16.mxu0 0
      %2757 = vmatpush1.bf16.msra.mxu0 %v2086
      %2758 = vmatprep.subr.bf16.mxu0 0
      %2759 = vmatpush1.bf16.msra.mxu0 %v2087
      %2760 = vmatprep.subr.bf16.mxu0 0
      %2761 = vmatpush1.bf16.msra.mxu0 %v2088
      %2762 = vmatprep.subr.bf16.mxu0 0
      %2763 = vmatpush1.bf16.msra.mxu0 %v2089
      %2764 = vmatprep.subr.bf16.mxu0 0
      %2765 = vmatpush1.bf16.msra.mxu0 %v2090
      %2766 = vmatprep.subr.bf16.mxu0 0
      %2767 = vmatpush1.bf16.msra.mxu0 %v2091
      %2768 = vmatprep.subr.bf16.mxu0 0
      %2769 = vmatpush1.bf16.msra.mxu0 %v2092
      %2770 = vmatprep.subr.bf16.mxu0 0
      %2771 = vmatpush1.bf16.msra.mxu0 %v2093
      %2772 = vmatprep.mubr.bf16.mxu0 %v1155
      %2773 = vmatmul.mubr.bf16.gmra.mrb[0].mxu0 %v1154
      %v2774 = vpop.f32.mrb[0].mxu0
      %v2775 = vadd.f32 %v2702, %v2774
      %v2776 = vpop.f32.mrb[0].mxu0
      %v2777 = vpop.f32.mrb[0].mxu0
      %v2778 = vadd.f32 %v2705, %v2777
      %v2779 = vpop.f32.mrb[0].mxu0
      %2780 = vmatprep.mubr.bf16.mxu0 %v1175
      %2781 = vmatmul.mubr.bf16.gmra.mrb[0].mxu0 %v1174
      %v2782 = vpop.f32.mrb[0].mxu0
      %v2783 = vadd.f32 %v2710, %v2782
      %v2784 = vpop.f32.mrb[0].mxu0
      %v2785 = vpop.f32.mrb[0].mxu0
      %v2786 = vadd.f32 %v2713, %v2785
      %v2787 = vpop.f32.mrb[0].mxu0
      %2788 = vmatprep.mubr.bf16.mxu0 %v1195
      %2789 = vmatmul.mubr.bf16.gmra.mrb[0].mxu0 %v1194
      %v2790 = vpop.f32.mrb[0].mxu0
      %v2791 = vadd.f32 %v2718, %v2790
      %v2792 = vpop.f32.mrb[0].mxu0
      %v2793 = vpop.f32.mrb[0].mxu0
      %v2794 = vadd.f32 %v2721, %v2793
      %v2795 = vpop.f32.mrb[0].mxu0
      %2796 = vmatprep.mubr.bf16.mxu0 %v1215
      %2797 = vmatmul.mubr.bf16.gmra.mrb[0].mxu0 %v1214
      %v2798 = vpop.f32.mrb[0].mxu0
      %v2799 = vadd.f32 %v2726, %v2798
      %v2800 = vpop.f32.mrb[0].mxu0
      %v2801 = vpop.f32.mrb[0].mxu0
      %v2802 = vadd.f32 %v2729, %v2801
      %v2803 = vpop.f32.mrb[0].mxu0
      %2804 = vmatprep.mubr.bf16.mxu0 %v1235
      %2805 = vmatmul.mubr.bf16.gmra.mrb[0].mxu0 %v1234
      %v2806 = vpop.f32.mrb[0].mxu0
      %v2807 = vadd.f32 %v2734, %v2806
      %v2808 = vpop.f32.mrb[0].mxu0
      %v2809 = vpop.f32.mrb[0].mxu0
      %v2810 = vadd.f32 %v2737, %v2809
      %v2811 = vpop.f32.mrb[0].mxu0
      %2812 = vdwg.mxu0
      %2813 = vmatprep.subr.bf16.mxu0 0
      %2814 = vmatpush1.bf16.msra.mxu0 %v2094
      %2815 = vmatprep.subr.bf16.mxu0 0
      %2816 = vmatpush1.bf16.msra.mxu0 %v2095
      %2817 = vmatprep.subr.bf16.mxu0 0
      %2818 = vmatpush1.bf16.msra.mxu0 %v2096
      %2819 = vmatprep.subr.bf16.mxu0 0
      %2820 = vmatpush1.bf16.msra.mxu0 %v2097
      %2821 = vmatprep.subr.bf16.mxu0 0
      %2822 = vmatpush1.bf16.msra.mxu0 %v2098
      %2823 = vmatprep.subr.bf16.mxu0 0
      %2824 = vmatpush1.bf16.msra.mxu0 %v2099
      %2825 = vmatprep.subr.bf16.mxu0 0
      %2826 = vmatpush1.bf16.msra.mxu0 %v2100
      %2827 = vmatprep.subr.bf16.mxu0 0
      %2828 = vmatpush1.bf16.msra.mxu0 %v2101
      %2829 = vmatprep.subr.bf16.mxu0 0
      %2830 = vmatpush1.bf16.msra.mxu0 %v2102
      %2831 = vmatprep.subr.bf16.mxu0 0
      %2832 = vmatpush1.bf16.msra.mxu0 %v2103
      %2833 = vmatprep.subr.bf16.mxu0 0
      %2834 = vmatpush1.bf16.msra.mxu0 %v2104
      %2835 = vmatprep.subr.bf16.mxu0 0
      %2836 = vmatpush1.bf16.msra.mxu0 %v2105
      %2837 = vmatprep.subr.bf16.mxu0 0
      %2838 = vmatpush1.bf16.msra.mxu0 %v2106
      %2839 = vmatprep.subr.bf16.mxu0 0
      %2840 = vmatpush1.bf16.msra.mxu0 %v2107
      %2841 = vmatprep.subr.bf16.mxu0 0
      %2842 = vmatpush1.bf16.msra.mxu0 %v2108
      %2843 = vmatprep.subr.bf16.mxu0 0
      %2844 = vmatpush1.bf16.msra.mxu0 %v2109
      %2845 = vmatprep.mubr.bf16.mxu0 %v1157
      %2846 = vmatmul.mubr.bf16.gmra.mrb[0].mxu0 %v1156
      %v2847 = vpop.f32.mrb[0].mxu0
      %v2848 = vadd.f32 %v2775, %v2847
      %v2849 = vpop.f32.mrb[0].mxu0
      %v2850 = vpop.f32.mrb[0].mxu0
      %v2851 = vadd.f32 %v2778, %v2850
      %v2852 = vpop.f32.mrb[0].mxu0
      %2853 = vmatprep.mubr.bf16.mxu0 %v1177
      %2854 = vmatmul.mubr.bf16.gmra.mrb[0].mxu0 %v1176
      %v2855 = vpop.f32.mrb[0].mxu0
      %v2856 = vadd.f32 %v2783, %v2855
      %v2857 = vpop.f32.mrb[0].mxu0
      %v2858 = vpop.f32.mrb[0].mxu0
      %v2859 = vadd.f32 %v2786, %v2858
      %v2860 = vpop.f32.mrb[0].mxu0
      %2861 = vmatprep.mubr.bf16.mxu0 %v1197
      %2862 = vmatmul.mubr.bf16.gmra.mrb[0].mxu0 %v1196
      %v2863 = vpop.f32.mrb[0].mxu0
      %v2864 = vadd.f32 %v2791, %v2863
      %v2865 = vpop.f32.mrb[0].mxu0
      %v2866 = vpop.f32.mrb[0].mxu0
      %v2867 = vadd.f32 %v2794, %v2866
      %v2868 = vpop.f32.mrb[0].mxu0
      %2869 = vmatprep.mubr.bf16.mxu0 %v1217
      %2870 = vmatmul.mubr.bf16.gmra.mrb[0].mxu0 %v1216
      %v2871 = vpop.f32.mrb[0].mxu0
      %v2872 = vadd.f32 %v2799, %v2871
      %v2873 = vpop.f32.mrb[0].mxu0
      %v2874 = vpop.f32.mrb[0].mxu0
      %v2875 = vadd.f32 %v2802, %v2874
      %v2876 = vpop.f32.mrb[0].mxu0
      %2877 = vmatprep.mubr.bf16.mxu0 %v1237
      %2878 = vmatmul.mubr.bf16.gmra.mrb[0].mxu0 %v1236
      %v2879 = vpop.f32.mrb[0].mxu0
      %v2880 = vadd.f32 %v2807, %v2879
      %v2881 = vpop.f32.mrb[0].mxu0
      %v2882 = vpop.f32.mrb[0].mxu0
      %v2883 = vadd.f32 %v2810, %v2882
      %v2884 = vpop.f32.mrb[0].mxu0
      %2885 = vdwg.mxu0
      %2886 = vmatprep.subr.bf16.mxu0 0
      %2887 = vmatpush1.bf16.msra.mxu0 %v2110
      %2888 = vmatprep.subr.bf16.mxu0 0
      %2889 = vmatpush1.bf16.msra.mxu0 %v2111
      %2890 = vmatprep.subr.bf16.mxu0 0
      %2891 = vmatpush1.bf16.msra.mxu0 %v2112
      %2892 = vmatprep.subr.bf16.mxu0 0
      %2893 = vmatpush1.bf16.msra.mxu0 %v2113
      %2894 = vmatprep.subr.bf16.mxu0 0
      %2895 = vmatpush1.bf16.msra.mxu0 %v2114
      %2896 = vmatprep.subr.bf16.mxu0 0
      %2897 = vmatpush1.bf16.msra.mxu0 %v2115
      %2898 = vmatprep.subr.bf16.mxu0 0
      %2899 = vmatpush1.bf16.msra.mxu0 %v2116
      %2900 = vmatprep.subr.bf16.mxu0 0
      %2901 = vmatpush1.bf16.msra.mxu0 %v2117
      %2902 = vmatprep.subr.bf16.mxu0 0
      %2903 = vmatpush1.bf16.msra.mxu0 %v2118
      %2904 = vmatprep.subr.bf16.mxu0 0
      %2905 = vmatpush1.bf16.msra.mxu0 %v2119
      %2906 = vmatprep.subr.bf16.mxu0 0
      %2907 = vmatpush1.bf16.msra.mxu0 %v2120
      %2908 = vmatprep.subr.bf16.mxu0 0
      %2909 = vmatpush1.bf16.msra.mxu0 %v2121
      %2910 = vmatprep.subr.bf16.mxu0 0
      %2911 = vmatpush1.bf16.msra.mxu0 %v2122
      %2912 = vmatprep.subr.bf16.mxu0 0
      %2913 = vmatpush1.bf16.msra.mxu0 %v2123
      %2914 = vmatprep.subr.bf16.mxu0 0
      %2915 = vmatpush1.bf16.msra.mxu0 %v2124
      %2916 = vmatprep.subr.bf16.mxu0 0
      %2917 = vmatpush1.bf16.msra.mxu0 %v2125
      %2918 = vmatprep.mubr.bf16.mxu0 %v1159
      %2919 = vmatmul.mubr.bf16.gmra.mrb[0].mxu0 %v1158
      %v2920 = vpop.f32.mrb[0].mxu0
      %v2921 = vadd.f32 %v2848, %v2920
      %v2922 = vpop.f32.mrb[0].mxu0
      %v2923 = vpop.f32.mrb[0].mxu0
      %v2924 = vadd.f32 %v2851, %v2923
      %v2925 = vpop.f32.mrb[0].mxu0
      %2926 = vmatprep.mubr.bf16.mxu0 %v1179
      %2927 = vmatmul.mubr.bf16.gmra.mrb[0].mxu0 %v1178
      %v2928 = vpop.f32.mrb[0].mxu0
      %v2929 = vadd.f32 %v2856, %v2928
      %v2930 = vpop.f32.mrb[0].mxu0
      %v2931 = vpop.f32.mrb[0].mxu0
      %v2932 = vadd.f32 %v2859, %v2931
      %v2933 = vpop.f32.mrb[0].mxu0
      %2934 = vmatprep.mubr.bf16.mxu0 %v1199
      %2935 = vmatmul.mubr.bf16.gmra.mrb[0].mxu0 %v1198
      %v2936 = vpop.f32.mrb[0].mxu0
      %v2937 = vadd.f32 %v2864, %v2936
      %v2938 = vpop.f32.mrb[0].mxu0
      %v2939 = vpop.f32.mrb[0].mxu0
      %v2940 = vadd.f32 %v2867, %v2939
      %v2941 = vpop.f32.mrb[0].mxu0
      %2942 = vmatprep.mubr.bf16.mxu0 %v1219
      %2943 = vmatmul.mubr.bf16.gmra.mrb[0].mxu0 %v1218
      %v2944 = vpop.f32.mrb[0].mxu0
      %v2945 = vadd.f32 %v2872, %v2944
      %v2946 = vpop.f32.mrb[0].mxu0
      %v2947 = vpop.f32.mrb[0].mxu0
      %v2948 = vadd.f32 %v2875, %v2947
      %v2949 = vpop.f32.mrb[0].mxu0
      %2950 = vmatprep.mubr.bf16.mxu0 %v1239
      %2951 = vmatmul.mubr.bf16.gmra.mrb[0].mxu0 %v1238
      %v2952 = vpop.f32.mrb[0].mxu0
      %v2953 = vadd.f32 %v2880, %v2952
      %v2954 = vpop.f32.mrb[0].mxu0
      %v2955 = vpop.f32.mrb[0].mxu0
      %v2956 = vadd.f32 %v2883, %v2955
      %v2957 = vpop.f32.mrb[0].mxu0
      %2958 = vdwg.mxu0
      %2959 = vmatprep.subr.bf16.mxu0 0
      %2960 = vmatpush1.bf16.msra.mxu0 %v2126
      %2961 = vmatprep.subr.bf16.mxu0 0
      %2962 = vmatpush1.bf16.msra.mxu0 %v2127
      %2963 = vmatprep.subr.bf16.mxu0 0
      %2964 = vmatpush1.bf16.msra.mxu0 %v2128
      %2965 = vmatprep.subr.bf16.mxu0 0
      %2966 = vmatpush1.bf16.msra.mxu0 %v2129
      %2967 = vmatprep.subr.bf16.mxu0 0
      %2968 = vmatpush1.bf16.msra.mxu0 %v2130
      %2969 = vmatprep.subr.bf16.mxu0 0
      %2970 = vmatpush1.bf16.msra.mxu0 %v2131
      %2971 = vmatprep.subr.bf16.mxu0 0
      %2972 = vmatpush1.bf16.msra.mxu0 %v2132
      %2973 = vmatprep.subr.bf16.mxu0 0
      %2974 = vmatpush1.bf16.msra.mxu0 %v2133
      %2975 = vmatprep.subr.bf16.mxu0 0
      %2976 = vmatpush1.bf16.msra.mxu0 %v2134
      %2977 = vmatprep.subr.bf16.mxu0 0
      %2978 = vmatpush1.bf16.msra.mxu0 %v2135
      %2979 = vmatprep.subr.bf16.mxu0 0
      %2980 = vmatpush1.bf16.msra.mxu0 %v2136
      %2981 = vmatprep.subr.bf16.mxu0 0
      %2982 = vmatpush1.bf16.msra.mxu0 %v2137
      %2983 = vmatprep.subr.bf16.mxu0 0
      %2984 = vmatpush1.bf16.msra.mxu0 %v2138
      %2985 = vmatprep.subr.bf16.mxu0 0
      %2986 = vmatpush1.bf16.msra.mxu0 %v2139
      %2987 = vmatprep.subr.bf16.mxu0 0
      %2988 = vmatpush1.bf16.msra.mxu0 %v2140
      %2989 = vmatprep.subr.bf16.mxu0 0
      %2990 = vmatpush1.bf16.msra.mxu0 %v2141
      %2991 = vmatprep.mubr.bf16.mxu0 %v1161
      %2992 = vmatmul.mubr.bf16.gmra.mrb[0].mxu0 %v1160
      %v2993 = vpop.f32.mrb[0].mxu0
      %v2994 = vadd.f32 %v2921, %v2993
      %v2995 = vpop.f32.mrb[0].mxu0
      %v2996 = vpop.f32.mrb[0].mxu0
      %v2997 = vadd.f32 %v2924, %v2996
      %v2998 = vpop.f32.mrb[0].mxu0
      %2999 = vmatprep.mubr.bf16.mxu0 %v1181
      %3000 = vmatmul.mubr.bf16.gmra.mrb[0].mxu0 %v1180
      %v3001 = vpop.f32.mrb[0].mxu0
      %v3002 = vadd.f32 %v2929, %v3001
      %v3003 = vpop.f32.mrb[0].mxu0
      %v3004 = vpop.f32.mrb[0].mxu0
      %v3005 = vadd.f32 %v2932, %v3004
      %v3006 = vpop.f32.mrb[0].mxu0
      %3007 = vmatprep.mubr.bf16.mxu0 %v1201
      %3008 = vmatmul.mubr.bf16.gmra.mrb[0].mxu0 %v1200
      %v3009 = vpop.f32.mrb[0].mxu0
      %v3010 = vadd.f32 %v2937, %v3009
      %v3011 = vpop.f32.mrb[0].mxu0
      %v3012 = vpop.f32.mrb[0].mxu0
      %v3013 = vadd.f32 %v2940, %v3012
      %v3014 = vpop.f32.mrb[0].mxu0
      %3015 = vmatprep.mubr.bf16.mxu0 %v1221
      %3016 = vmatmul.mubr.bf16.gmra.mrb[0].mxu0 %v1220
      %v3017 = vpop.f32.mrb[0].mxu0
      %v3018 = vadd.f32 %v2945, %v3017
      %v3019 = vpop.f32.mrb[0].mxu0
      %v3020 = vpop.f32.mrb[0].mxu0
      %v3021 = vadd.f32 %v2948, %v3020
      %v3022 = vpop.f32.mrb[0].mxu0
      %3023 = vmatprep.mubr.bf16.mxu0 %v1241
      %3024 = vmatmul.mubr.bf16.gmra.mrb[0].mxu0 %v1240
      %v3025 = vpop.f32.mrb[0].mxu0
      %v3026 = vadd.f32 %v2953, %v3025
      %v3027 = vpop.f32.mrb[0].mxu0
      %v3028 = vpop.f32.mrb[0].mxu0
      %v3029 = vadd.f32 %v2956, %v3028
      %v3030 = vpop.f32.mrb[0].mxu0
      %3031 = vdwg.mxu0
      %v3032 = vmax.f32 %v2994, 0.0
      %v3033 = vmax.f32 %v2997, 0.0
      %v3034 = vmax.f32 %v3002, 0.0
      %v3035 = vmax.f32 %v3005, 0.0
      %v3036 = vmax.f32 %v3010, 0.0
      %v3037 = vmax.f32 %v3013, 0.0
      %v3038 = vmax.f32 %v3018, 0.0
      %v3039 = vmax.f32 %v3021, 0.0
      %v3040 = vmax.f32 %v3026, 0.0
      %v3041 = vmax.f32 %v3029, 0.0
      %vm3052 = vcmask 1046528
      %v3053 = vrot.slane %v3032, 1
      %v3054 = vrot.slane %v3033, 1
      %v3055 = vsel %vm3052, %v3053, %v3054
      %v3056 = vrot.slane %v3034, 1
      %v3057 = vsel %vm3052, %v3054, %v3056
      %v3058 = vrot.slane %v3035, 1
      %v3059 = vsel %vm3052, %v3056, %v3058
      %v3060 = vrot.slane %v3036, 1
      %v3061 = vsel %vm3052, %v3058, %v3060
      %v3062 = vrot.slane %v3037, 1
      %v3063 = vsel %vm3052, %v3060, %v3062
      %v3064 = vrot.slane %v3038, 1
      %v3065 = vsel %vm3052, %v3062, %v3064
      %v3066 = vrot.slane %v3039, 1
      %v3067 = vsel %vm3052, %v3064, %v3066
      %v3068 = vrot.slane %v3040, 1
      %v3069 = vsel %vm3052, %v3066, %v3068
      %v3070 = vrot.slane %v3041, 1
      %v3071 = vsel %vm3052, %v3068, %v3070
      %v3081 = vmax.f32 %v3032, %v3055
      %v3082 = vmax.f32 %v3033, %v3057
      %v3083 = vmax.f32 %v3034, %v3059
      %v3084 = vmax.f32 %v3035, %v3061
      %v3085 = vmax.f32 %v3036, %v3063
      %v3086 = vmax.f32 %v3037, %v3065
      %v3087 = vmax.f32 %v3038, %v3067
      %v3088 = vmax.f32 %v3039, %v3069
      %v3089 = vmax.f32 %v3040, %v3071
      %vm3090 = vcmask 1045504
      %v3091 = vrot.slane %v3032, 2
      %v3092 = vrot.slane %v3033, 2
      %v3093 = vsel %vm3090, %v3091, %v3092
      %v3094 = vrot.slane %v3034, 2
      %v3095 = vsel %vm3090, %v3092, %v3094
      %v3096 = vrot.slane %v3035, 2
      %v3097 = vsel %vm3090, %v3094, %v3096
      %v3098 = vrot.slane %v3036, 2
      %v3099 = vsel %vm3090, %v3096, %v3098
      %v3100 = vrot.slane %v3037, 2
      %v3101 = vsel %vm3090, %v3098, %v3100
      %v3102 = vrot.slane %v3038, 2
      %v3103 = vsel %vm3090, %v3100, %v3102
      %v3104 = vrot.slane %v3039, 2
      %v3105 = vsel %vm3090, %v3102, %v3104
      %v3106 = vrot.slane %v3040, 2
      %v3107 = vsel %vm3090, %v3104, %v3106
      %v3108 = vrot.slane %v3041, 2
      %v3109 = vsel %vm3090, %v3106, %v3108
      %v3119 = vmax.f32 %v3081, %v3093
      %v3120 = vmax.f32 %v3082, %v3095
      %v3121 = vmax.f32 %v3083, %v3097
      %v3122 = vmax.f32 %v3084, %v3099
      %v3123 = vmax.f32 %v3085, %v3101
      %v3124 = vmax.f32 %v3086, %v3103
      %v3125 = vmax.f32 %v3087, %v3105
      %v3126 = vmax.f32 %v3088, %v3107
      %v3127 = vmax.f32 %v3089, %v3109
      %vm3128 = vcmask 1044480
      %v3129 = vrot.slane %v3032, 3
      %v3130 = vrot.slane %v3033, 3
      %v3131 = vsel %vm3128, %v3129, %v3130
      %v3132 = vrot.slane %v3034, 3
      %v3133 = vsel %vm3128, %v3130, %v3132
      %v3134 = vrot.slane %v3035, 3
      %v3135 = vsel %vm3128, %v3132, %v3134
      %v3136 = vrot.slane %v3036, 3
      %v3137 = vsel %vm3128, %v3134, %v3136
      %v3138 = vrot.slane %v3037, 3
      %v3139 = vsel %vm3128, %v3136, %v3138
      %v3140 = vrot.slane %v3038, 3
      %v3141 = vsel %vm3128, %v3138, %v3140
      %v3142 = vrot.slane %v3039, 3
      %v3143 = vsel %vm3128, %v3140, %v3142
      %v3144 = vrot.slane %v3040, 3
      %v3145 = vsel %vm3128, %v3142, %v3144
      %v3146 = vrot.slane %v3041, 3
      %v3147 = vsel %vm3128, %v3144, %v3146
      %v3157 = vmax.f32 %v3119, %v3131
      %v3158 = vmax.f32 %v3120, %v3133
      %v3159 = vmax.f32 %v3121, %v3135
      %v3160 = vmax.f32 %v3122, %v3137
      %v3161 = vmax.f32 %v3123, %v3139
      %v3162 = vmax.f32 %v3124, %v3141
      %v3163 = vmax.f32 %v3125, %v3143
      %v3164 = vmax.f32 %v3126, %v3145
      %v3165 = vmax.f32 %v3127, %v3147
      %vm3166 = vcmask 1043456
      %v3167 = vrot.slane %v3032, 4
      %v3168 = vrot.slane %v3033, 4
      %v3169 = vsel %vm3166, %v3167, %v3168
      %v3170 = vrot.slane %v3034, 4
      %v3171 = vsel %vm3166, %v3168, %v3170
      %v3172 = vrot.slane %v3035, 4
      %v3173 = vsel %vm3166, %v3170, %v3172
      %v3174 = vrot.slane %v3036, 4
      %v3175 = vsel %vm3166, %v3172, %v3174
      %v3176 = vrot.slane %v3037, 4
      %v3177 = vsel %vm3166, %v3174, %v3176
      %v3178 = vrot.slane %v3038, 4
      %v3179 = vsel %vm3166, %v3176, %v3178
      %v3180 = vrot.slane %v3039, 4
      %v3181 = vsel %vm3166, %v3178, %v3180
      %v3182 = vrot.slane %v3040, 4
      %v3183 = vsel %vm3166, %v3180, %v3182
      %v3184 = vrot.slane %v3041, 4
      %v3185 = vsel %vm3166, %v3182, %v3184
      %v3195 = vmax.f32 %v3157, %v3169
      %v3196 = vmax.f32 %v3158, %v3171
      %v3197 = vmax.f32 %v3159, %v3173
      %v3198 = vmax.f32 %v3160, %v3175
      %v3199 = vmax.f32 %v3161, %v3177
      %v3200 = vmax.f32 %v3162, %v3179
      %v3201 = vmax.f32 %v3163, %v3181
      %v3202 = vmax.f32 %v3164, %v3183
      %v3203 = vmax.f32 %v3165, %v3185
      %vm3204 = vcmask 1042432
      %v3205 = vrot.slane %v3032, 5
      %v3206 = vrot.slane %v3033, 5
      %v3207 = vsel %vm3204, %v3205, %v3206
      %v3208 = vrot.slane %v3034, 5
      %v3209 = vsel %vm3204, %v3206, %v3208
      %v3210 = vrot.slane %v3035, 5
      %v3211 = vsel %vm3204, %v3208, %v3210
      %v3212 = vrot.slane %v3036, 5
      %v3213 = vsel %vm3204, %v3210, %v3212
      %v3214 = vrot.slane %v3037, 5
      %v3215 = vsel %vm3204, %v3212, %v3214
      %v3216 = vrot.slane %v3038, 5
      %v3217 = vsel %vm3204, %v3214, %v3216
      %v3218 = vrot.slane %v3039, 5
      %v3219 = vsel %vm3204, %v3216, %v3218
      %v3220 = vrot.slane %v3040, 5
      %v3221 = vsel %vm3204, %v3218, %v3220
      %v3222 = vrot.slane %v3041, 5
      %v3223 = vsel %vm3204, %v3220, %v3222
      %v3233 = vmax.f32 %v3195, %v3207
      %v3234 = vmax.f32 %v3196, %v3209
      %v3235 = vmax.f32 %v3197, %v3211
      %v3236 = vmax.f32 %v3198, %v3213
      %v3237 = vmax.f32 %v3199, %v3215
      %v3238 = vmax.f32 %v3200, %v3217
      %v3239 = vmax.f32 %v3201, %v3219
      %v3240 = vmax.f32 %v3202, %v3221
      %v3241 = vmax.f32 %v3203, %v3223
      %vm3242 = vcmask 1041408
      %v3243 = vrot.slane %v3032, 6
      %v3244 = vrot.slane %v3033, 6
      %v3245 = vsel %vm3242, %v3243, %v3244
      %v3246 = vrot.slane %v3034, 6
      %v3247 = vsel %vm3242, %v3244, %v3246
      %v3248 = vrot.slane %v3035, 6
      %v3249 = vsel %vm3242, %v3246, %v3248
      %v3250 = vrot.slane %v3036, 6
      %v3251 = vsel %vm3242, %v3248, %v3250
      %v3252 = vrot.slane %v3037, 6
      %v3253 = vsel %vm3242, %v3250, %v3252
      %v3254 = vrot.slane %v3038, 6
      %v3255 = vsel %vm3242, %v3252, %v3254
      %v3256 = vrot.slane %v3039, 6
      %v3257 = vsel %vm3242, %v3254, %v3256
      %v3258 = vrot.slane %v3040, 6
      %v3259 = vsel %vm3242, %v3256, %v3258
      %v3260 = vrot.slane %v3041, 6
      %v3261 = vsel %vm3242, %v3258, %v3260
      %v3271 = vmax.f32 %v3233, %v3245
      %v3272 = vmax.f32 %v3234, %v3247
      %v3273 = vmax.f32 %v3235, %v3249
      %v3274 = vmax.f32 %v3236, %v3251
      %v3275 = vmax.f32 %v3237, %v3253
      %v3276 = vmax.f32 %v3238, %v3255
      %v3277 = vmax.f32 %v3239, %v3257
      %v3278 = vmax.f32 %v3240, %v3259
      %v3279 = vmax.f32 %v3241, %v3261
      %v3280 = vld [vmem:[%s3] sm:$0xf]
      %v3281 = vld [vmem:[%s3 + $0x4] sm:$0x1]
      %v3282 = vpack.c.bf16 %v3272, %v3271
      %v3283 = vpack.c.bf16 %v3274, %v3273
      %v3284 = vpack.c.bf16 %v3276, %v3275
      %v3285 = vpack.c.bf16 %v3278, %v3277
      %v3286 = vpack.c.bf16 %v3279, %v3279
      %v3289 = vunpack.c.l.b16 %v3280
      %v3290 = vunpack.c.l.b16 %v3281
      %v3291 = vpack.c.b16 %v3290, %v3289
      %vm3292 = vcmask 588800
      %v3294 = vsel %vm3292, %v3291, 0
      %v3297 = vsel %vm3166, %v3286, 0
      %3299 = vmatprep.subr.bf16.mxu0 0
      %3300 = vmatpush1.bf16.msra.mxu0 %v3282
      %3301 = vmatprep.subr.bf16.mxu0 0
      %3302 = vmatpush1.bf16.msra.mxu0 %v3283
      %3303 = vmatprep.subr.bf16.mxu0 0
      %3304 = vmatpush1.bf16.msra.mxu0 %v3284
      %3305 = vmatprep.subr.bf16.mxu0 0
      %3306 = vmatpush1.bf16.msra.mxu0 %v3285
      %3307 = vmatprep.subr.bf16.mxu0 0
      %3308 = vmatpush1.bf16.msra.mxu0 %v3297
      %3309 = vmatprep.subr.bf16.mxu0 0
      %3310 = vmatpush1.bf16.msra.mxu0 0
      %3311 = vmatprep.subr.bf16.mxu0 0
      %3312 = vmatpush1.bf16.msra.mxu0 0
      %3313 = vmatprep.subr.bf16.mxu0 0
      %3314 = vmatpush1.bf16.msra.mxu0 0
      %3315 = vmatprep.subr.bf16.mxu0 0
      %3316 = vmatpush1.bf16.msra.mxu0 0
      %3317 = vmatprep.subr.bf16.mxu0 0
      %3318 = vmatpush1.bf16.msra.mxu0 0
      %3319 = vmatprep.subr.bf16.mxu0 0
      %3320 = vmatpush1.bf16.msra.mxu0 0
      %3321 = vmatprep.subr.bf16.mxu0 0
      %3322 = vmatpush1.bf16.msra.mxu0 0
      %3323 = vmatprep.subr.bf16.mxu0 0
      %3324 = vmatpush1.bf16.msra.mxu0 0
      %3325 = vmatprep.subr.bf16.mxu0 0
      %3326 = vmatpush1.bf16.msra.mxu0 0
      %3327 = vmatprep.subr.bf16.mxu0 0
      %3328 = vmatpush1.bf16.msra.mxu0 0
      %3329 = vmatprep.subr.bf16.mxu0 0
      %3330 = vmatpush1.bf16.msra.mxu0 0
      %3331 = vmatprep.mubr.bf16.mxu0 0
      %3332 = vmatmul.mubr.bf16.gmra.mrb[0].mxu0 %v3294
      %v3333 = vpop.f32.mrb[0].mxu0
      %v3334 = vadd.f32 0.0, %v3333
      %v3335 = vpop.f32.mrb[0].mxu0
      %v3336 = vpop.f32.mrb[0].mxu0
      %v3337 = vadd.f32 0.0, %v3336
      %v3338 = vpop.f32.mrb[0].mxu0
      %3339 = vdwg.mxu0
      %vm3340 = vcmask 261120
      %3341 = vst.msk [vmem:[#allocation2] sm:$0xff] %vm3340, %v3334
      %vm3342 = vcmask 254976
      %3343 = vst.msk [vmem:[#allocation2 + $0x8] sm:$0x3] %vm3342, %v3337
      %3346 = vrot.lane.b32.xlu0 %v3334, 96
      %v3347 = vpop.permute.xlu0 %3346
      %3348 = vrot.lane.b32.xlu0 %v3337, 96
      %v3349 = vpop.permute.xlu0 %3348
      %3352 = vst.msk [vmem:[#allocation2 + $0xa] sm:$0xff] %vm3340, %v3347
      %vm3353 = vcmask 253952
      %3354 = vst.msk [vmem:[#allocation2 + $0x12] sm:$0x1] %vm3353, %v3349
      %3355 = vrot.lane.b32.xlu0 %v3334, 64
      %v3356 = vpop.permute.xlu0 %3355
      %vm3358 = vcmask 259072
      %3359 = vst.msk [vmem:[#allocation2 + $0x13] sm:$0x3f] %vm3358, %v3356
      %3360 = vrot.lane.b32.xlu0 %v3334, 32
      %v3361 = vpop.permute.xlu0 %3360
      %3363 = vst.msk [vmem:[#allocation2 + $0x19] sm:$0x3] %vm3342, %v3361
      %v3364 = vld [vmem:[#allocation2] sm:$0xff]
      %v3365 = vld [vmem:[#allocation2 + $0x8] sm:$0xff]
      %v3366 = vld [vmem:[#allocation2 + $0x10] sm:$0xff]
      %v3367 = vld [vmem:[#allocation2 + $0x18] sm:$0x7]
      %v3368 = vpack.c.bf16 %v3365, %v3364
      %v3369 = vpack.c.bf16 %v3367, %v3366
      %v3370 = vld [vmem:[%s4] sm:$0xf]
      %v3371 = vld [vmem:[%s4 + $0x4] sm:$0xf]
      %v3372 = vld [vmem:[%s4 + $0x8] sm:$0xf]
      %v3373 = vld [vmem:[%s4 + $0xc] sm:$0xf]
      %v3374 = vld [vmem:[%s5] sm:$0x1]
      %v3376 = vlaneseq
      %v3377 = vshrl.u32 %v3376, 7
      %v3378 = vsub.s32 0, %v3377
      %v3379 = vrot.slane %v3374, %v3378
      %v3385 = vunpack.c.l.b16 %v3370
      %v3386 = vunpack.c.l.b16 %v3371
      %v3387 = vunpack.c.l.b16 %v3372
      %v3388 = vunpack.c.l.b16 %v3373
      %v3389 = vpack.c.b16 %v3386, %v3385
      %v3390 = vpack.c.b16 %v3388, %v3387
      %v3394 = vsel %vm3340, %v3368, 0
      %v3397 = vsel %vm3340, %v3369, 0
      %3399 = vmatprep.subr.bf16.mxu0 0
      %3400 = vmatpush1.bf16.msra.mxu0 %v3389
      %3401 = vmatprep.subr.bf16.mxu0 0
      %3402 = vmatpush1.bf16.msra.mxu0 %v3390
      %3403 = vmatprep.subr.bf16.mxu0 0
      %3404 = vmatpush1.bf16.msra.mxu0 0
      %3405 = vmatprep.subr.bf16.mxu0 0
      %3406 = vmatpush1.bf16.msra.mxu0 0
      %3407 = vmatprep.subr.bf16.mxu0 0
      %3408 = vmatpush1.bf16.msra.mxu0 0
      %3409 = vmatprep.subr.bf16.mxu0 0
      %3410 = vmatpush1.bf16.msra.mxu0 0
      %3411 = vmatprep.subr.bf16.mxu0 0
      %3412 = vmatpush1.bf16.msra.mxu0 0
      %3413 = vmatprep.subr.bf16.mxu0 0
      %3414 = vmatpush1.bf16.msra.mxu0 0
      %3415 = vmatprep.subr.bf16.mxu0 0
      %3416 = vmatpush1.bf16.msra.mxu0 0
      %3417 = vmatprep.subr.bf16.mxu0 0
      %3418 = vmatpush1.bf16.msra.mxu0 0
      %3419 = vmatprep.subr.bf16.mxu0 0
      %3420 = vmatpush1.bf16.msra.mxu0 0
      %3421 = vmatprep.subr.bf16.mxu0 0
      %3422 = vmatpush1.bf16.msra.mxu0 0
      %3423 = vmatprep.subr.bf16.mxu0 0
      %3424 = vmatpush1.bf16.msra.mxu0 0
      %3425 = vmatprep.subr.bf16.mxu0 0
      %3426 = vmatpush1.bf16.msra.mxu0 0
      %3427 = vmatprep.subr.bf16.mxu0 0
      %3428 = vmatpush1.bf16.msra.mxu0 0
      %3429 = vmatprep.subr.bf16.mxu0 0
      %3430 = vmatpush1.bf16.msra.mxu0 0
      %3431 = vmatprep.mubr.bf16.mxu0 0
      %3432 = vmatmul.mubr.bf16.gmra.mrb[0].mxu0 %v3394
      %v3433 = vpop.f32.mrb[0].mxu0
      %v3434 = vadd.f32 %v3379, %v3433
      %v3435 = vpop.f32.mrb[0].mxu0
      %v3436 = vpop.f32.mrb[0].mxu0
      %v3437 = vadd.f32 %v3379, %v3436
      %v3438 = vpop.f32.mrb[0].mxu0
      %3439 = vmatprep.mubr.bf16.mxu0 0
      %3440 = vmatmul.mubr.bf16.gmra.mrb[0].mxu0 %v3397
      %v3441 = vpop.f32.mrb[0].mxu0
      %v3442 = vadd.f32 %v3379, %v3441
      %v3443 = vpop.f32.mrb[0].mxu0
      %v3444 = vpop.f32.mrb[0].mxu0
      %v3445 = vadd.f32 %v3379, %v3444
      %v3446 = vpop.f32.mrb[0].mxu0
      %3447 = vdwg.mxu0
      %v3448 = vtanh.pop %v3434
      %v3449 = vtanh.pop %v3437
      %v3450 = vtanh.pop %v3442
      %v3451 = vtanh.pop %v3445
      %v3452 = vpack.c.bf16 %v3449, %v3448
      %v3453 = vpack.c.bf16 %v3451, %v3450
      %v3454 = vld [vmem:[%s6] sm:$0xf]
      %v3455 = vld [vmem:[%s6 + $0x4] sm:$0xf]
      %v3456 = vld [vmem:[%s6 + $0x8] sm:$0xf]
      %v3457 = vld [vmem:[%s6 + $0xc] sm:$0xf]
      %v3458 = vld [vmem:[%s6 + $0x10] sm:$0xf]
      %v3459 = vld [vmem:[%s6 + $0x14] sm:$0xf]
      %v3460 = vld [vmem:[%s6 + $0x18] sm:$0xf]
      %v3461 = vld [vmem:[%s6 + $0x1c] sm:$0xf]
      %v3462 = vld [vmem:[%s7] sm:$0x1]
      %v3464 = vlaneseq
      %v3465 = vshrl.u32 %v3464, 7
      %v3466 = vsub.s32 0, %v3465
      %v3467 = vrot.slane %v3462, %v3466
      %v3477 = vunpack.c.l.b16 %v3454
      %v3478 = vunpack.c.l.b16 %v3455
      %v3479 = vunpack.c.l.b16 %v3456
      %v3480 = vunpack.c.l.b16 %v3457
      %v3481 = vunpack.c.l.b16 %v3458
      %v3482 = vunpack.c.l.b16 %v3459
      %v3483 = vunpack.c.l.b16 %v3460
      %v3484 = vunpack.c.l.b16 %v3461
      %v3485 = vpack.c.b16 %v3478, %v3477
      %v3486 = vpack.c.b16 %v3480, %v3479
      %v3487 = vpack.c.b16 %v3482, %v3481
      %v3488 = vpack.c.b16 %v3484, %v3483
      %vm3493 = vcmask 523264
      %v3495 = vsel %vm3493, %v3452, 0
      %v3498 = vsel %vm3493, %v3453, 0
      %3500 = vmatprep.subr.bf16.mxu0 0
      %3501 = vmatpush1.bf16.msra.mxu0 %v3485
      %3502 = vmatprep.subr.bf16.mxu0 0
      %3503 = vmatpush1.bf16.msra.mxu0 %v3486
      %3504 = vmatprep.subr.bf16.mxu0 0
      %3505 = vmatpush1.bf16.msra.mxu0 %v3487
      %3506 = vmatprep.subr.bf16.mxu0 0
      %3507 = vmatpush1.bf16.msra.mxu0 %v3488
      %3508 = vmatprep.subr.bf16.mxu0 0
      %3509 = vmatpush1.bf16.msra.mxu0 0
      %3510 = vmatprep.subr.bf16.mxu0 0
      %3511 = vmatpush1.bf16.msra.mxu0 0
      %3512 = vmatprep.subr.bf16.mxu0 0
      %3513 = vmatpush1.bf16.msra.mxu0 0
      %3514 = vmatprep.subr.bf16.mxu0 0
      %3515 = vmatpush1.bf16.msra.mxu0 0
      %3516 = vmatprep.subr.bf16.mxu0 0
      %3517 = vmatpush1.bf16.msra.mxu0 0
      %3518 = vmatprep.subr.bf16.mxu0 0
      %3519 = vmatpush1.bf16.msra.mxu0 0
      %3520 = vmatprep.subr.bf16.mxu0 0
      %3521 = vmatpush1.bf16.msra.mxu0 0
      %3522 = vmatprep.subr.bf16.mxu0 0
      %3523 = vmatpush1.bf16.msra.mxu0 0
      %3524 = vmatprep.subr.bf16.mxu0 0
      %3525 = vmatpush1.bf16.msra.mxu0 0
      %3526 = vmatprep.subr.bf16.mxu0 0
      %3527 = vmatpush1.bf16.msra.mxu0 0
      %3528 = vmatprep.subr.bf16.mxu0 0
      %3529 = vmatpush1.bf16.msra.mxu0 0
      %3530 = vmatprep.subr.bf16.mxu0 0
      %3531 = vmatpush1.bf16.msra.mxu0 0
      %3532 = vmatprep.mubr.bf16.mxu0 0
      %3533 = vmatmul.mubr.bf16.gmra.mrb[0].mxu0 %v3495
      %v3534 = vpop.f32.mrb[0].mxu0
      %v3535 = vadd.f32 %v3467, %v3534
      %v3536 = vpop.f32.mrb[0].mxu0
      %v3537 = vpop.f32.mrb[0].mxu0
      %v3538 = vadd.f32 %v3467, %v3537
      %v3539 = vpop.f32.mrb[0].mxu0
      %3540 = vmatprep.mubr.bf16.mxu0 0
      %3541 = vmatmul.mubr.bf16.gmra.mrb[0].mxu0 %v3498
      %v3542 = vpop.f32.mrb[0].mxu0
      %v3543 = vadd.f32 %v3467, %v3542
      %v3544 = vpop.f32.mrb[0].mxu0
      %v3545 = vpop.f32.mrb[0].mxu0
      %v3546 = vadd.f32 %v3467, %v3545
      %v3547 = vpop.f32.mrb[0].mxu0
      %3548 = vdwg.mxu0
      %vm3549 = vcmask 64512
      %v3550 = vsel %vm3549, %v3535, -inf
      %3551 = vmax.xlane.f32.xlu0 %v3550
      %v3552 = vpop.xlane.xlu0 %3551
      %v3553 = vsel %vm3549, %v3538, -inf
      %3554 = vmax.xlane.f32.xlu0 %v3553
      %v3555 = vpop.xlane.xlu0 %3554
      %v3556 = vsel %vm3549, %v3543, -inf
      %3557 = vmax.xlane.f32.xlu0 %v3556
      %v3558 = vpop.xlane.xlu0 %3557
      %vm3559 = vcmask 59392
      %v3560 = vsel %vm3559, %v3546, -inf
      %3561 = vmax.xlane.f32.xlu0 %v3560
      %v3562 = vpop.xlane.xlu0 %3561
      %v3563 = vsub.f32 %v3535, %v3552
      %v3564 = vsub.f32 %v3538, %v3555
      %v3565 = vsub.f32 %v3543, %v3558
      %v3566 = vsub.f32 %v3546, %v3562
      %v3567 = vmul.f32 %v3563, 1.442695
      %v3568 = vpow.pop %v3567
      %v3569 = vmul.f32 %v3564, 1.442695
      %v3570 = vpow.pop %v3569
      %v3571 = vmul.f32 %v3565, 1.442695
      %v3572 = vpow.pop %v3571
      %v3573 = vmul.f32 %v3566, 1.442695
      %v3574 = vpow.pop %v3573
      %v3575 = vsel %vm3549, %v3568, 0.0
      %3576 = vadd.xlane.f32.xlu0 %v3575
      %v3577 = vpop.xlane.xlu0 %3576
      %v3578 = vsel %vm3549, %v3570, 0.0
      %3579 = vadd.xlane.f32.xlu0 %v3578
      %v3580 = vpop.xlane.xlu0 %3579
      %v3581 = vsel %vm3549, %v3572, 0.0
      %3582 = vadd.xlane.f32.xlu0 %v3581
      %v3583 = vpop.xlane.xlu0 %3582
      %v3584 = vsel %vm3559, %v3574, 0.0
      %3585 = vadd.xlane.f32.xlu0 %v3584
      %v3586 = vpop.xlane.xlu0 %3585
      %v3587 = vrcp.pop %v3577
      %v3588 = vmul.f32 %v3568, %v3587
      %v3589 = vrcp.pop %v3580
      %v3590 = vmul.f32 %v3570, %v3589
      %v3591 = vrcp.pop %v3583
      %v3592 = vmul.f32 %v3572, %v3591
      %v3593 = vrcp.pop %v3586
      %v3594 = vmul.f32 %v3574, %v3593
      %v3595 = vpack.c.bf16 %v3590, %v3588
      %v3596 = vpack.c.bf16 %v3594, %v3592
      %3597 = vxpose.xlu0.c.b16.start [1/8] %v3368, 128
      %3598 = vxpose.xlu0.c.b16.cont [2/8] %v3369, 128
      %3599 = vxpose.xlu0.c.b16.cont [3/8] 0, 128
      %3600 = vxpose.xlu0.c.b16.cont [4/8] 0, 128
      %3601 = vxpose.xlu0.c.b16.cont [5/8] 0, 128
      %3602 = vxpose.xlu0.c.b16.cont [6/8] 0, 128
      %3603 = vxpose.xlu0.c.b16.cont [7/8] 0, 128
      %3604 = vxpose.xlu0.c.b16.end [8/8] 0, 128
      %v3605 = vpop.trf.xlu0
      %v3606 = vpop.trf.xlu0
      %v3607 = vpop.trf.xlu0
      %v3608 = vpop.trf.xlu0
      %v3609 = vpop.trf.xlu0
      %v3610 = vpop.trf.xlu0
      %v3611 = vpop.trf.xlu0
      %v3612 = vpop.trf.xlu0
      %vm3613 = vcmask 220160
      %v3615 = vsel %vm3613, %v3605, 0
      %v3618 = vsel %vm3613, %v3606, 0
      %v3620 = vsel %vm3128, 4294967295, 65535
      %v3621 = vsel %vm3090, %v3620, 0
      %v3623 = vand.u32 %v3596, %v3621
      %3625 = vmatprep.subr.bf16.mxu0 0
      %3626 = vmatpush1.bf16.msra.mxu0 %v3595
      %3627 = vmatprep.subr.bf16.mxu0 0
      %3628 = vmatpush1.bf16.msra.mxu0 %v3623
      %3629 = vmatprep.subr.bf16.mxu0 0
      %3630 = vmatpush1.bf16.msra.mxu0 0
      %3631 = vmatprep.subr.bf16.mxu0 0
      %3632 = vmatpush1.bf16.msra.mxu0 0
      %3633 = vmatprep.subr.bf16.mxu0 0
      %3634 = vmatpush1.bf16.msra.mxu0 0
      %3635 = vmatprep.subr.bf16.mxu0 0
      %3636 = vmatpush1.bf16.msra.mxu0 0
      %3637 = vmatprep.subr.bf16.mxu0 0
      %3638 = vmatpush1.bf16.msra.mxu0 0
      %3639 = vmatprep.subr.bf16.mxu0 0
      %3640 = vmatpush1.bf16.msra.mxu0 0
      %3641 = vmatprep.subr.bf16.mxu0 0
      %3642 = vmatpush1.bf16.msra.mxu0 0
      %3643 = vmatprep.subr.bf16.mxu0 0
      %3644 = vmatpush1.bf16.msra.mxu0 0
      %3645 = vmatprep.subr.bf16.mxu0 0
      %3646 = vmatpush1.bf16.msra.mxu0 0
      %3647 = vmatprep.subr.bf16.mxu0 0
      %3648 = vmatpush1.bf16.msra.mxu0 0
      %3649 = vmatprep.subr.bf16.mxu0 0
      %3650 = vmatpush1.bf16.msra.mxu0 0
      %3651 = vmatprep.subr.bf16.mxu0 0
      %3652 = vmatpush1.bf16.msra.mxu0 0
      %3653 = vmatprep.subr.bf16.mxu0 0
      %3654 = vmatpush1.bf16.msra.mxu0 0
      %3655 = vmatprep.subr.bf16.mxu0 0
      %3656 = vmatpush1.bf16.msra.mxu0 0
      %3657 = vmatprep.mubr.bf16.mxu0 0
      %3658 = vmatmul.mubr.bf16.gmra.mrb[0].mxu0 %v3615
      %v3659 = vpop.f32.mrb[0].mxu0
      %v3660 = vadd.f32 0.0, %v3659
      %v3661 = vpop.f32.mrb[0].mxu0
      %v3662 = vpop.f32.mrb[0].mxu0
      %v3663 = vadd.f32 0.0, %v3662
      %v3664 = vpop.f32.mrb[0].mxu0
      %3665 = vmatprep.mubr.bf16.mxu0 0
      %3666 = vmatmul.mubr.bf16.gmra.mrb[0].mxu0 %v3618
      %v3667 = vpop.f32.mrb[0].mxu0
      %v3668 = vadd.f32 0.0, %v3667
      %v3669 = vpop.f32.mrb[0].mxu0
      %v3670 = vpop.f32.mrb[0].mxu0
      %v3671 = vadd.f32 0.0, %v3670
      %v3672 = vpop.f32.mrb[0].mxu0
      %3673 = vdwg.mxu0
      %v3674 = vpack.c.bf16 %v3663, %v3660
      %v3675 = vpack.c.bf16 %v3671, %v3668
      %v3676 = vld [vmem:[%s8] sm:$0xf]
      %v3677 = vld [vmem:[%s9] sm:$0x1]
      %v3679 = vlaneseq
      %v3680 = vshrl.u32 %v3679, 7
      %v3681 = vsub.s32 0, %v3680
      %v3682 = vrot.slane %v3677, %v3681
      %v3685 = vsel %vm3549, %v3674, 0
      %v3688 = vsel %vm3549, %v3675, 0
      %v3691 = vsel %vm3166, %v3676, 0
      %3693 = vmatprep.subr.bf16.mxu0 0
      %3694 = vmatpush1.bf16.msra.mxu0 %v3691
      %3695 = vmatprep.subr.bf16.mxu0 0
      %3696 = vmatpush1.bf16.msra.mxu0 0
      %3697 = vmatprep.subr.bf16.mxu0 0
      %3698 = vmatpush1.bf16.msra.mxu0 0
      %3699 = vmatprep.subr.bf16.mxu0 0
      %3700 = vmatpush1.bf16.msra.mxu0 0
      %3701 = vmatprep.subr.bf16.mxu0 0
      %3702 = vmatpush1.bf16.msra.mxu0 0
      %3703 = vmatprep.subr.bf16.mxu0 0
      %3704 = vmatpush1.bf16.msra.mxu0 0
      %3705 = vmatprep.subr.bf16.mxu0 0
      %3706 = vmatpush1.bf16.msra.mxu0 0
      %3707 = vmatprep.subr.bf16.mxu0 0
      %3708 = vmatpush1.bf16.msra.mxu0 0
      %3709 = vmatprep.subr.bf16.mxu0 0
      %3710 = vmatpush1.bf16.msra.mxu0 0
      %3711 = vmatprep.subr.bf16.mxu0 0
      %3712 = vmatpush1.bf16.msra.mxu0 0
      %3713 = vmatprep.subr.bf16.mxu0 0
      %3714 = vmatpush1.bf16.msra.mxu0 0
      %3715 = vmatprep.subr.bf16.mxu0 0
      %3716 = vmatpush1.bf16.msra.mxu0 0
      %3717 = vmatprep.subr.bf16.mxu0 0
      %3718 = vmatpush1.bf16.msra.mxu0 0
      %3719 = vmatprep.subr.bf16.mxu0 0
      %3720 = vmatpush1.bf16.msra.mxu0 0
      %3721 = vmatprep.subr.bf16.mxu0 0
      %3722 = vmatpush1.bf16.msra.mxu0 0
      %3723 = vmatprep.subr.bf16.mxu0 0
      %3724 = vmatpush1.bf16.msra.mxu0 0
      %3725 = vmatprep.mubr.bf16.mxu0 0
      %3726 = vmatmul.mubr.bf16.gmra.mrb[0].mxu0 %v3685
      %v3727 = vpop.f32.mrb[0].mxu0
      %v3728 = vadd.f32 %v3682, %v3727
      %v3729 = vpop.f32.mrb[0].mxu0
      %v3730 = vpop.f32.mrb[0].mxu0
      %v3731 = vadd.f32 %v3682, %v3730
      %v3732 = vpop.f32.mrb[0].mxu0
      %3733 = vmatprep.mubr.bf16.mxu0 0
      %3734 = vmatmul.mubr.bf16.gmra.mrb[0].mxu0 %v3688
      %v3735 = vpop.f32.mrb[0].mxu0
      %v3736 = vadd.f32 %v3682, %v3735
      %v3737 = vpop.f32.mrb[0].mxu0
      %v3738 = vpop.f32.mrb[0].mxu0
      %v3739 = vadd.f32 %v3682, %v3738
      %v3740 = vpop.f32.mrb[0].mxu0
      %3741 = vdwg.mxu0
      %v3742 = vpack.c.bf16 %v3731, %v3728
      %v3743 = vpack.c.bf16 %v3739, %v3736
      %v3744 = vld [vmem:[%s10] sm:$0xf]
      %v3745 = vld [vmem:[%s10 + $0x4] sm:$0xf]
      %v3746 = vld [vmem:[%s10 + $0x8] sm:$0xf]
      %v3747 = vld [vmem:[%s10 + $0xc] sm:$0xf]
      %v3748 = vld [vmem:[%s10 + $0x10] sm:$0xf]
      %v3749 = vld [vmem:[%s10 + $0x14] sm:$0xf]
      %v3750 = vld [vmem:[%s10 + $0x18] sm:$0xf]
      %v3751 = vld [vmem:[%s10 + $0x1c] sm:$0xf]
      %v3752 = vld [vmem:[%s11] sm:$0x1]
      %v3754 = vlaneseq
      %v3755 = vshrl.u32 %v3754, 7
      %v3756 = vsub.s32 0, %v3755
      %v3757 = vrot.slane %v3752, %v3756
      %v3767 = vunpack.c.l.b16 %v3744
      %v3768 = vunpack.c.l.b16 %v3745
      %v3769 = vunpack.c.l.b16 %v3746
      %v3770 = vunpack.c.l.b16 %v3747
      %v3771 = vunpack.c.l.b16 %v3748
      %v3772 = vunpack.c.l.b16 %v3749
      %v3773 = vunpack.c.l.b16 %v3750
      %v3774 = vunpack.c.l.b16 %v3751
      %v3775 = vpack.c.b16 %v3768, %v3767
      %v3776 = vpack.c.b16 %v3770, %v3769
      %v3777 = vpack.c.b16 %v3772, %v3771
      %v3778 = vpack.c.b16 %v3774, %v3773
      %v3784 = vsel %vm3493, %v3742, 0
      %v3787 = vsel %vm3493, %v3743, 0
      %3789 = vmatprep.subr.bf16.mxu0 0
      %3790 = vmatpush1.bf16.msra.mxu0 %v3775
      %3791 = vmatprep.subr.bf16.mxu0 0
      %3792 = vmatpush1.bf16.msra.mxu0 %v3776
      %3793 = vmatprep.subr.bf16.mxu0 0
      %3794 = vmatpush1.bf16.msra.mxu0 %v3777
      %3795 = vmatprep.subr.bf16.mxu0 0
      %3796 = vmatpush1.bf16.msra.mxu0 %v3778
      %3797 = vmatprep.subr.bf16.mxu0 0
      %3798 = vmatpush1.bf16.msra.mxu0 0
      %3799 = vmatprep.subr.bf16.mxu0 0
      %3800 = vmatpush1.bf16.msra.mxu0 0
      %3801 = vmatprep.subr.bf16.mxu0 0
      %3802 = vmatpush1.bf16.msra.mxu0 0
      %3803 = vmatprep.subr.bf16.mxu0 0
      %3804 = vmatpush1.bf16.msra.mxu0 0
      %3805 = vmatprep.subr.bf16.mxu0 0
      %3806 = vmatpush1.bf16.msra.mxu0 0
      %3807 = vmatprep.subr.bf16.mxu0 0
      %3808 = vmatpush1.bf16.msra.mxu0 0
      %3809 = vmatprep.subr.bf16.mxu0 0
      %3810 = vmatpush1.bf16.msra.mxu0 0
      %3811 = vmatprep.subr.bf16.mxu0 0
      %3812 = vmatpush1.bf16.msra.mxu0 0
      %3813 = vmatprep.subr.bf16.mxu0 0
      %3814 = vmatpush1.bf16.msra.mxu0 0
      %3815 = vmatprep.subr.bf16.mxu0 0
      %3816 = vmatpush1.bf16.msra.mxu0 0
      %3817 = vmatprep.subr.bf16.mxu0 0
      %3818 = vmatpush1.bf16.msra.mxu0 0
      %3819 = vmatprep.subr.bf16.mxu0 0
      %3820 = vmatpush1.bf16.msra.mxu0 0
      %3821 = vmatprep.mubr.bf16.mxu0 0
      %3822 = vmatmul.mubr.bf16.gmra.mrb[0].mxu0 %v3784
      %v3823 = vpop.f32.mrb[0].mxu0
      %v3824 = vadd.f32 %v3757, %v3823
      %v3825 = vpop.f32.mrb[0].mxu0
      %v3826 = vpop.f32.mrb[0].mxu0
      %v3827 = vadd.f32 %v3757, %v3826
      %v3828 = vpop.f32.mrb[0].mxu0
      %3829 = vmatprep.mubr.bf16.mxu0 0
      %3830 = vmatmul.mubr.bf16.gmra.mrb[0].mxu0 %v3787
      %v3831 = vpop.f32.mrb[0].mxu0
      %v3832 = vadd.f32 %v3757, %v3831
      %v3833 = vpop.f32.mrb[0].mxu0
      %v3834 = vpop.f32.mrb[0].mxu0
      %v3835 = vadd.f32 %v3757, %v3834
      %v3836 = vpop.f32.mrb[0].mxu0
      %3837 = vdwg.mxu0
      %3838 = vst [vmem:[%s413] sm:$0xff] %v3824
      %3839 = vst [vmem:[%s413 + $0x8] sm:$0xff] %v3827
      %3840 = vst [vmem:[%s413 + $0x10] sm:$0xff] %v3832
      %3841 = vst [vmem:[%s413 + $0x18] sm:$0xff] %v3835
      %p3842 = scmp.lt.s32.totalorder %s23, 1
      %s3843 = scalar_select %p3842, %s23, 1
      %s3844 = smul.addr %s3843, 4
      %s3845 = smul.addr %s3844, 8
      %s3846 = scalar_lea.vmem %s12, %s3845
      // Predicated region
      $region69: #{net_forward.1} parent=67 // pred_check
        %p3847 = pneg %p298
      $region70: #{net_forward.1} parent=67 // pred_check_branch
        %3849 = sbr.rel (%p3847) target = $region72
      $region71: #{net_forward.1} parent=67 // pred_region
        _
      $region72: #{net_forward.1} parent=67 // pred_fallthru
        _
    $region68: #{net_forward.1} parent=5 // pred_fallthru
      _
    %p3850 = scmp.le.s32.totalorder 2, %s18
    // Predicated region
    $region73: #{net_forward.1} parent=5 // pred_check
      %p3851 = pneg %p3850
    $region74: #{net_forward.1} parent=5 // pred_check_branch
      %3853 = sbr.rel (%p3851) target = $region76
    $region75: #{net_forward.1} parent=5 // pred_region
      %s3854 = ssub.s32 %s18, 2
      // Predicated region
      $region77: #{net_forward.1} parent=75 // pred_check
        %p3855 = pneg %p304
      $region78: #{net_forward.1} parent=75 // pred_check_branch
        %3857 = sbr.rel (%p3855) target = $region80
      $region79: #{net_forward.1} parent=75 // pred_region
        %p3858 = scmp.lt.s32.totalorder %s24, 1
        %s3859 = scalar_select %p3858, %s24, 1
        %s3860 = smul.addr %s3859, 4
        %s3861 = smul.addr %s3860, 8
        %s3862 = scalar_lea.vmem %s12, %s3861
      $region80: #{net_forward.1} parent=75 // pred_fallthru
        _
    $region76: #{net_forward.1} parent=5 // pred_fallthru
      _
  $region6: #{net_forward.1} parent=0 // loop_footer
    %s22 = sadd.s32 1, %s18
  $region7: #{net_forward.1} parent=0 // loop_footer_branch
    %17 = sbr.rel target = $region3
  $region8: #{net_forward.1} parent=0 // loop_exit
    _

</llo_original>
